<compile_context>
chip_gen: v6e
topology: v6e:2x2x1
jax: 0.10.0
libtpu: 0.0.40
codegen_flags: <defaults>
</compile_context>

<pallas_src>
import functools
import math

import jax
import jax.numpy as jnp
from jax.experimental import pallas as pl
from jax.experimental.pallas import tpu as pltpu

GATE_PAD = 128  # each GRU gate (r, z, n) gets its own 128-lane block


# ----------------------------------------------------------------------------
# Pallas kernel: entire forward in one invocation.
# ----------------------------------------------------------------------------
def _rnn_gauss_kernel(
    y_ref,                        # (T*B, y_dim) f32
    dec_w1_ref, dec_b1_ref,       # (rnn_dim, h_dim), (1, h_dim)
    dec_w2_ref, dec_b2_ref,       # (h_dim, h_dim),   (1, h_dim)
    ms_w_ref, ms_b_ref,           # (h_dim, 2*y_dim), (1, 2*y_dim)  [mean|std]
    *rest,                        # per layer: w_ih_pad, b_x_pad, w_hh_pad, b_hn
                                  # then: nll out (1,1); scratch: gi0, hist
    n_layers, rnn_dim, y_dim, seq_len, batch):

    gru_refs = rest[:4 * n_layers]
    nll_ref = rest[4 * n_layers]           # output: (1, 1) f32
    gi0_scr = rest[4 * n_layers + 1]       # scratch: (T*B, 3*GP) f32
    hist_scr = rest[4 * n_layers + 2]      # scratch: (T*B, R)    f32

    T, B, R, GP = seq_len, batch, rnn_dim, GATE_PAD
    TB = T * B

    # ---- hoist weight loads / bias broadcasts out of the recurrence ----
    w_ih = [gru_refs[4 * l + 0][...] for l in range(n_layers)]   # l=0: f32, l>0: bf16
    b_x = [gru_refs[4 * l + 1][...] for l in range(n_layers)]    # (1, 3*GP) f32
    w_hh = [gru_refs[4 * l + 2][...] for l in range(n_layers)]   # bf16 (R, 3*GP)
    b_hn = [jnp.broadcast_to(gru_refs[4 * l + 3][...], (B, R))
            for l in range(n_layers)]                            # (B, R) f32
    b_x_b = [jnp.broadcast_to(b_x[l], (B, 3 * GP)) for l in range(n_layers)]

    y_flat = y_ref[...]                                          # (T*B, y_dim) f32

    # ---- layer-0 input projection for all timesteps (off the critical path) ----
    gi0_scr[...] = (jnp.dot(y_flat, w_ih[0], preferred_element_type=jnp.float32)
                    + jnp.broadcast_to(b_x[0], (TB, 3 * GP)))

    # ---- recurrence: only the GRU is on the serial chain ----
    h = [jnp.zeros((B, R), jnp.float32) for _ in range(n_layers)]
    h_bf = [jnp.zeros((B, R), jnp.bfloat16) for _ in range(n_layers)]

    for t in range(T):
        # decoder at step t sees h of the last layer BEFORE this step's update
        hist_scr[pl.ds(t * B, B), :] = h[n_layers - 1]

        x_bf = None
        for l in range(n_layers):
            if l == 0:
                gi = gi0_scr[pl.ds(t * B, B), :]                  # precomputed
            else:
                gi = (jnp.dot(x_bf, w_ih[l], preferred_element_type=jnp.float32)
                      + b_x_b[l])
            gh = jnp.dot(h_bf[l], w_hh[l], preferred_element_type=jnp.float32)
            # gate slices are vreg-aligned (offsets 0, GP, 2*GP) -> no lane rotates
            r = jax.nn.sigmoid(gi[:, 0:R] + gh[:, 0:R])
            z = jax.nn.sigmoid(gi[:, GP:GP + R] + gh[:, GP:GP + R])
            n = jnp.tanh(gi[:, 2 * GP:2 * GP + R]
                         + r * (gh[:, 2 * GP:2 * GP + R] + b_hn[l]))
            h_new = (1.0 - z) * n + z * h[l]
            h[l] = h_new
            h_bf[l] = h_new.astype(jnp.bfloat16)
            x_bf = h_bf[l]

    # ---- decoder MLP + fused mean/std head + NLL, batched over T*B rows ----
    Hd = hist_scr[...]                                            # (T*B, R) f32
    dec_b1_b = jnp.broadcast_to(dec_b1_ref[...], (TB, dec_b1_ref.shape[1]))
    dec_b2_b = jnp.broadcast_to(dec_b2_ref[...], (TB, dec_b2_ref.shape[1]))
    ms_b_b = jnp.broadcast_to(ms_b_ref[...], (TB, ms_b_ref.shape[1]))

    d1 = jnp.maximum(
        jnp.dot(Hd, dec_w1_ref[...], preferred_element_type=jnp.float32) + dec_b1_b,
        0.0)
    d2 = jnp.maximum(
        jnp.dot(d1, dec_w2_ref[...], preferred_element_type=jnp.float32) + dec_b2_b,
        0.0)
    ms = jnp.dot(d2, ms_w_ref[...], preferred_element_type=jnp.float32) + ms_b_b
    mean = ms[:, :y_dim]
    std_pre = ms[:, y_dim:]
    # softplus with PyTorch-style threshold; clamp exp input to avoid inf
    std = jnp.where(std_pre > 20.0, std_pre,
                    jnp.log1p(jnp.exp(jnp.minimum(std_pre, 20.0))))

    log_2pi = jnp.float32(math.log(2.0 * math.pi))
    elem = (y_flat - mean) ** 2 / (std * std) + 2.0 * jnp.log(std) + log_2pi
    nll_ref[...] = 0.5 * jnp.sum(elem, keepdims=True)


# ----------------------------------------------------------------------------
# Weight preparation: pad each gate into its own 128-lane block, pre-sum biases,
# cast recurrent matmul weights to bf16.
# ----------------------------------------------------------------------------
def _pad_gates(w, R, GP):
    """(K, 3R) -> (K, 3*GP) f32, gate g occupying columns [g*GP, g*GP + R)."""
    K = w.shape[0]
    out = jnp.zeros((K, 3 * GP), jnp.float32)
    for g in range(3):
        out = out.at[:, g * GP:g * GP + R].set(w[:, g * R:(g + 1) * R])
    return out


def _prepare_weights(weights, *, n_layers, rnn_dim):
    R, GP = rnn_dim, GATE_PAD
    prep = {
        "dec_w1": weights["dec_w1"], "dec_b1": weights["dec_b1"],
        "dec_w2": weights["dec_w2"], "dec_b2": weights["dec_b2"],
        "ms_w": jnp.concatenate([weights["mean_w"], weights["std_w"]], axis=1),
        "ms_b": jnp.concatenate([weights["mean_b"], weights["std_b"]], axis=1),
    }
    for l in range(n_layers):
        w_ih = weights[f"gru_w_ih_l{l}"]      # (in_l, 3R)
        w_hh = weights[f"gru_w_hh_l{l}"]      # (R, 3R)
        b_ih = weights[f"gru_b_ih_l{l}"]      # (1, 3R)
        b_hh = weights[f"gru_b_hh_l{l}"]      # (1, 3R)

        w_ih_pad = _pad_gates(w_ih, R, GP)
        w_hh_pad = _pad_gates(w_hh, R, GP)
        # x-path bias: [b_ir + b_hr | b_iz + b_hz | b_in]; h-path keeps b_hn only
        b_x = jnp.concatenate([b_ih[:, :2 * R] + b_hh[:, :2 * R],
                               b_ih[:, 2 * R:]], axis=1)          # (1, 3R)
        prep[f"w_ih_l{l}"] = (w_ih_pad if l == 0
                              else w_ih_pad.astype(jnp.bfloat16))  # layer-0 precompute stays f32
        prep[f"b_x_l{l}"] = _pad_gates(b_x, R, GP)                 # (1, 3*GP) f32
        prep[f"w_hh_l{l}"] = w_hh_pad.astype(jnp.bfloat16)         # (R, 3*GP) bf16
        prep[f"b_hn_l{l}"] = b_hh[:, 2 * R:]                       # (1, R) f32
    return prep


# ----------------------------------------------------------------------------
# Wrapper: single pallas_call, no grid, everything VMEM-resident.
# ----------------------------------------------------------------------------
def rnn_gauss_forward(y, weights, *, n_layers, rnn_dim):
    """y: (T, B, y_dim) float32.  Returns scalar nll (float32)."""
    T, B, y_dim = y.shape
    assert rnn_dim <= GATE_PAD, "gate-padded layout assumes rnn_dim <= 128"
    prep = _prepare_weights(weights, n_layers=n_layers, rnn_dim=rnn_dim)

    flat_inputs = [
        y.reshape(T * B, y_dim),              # flatten outside the kernel (free)
        prep["dec_w1"], prep["dec_b1"],
        prep["dec_w2"], prep["dec_b2"],
        prep["ms_w"], prep["ms_b"],
    ]
    for l in range(n_layers):
        flat_inputs += [prep[f"w_ih_l{l}"], prep[f"b_x_l{l}"],
                        prep[f"w_hh_l{l}"], prep[f"b_hn_l{l}"]]

    kernel = functools.partial(_rnn_gauss_kernel,
                               n_layers=n_layers, rnn_dim=rnn_dim, y_dim=y_dim,
                               seq_len=T, batch=B)

    vmem = pl.BlockSpec(memory_space=pltpu.MemorySpace.VMEM)
    out = pl.pallas_call(
        kernel,
        out_shape=jax.ShapeDtypeStruct((1, 1), jnp.float32),
        in_specs=[vmem] * len(flat_inputs),
        out_specs=vmem,
        scratch_shapes=[
            pltpu.VMEM((T * B, 3 * GATE_PAD), jnp.float32),   # layer-0 input proj
            pltpu.VMEM((T * B, rnn_dim), jnp.float32),        # h_last history
        ],
    )(*flat_inputs)
    return out[0, 0]


# ----------------------------------------------------------------------------
# Pure-JAX reference (mirrors the PyTorch forward exactly, unfused weights)
# ----------------------------------------------------------------------------
def rnn_gauss_forward_ref(y, weights, *, n_layers, rnn_dim):
    T, B, _ = y.shape
    h = jnp.zeros((n_layers, B, rnn_dim), jnp.float32)
    nll = jnp.float32(0.0)
    log_2pi = jnp.float32(math.log(2.0 * math.pi))
    for t in range(T):
        y_t = y[t]
        d1 = jnp.maximum(h[-1] @ weights["dec_w1"] + weights["dec_b1"], 0.0)
        d2 = jnp.maximum(d1 @ weights["dec_w2"] + weights["dec_b2"], 0.0)
        mean = d2 @ weights["mean_w"] + weights["mean_b"]
        std = jax.nn.softplus(d2 @ weights["std_w"] + weights["std_b"])
        nll += 0.5 * jnp.sum((y_t - mean) ** 2 / std**2
                             + 2.0 * jnp.log(std) + log_2pi)
        x = y_t
        new_h = []
        for l in range(n_layers):
            gi = x @ weights[f"gru_w_ih_l{l}"] + weights[f"gru_b_ih_l{l}"]
            gh = h[l] @ weights[f"gru_w_hh_l{l}"] + weights[f"gru_b_hh_l{l}"]
            i_r, i_z, i_n = jnp.split(gi, 3, axis=-1)
            h_r, h_z, h_n = jnp.split(gh, 3, axis=-1)
            r = jax.nn.sigmoid(i_r + h_r)
            z = jax.nn.sigmoid(i_z + h_z)
            n = jnp.tanh(i_n + r * h_n)
            hn = (1.0 - z) * n + z * h[l]
            new_h.append(hn)
            x = hn
        h = jnp.stack(new_h, 0)
    return nll


# ----------------------------------------------------------------------------
# Deterministic parameter init + demo
# ----------------------------------------------------------------------------
def init_weights(key, *, y_dim, h_dim, rnn_dim, n_layers):
    ws = {}
    def nxt():
        nonlocal key
        key, sub = jax.random.split(key)
        return sub
    u = lambda shape: jax.random.uniform(nxt(), shape, jnp.float32, -0.1, 0.1)

    # decoder (weights stored as (in, out))
    ws["dec_w1"] = u((rnn_dim, h_dim)); ws["dec_b1"] = u((1, h_dim))
    ws["dec_w2"] = u((h_dim, h_dim));   ws["dec_b2"] = u((1, h_dim))
    ws["mean_w"] = u((h_dim, y_dim));   ws["mean_b"] = u((1, y_dim))
    ws["std_w"]  = u((h_dim, y_dim));   ws["std_b"]  = u((1, y_dim))
    # GRU layers (PyTorch gate order r,z,n along the output axis)
    for l in range(n_layers):
        in_l = y_dim if l == 0 else rnn_dim
        ws[f"gru_w_ih_l{l}"] = u((in_l, 3 * rnn_dim))
        ws[f"gru_w_hh_l{l}"] = u((rnn_dim, 3 * rnn_dim))
        ws[f"gru_b_ih_l{l}"] = u((1, 3 * rnn_dim))
        ws[f"gru_b_hh_l{l}"] = u((1, 3 * rnn_dim))
    return ws


if __name__ == "__main__":
    # params analogous to the PyTorch module's `params` dict
    params = dict(x_dim=4, y_dim=4, h_dim=32, rnn_dim=32, n_layers=2, cuda=False)
    T, B = 8, 8

    key = jax.random.PRNGKey(0)
    key, yk = jax.random.split(key)
    y = jax.random.normal(yk, (T, B, params["y_dim"]), jnp.float32)

    weights = init_weights(key, y_dim=params["y_dim"], h_dim=params["h_dim"],
                           rnn_dim=params["rnn_dim"], n_layers=params["n_layers"])

    nll = rnn_gauss_forward(y, weights,
                            n_layers=params["n_layers"],
                            rnn_dim=params["rnn_dim"])
    nll = jax.block_until_ready(nll)

    nll_ref = rnn_gauss_forward_ref(y, weights,
                                    n_layers=params["n_layers"],
                                    rnn_dim=params["rnn_dim"])
    nll_ref = jax.block_until_ready(nll_ref)

    assert jnp.allclose(nll, nll_ref, rtol=2e-2, atol=2e-2), (nll, nll_ref)
    print("KERNEL_OK")
</pallas_src>

<mosaic_0001>
module attributes {stable_mosaic.version = 11 : i64} {
  func.func @_rnn_gauss_kernel(%arg0: memref<64x4xf32, #tpu.memory_space<vmem>>, %arg1: memref<32x32xf32, #tpu.memory_space<vmem>>, %arg2: memref<1x32xf32, #tpu.memory_space<vmem>>, %arg3: memref<32x32xf32, #tpu.memory_space<vmem>>, %arg4: memref<1x32xf32, #tpu.memory_space<vmem>>, %arg5: memref<32x8xf32, #tpu.memory_space<vmem>>, %arg6: memref<1x8xf32, #tpu.memory_space<vmem>>, %arg7: memref<4x384xf32, #tpu.memory_space<vmem>>, %arg8: memref<1x384xf32, #tpu.memory_space<vmem>>, %arg9: memref<32x384xbf16, #tpu.memory_space<vmem>>, %arg10: memref<1x32xf32, #tpu.memory_space<vmem>>, %arg11: memref<32x384xbf16, #tpu.memory_space<vmem>>, %arg12: memref<1x384xf32, #tpu.memory_space<vmem>>, %arg13: memref<32x384xbf16, #tpu.memory_space<vmem>>, %arg14: memref<1x32xf32, #tpu.memory_space<vmem>>, %arg15: memref<1x1xf32, #tpu.memory_space<vmem>>, %arg16: memref<64x384xf32, #tpu.memory_space<vmem>>, %arg17: memref<64x32xf32, #tpu.memory_space<vmem>>) attributes {dimension_semantics = [], scalar_prefetch = 0 : i64, scratch_operands = 2 : i64, tpu.core_type = #tpu.core_type<tc>} {
    %c0 = arith.constant 0 : index
    %c0_0 = arith.constant 0 : index
    %0 = vector.load %arg7[%c0, %c0_0] : memref<4x384xf32, #tpu.memory_space<vmem>>, vector<4x384xf32>
    %c0_1 = arith.constant 0 : index
    %c0_2 = arith.constant 0 : index
    %1 = vector.load %arg11[%c0_1, %c0_2] : memref<32x384xbf16, #tpu.memory_space<vmem>>, vector<32x384xbf16>
    %c0_3 = arith.constant 0 : index
    %c0_4 = arith.constant 0 : index
    %2 = vector.load %arg8[%c0_3, %c0_4] : memref<1x384xf32, #tpu.memory_space<vmem>>, vector<1x384xf32>
    %c0_5 = arith.constant 0 : index
    %c0_6 = arith.constant 0 : index
    %3 = vector.load %arg12[%c0_5, %c0_6] : memref<1x384xf32, #tpu.memory_space<vmem>>, vector<1x384xf32>
    %c0_7 = arith.constant 0 : index
    %c0_8 = arith.constant 0 : index
    %4 = vector.load %arg9[%c0_7, %c0_8] : memref<32x384xbf16, #tpu.memory_space<vmem>>, vector<32x384xbf16>
    %c0_9 = arith.constant 0 : index
    %c0_10 = arith.constant 0 : index
    %5 = vector.load %arg13[%c0_9, %c0_10] : memref<32x384xbf16, #tpu.memory_space<vmem>>, vector<32x384xbf16>
    %c0_11 = arith.constant 0 : index
    %c0_12 = arith.constant 0 : index
    %6 = vector.load %arg10[%c0_11, %c0_12] : memref<1x32xf32, #tpu.memory_space<vmem>>, vector<1x32xf32>
    %7 = vector.shape_cast %6 : vector<1x32xf32> to vector<1x32xf32>
    %8 = vector.broadcast %7 : vector<1x32xf32> to vector<8x32xf32>
    %c0_13 = arith.constant 0 : index
    %c0_14 = arith.constant 0 : index
    %9 = vector.load %arg14[%c0_13, %c0_14] : memref<1x32xf32, #tpu.memory_space<vmem>>, vector<1x32xf32>
    %10 = vector.shape_cast %9 : vector<1x32xf32> to vector<1x32xf32>
    %11 = vector.broadcast %10 : vector<1x32xf32> to vector<8x32xf32>
    %12 = vector.shape_cast %3 : vector<1x384xf32> to vector<1x384xf32>
    %13 = vector.broadcast %12 : vector<1x384xf32> to vector<8x384xf32>
    %c0_15 = arith.constant 0 : index
    %c0_16 = arith.constant 0 : index
    %14 = vector.load %arg0[%c0_15, %c0_16] : memref<64x4xf32, #tpu.memory_space<vmem>>, vector<64x4xf32>
    %cst = arith.constant dense<0.000000e+00> : vector<64x384xf32>
    %15 = tpu.matmul %14, %0, %cst {dimension_numbers = #tpu.dot_dimension_numbers<[1], [0], [0], [1], [0, 0, 1, 1], [], []>} : vector<64x4xf32>, vector<4x384xf32>, vector<64x384xf32> -> vector<64x384xf32>
    %16 = vector.shape_cast %2 : vector<1x384xf32> to vector<1x384xf32>
    %17 = vector.broadcast %16 : vector<1x384xf32> to vector<64x384xf32>
    %18 = arith.addf %15, %17 : vector<64x384xf32>
    %c0_17 = arith.constant 0 : index
    %c0_18 = arith.constant 0 : index
    %19 = vector.load %arg16[%c0_17, %c0_18] : memref<64x384xf32, #tpu.memory_space<vmem>>, vector<64x384xf32>
    tpu.vector_store %arg16[%c0_17, %c0_18], %18 {strides = array<i32>} : memref<64x384xf32, #tpu.memory_space<vmem>>, vector<64x384xf32>,
    %cst_19 = arith.constant 0.000000e+00 : f32
    %20 = vector.broadcast %cst_19 : f32 to vector<8x32xf32>
    %cst_20 = arith.constant 0.000000e+00 : f32
    %21 = vector.broadcast %cst_20 : f32 to vector<8x32xf32>
    %cst_21 = arith.constant 0.000000e+00 : bf16
    %22 = vector.broadcast %cst_21 : bf16 to vector<8x32xbf16>
    %cst_22 = arith.constant 0.000000e+00 : bf16
    %23 = vector.broadcast %cst_22 : bf16 to vector<8x32xbf16>
    %c0_23 = arith.constant 0 : index
    %c0_24 = arith.constant 0 : index
    %24 = vector.load %arg17[%c0_23, %c0_24] : memref<64x32xf32, #tpu.memory_space<vmem>>, vector<8x32xf32>
    tpu.vector_store %arg17[%c0_23, %c0_24], %21 {strides = array<i32>} : memref<64x32xf32, #tpu.memory_space<vmem>>, vector<8x32xf32>,
    %c0_25 = arith.constant 0 : index
    %c0_26 = arith.constant 0 : index
    %25 = vector.load %arg16[%c0_25, %c0_26] : memref<64x384xf32, #tpu.memory_space<vmem>>, vector<8x384xf32>
    %cst_27 = arith.constant dense<0.000000e+00> : vector<8x384xf32>
    %26 = tpu.matmul %22, %4, %cst_27 {dimension_numbers = #tpu.dot_dimension_numbers<[1], [0], [0], [1], [0, 0, 1, 1], [], []>} : vector<8x32xbf16>, vector<32x384xbf16>, vector<8x384xf32> -> vector<8x384xf32>
    %27 = vector.extract_strided_slice %25 {offsets = [0, 0], sizes = [8, 32], strides = [1, 1]} : vector<8x384xf32> to vector<8x32xf32>
    %28 = vector.extract_strided_slice %26 {offsets = [0, 0], sizes = [8, 32], strides = [1, 1]} : vector<8x384xf32> to vector<8x32xf32>
    %29 = arith.addf %27, %28 : vector<8x32xf32>
    %30 = arith.negf %29 : vector<8x32xf32>
    %31 = math.exp %30 : vector<8x32xf32>
    %cst_28 = arith.constant 1.000000e+00 : f32
    %32 = vector.broadcast %cst_28 : f32 to vector<8x32xf32>
    %33 = arith.addf %32, %31 : vector<8x32xf32>
    %34 = arith.divf %32, %33 : vector<8x32xf32>
    %35 = vector.extract_strided_slice %25 {offsets = [0, 128], sizes = [8, 32], strides = [1, 1]} : vector<8x384xf32> to vector<8x32xf32>
    %36 = vector.extract_strided_slice %26 {offsets = [0, 128], sizes = [8, 32], strides = [1, 1]} : vector<8x384xf32> to vector<8x32xf32>
    %37 = arith.addf %35, %36 : vector<8x32xf32>
    %38 = arith.negf %37 : vector<8x32xf32>
    %39 = math.exp %38 : vector<8x32xf32>
    %cst_29 = arith.constant 1.000000e+00 : f32
    %40 = vector.broadcast %cst_29 : f32 to vector<8x32xf32>
    %41 = arith.addf %40, %39 : vector<8x32xf32>
    %42 = arith.divf %40, %41 : vector<8x32xf32>
    %43 = vector.extract_strided_slice %25 {offsets = [0, 256], sizes = [8, 32], strides = [1, 1]} : vector<8x384xf32> to vector<8x32xf32>
    %44 = vector.extract_strided_slice %26 {offsets = [0, 256], sizes = [8, 32], strides = [1, 1]} : vector<8x384xf32> to vector<8x32xf32>
    %45 = arith.addf %44, %8 : vector<8x32xf32>
    %46 = arith.mulf %34, %45 : vector<8x32xf32>
    %47 = arith.addf %43, %46 : vector<8x32xf32>
    %48 = math.tanh %47 : vector<8x32xf32>
    %cst_30 = arith.constant 1.000000e+00 : f32
    %49 = vector.broadcast %cst_30 : f32 to vector<8x32xf32>
    %50 = arith.subf %49, %42 : vector<8x32xf32>
    %51 = arith.mulf %50, %48 : vector<8x32xf32>
    %52 = arith.mulf %42, %20 : vector<8x32xf32>
    %53 = arith.addf %51, %52 : vector<8x32xf32>
    %54 = arith.truncf %53 : vector<8x32xf32> to vector<8x32xbf16>
    %cst_31 = arith.constant dense<0.000000e+00> : vector<8x384xf32>
    %55 = tpu.matmul %54, %1, %cst_31 {dimension_numbers = #tpu.dot_dimension_numbers<[1], [0], [0], [1], [0, 0, 1, 1], [], []>} : vector<8x32xbf16>, vector<32x384xbf16>, vector<8x384xf32> -> vector<8x384xf32>
    %56 = arith.addf %55, %13 : vector<8x384xf32>
    %cst_32 = arith.constant dense<0.000000e+00> : vector<8x384xf32>
    %57 = tpu.matmul %23, %5, %cst_32 {dimension_numbers = #tpu.dot_dimension_numbers<[1], [0], [0], [1], [0, 0, 1, 1], [], []>} : vector<8x32xbf16>, vector<32x384xbf16>, vector<8x384xf32> -> vector<8x384xf32>
    %58 = vector.extract_strided_slice %56 {offsets = [0, 0], sizes = [8, 32], strides = [1, 1]} : vector<8x384xf32> to vector<8x32xf32>
    %59 = vector.extract_strided_slice %57 {offsets = [0, 0], sizes = [8, 32], strides = [1, 1]} : vector<8x384xf32> to vector<8x32xf32>
    %60 = arith.addf %58, %59 : vector<8x32xf32>
    %61 = arith.negf %60 : vector<8x32xf32>
    %62 = math.exp %61 : vector<8x32xf32>
    %cst_33 = arith.constant 1.000000e+00 : f32
    %63 = vector.broadcast %cst_33 : f32 to vector<8x32xf32>
    %64 = arith.addf %63, %62 : vector<8x32xf32>
    %65 = arith.divf %63, %64 : vector<8x32xf32>
    %66 = vector.extract_strided_slice %56 {offsets = [0, 128], sizes = [8, 32], strides = [1, 1]} : vector<8x384xf32> to vector<8x32xf32>
    %67 = vector.extract_strided_slice %57 {offsets = [0, 128], sizes = [8, 32], strides = [1, 1]} : vector<8x384xf32> to vector<8x32xf32>
    %68 = arith.addf %66, %67 : vector<8x32xf32>
    %69 = arith.negf %68 : vector<8x32xf32>
    %70 = math.exp %69 : vector<8x32xf32>
    %cst_34 = arith.constant 1.000000e+00 : f32
    %71 = vector.broadcast %cst_34 : f32 to vector<8x32xf32>
    %72 = arith.addf %71, %70 : vector<8x32xf32>
    %73 = arith.divf %71, %72 : vector<8x32xf32>
    %74 = vector.extract_strided_slice %56 {offsets = [0, 256], sizes = [8, 32], strides = [1, 1]} : vector<8x384xf32> to vector<8x32xf32>
    %75 = vector.extract_strided_slice %57 {offsets = [0, 256], sizes = [8, 32], strides = [1, 1]} : vector<8x384xf32> to vector<8x32xf32>
    %76 = arith.addf %75, %11 : vector<8x32xf32>
    %77 = arith.mulf %65, %76 : vector<8x32xf32>
    %78 = arith.addf %74, %77 : vector<8x32xf32>
    %79 = math.tanh %78 : vector<8x32xf32>
    %cst_35 = arith.constant 1.000000e+00 : f32
    %80 = vector.broadcast %cst_35 : f32 to vector<8x32xf32>
    %81 = arith.subf %80, %73 : vector<8x32xf32>
    %82 = arith.mulf %81, %79 : vector<8x32xf32>
    %83 = arith.mulf %73, %21 : vector<8x32xf32>
    %84 = arith.addf %82, %83 : vector<8x32xf32>
    %85 = arith.truncf %84 : vector<8x32xf32> to vector<8x32xbf16>
    %c8 = arith.constant 8 : index
    %c0_36 = arith.constant 0 : index
    %86 = vector.load %arg17[%c8, %c0_36] : memref<64x32xf32, #tpu.memory_space<vmem>>, vector<8x32xf32>
    tpu.vector_store %arg17[%c8, %c0_36], %84 {strides = array<i32>} : memref<64x32xf32, #tpu.memory_space<vmem>>, vector<8x32xf32>,
    %c8_37 = arith.constant 8 : index
    %c0_38 = arith.constant 0 : index
    %87 = vector.load %arg16[%c8_37, %c0_38] : memref<64x384xf32, #tpu.memory_space<vmem>>, vector<8x384xf32>
    %cst_39 = arith.constant dense<0.000000e+00> : vector<8x384xf32>
    %88 = tpu.matmul %54, %4, %cst_39 {dimension_numbers = #tpu.dot_dimension_numbers<[1], [0], [0], [1], [0, 0, 1, 1], [], []>} : vector<8x32xbf16>, vector<32x384xbf16>, vector<8x384xf32> -> vector<8x384xf32>
    %89 = vector.extract_strided_slice %87 {offsets = [0, 0], sizes = [8, 32], strides = [1, 1]} : vector<8x384xf32> to vector<8x32xf32>
    %90 = vector.extract_strided_slice %88 {offsets = [0, 0], sizes = [8, 32], strides = [1, 1]} : vector<8x384xf32> to vector<8x32xf32>
    %91 = arith.addf %89, %90 : vector<8x32xf32>
    %92 = arith.negf %91 : vector<8x32xf32>
    %93 = math.exp %92 : vector<8x32xf32>
    %cst_40 = arith.constant 1.000000e+00 : f32
    %94 = vector.broadcast %cst_40 : f32 to vector<8x32xf32>
    %95 = arith.addf %94, %93 : vector<8x32xf32>
    %96 = arith.divf %94, %95 : vector<8x32xf32>
    %97 = vector.extract_strided_slice %87 {offsets = [0, 128], sizes = [8, 32], strides = [1, 1]} : vector<8x384xf32> to vector<8x32xf32>
    %98 = vector.extract_strided_slice %88 {offsets = [0, 128], sizes = [8, 32], strides = [1, 1]} : vector<8x384xf32> to vector<8x32xf32>
    %99 = arith.addf %97, %98 : vector<8x32xf32>
    %100 = arith.negf %99 : vector<8x32xf32>
    %101 = math.exp %100 : vector<8x32xf32>
    %cst_41 = arith.constant 1.000000e+00 : f32
    %102 = vector.broadcast %cst_41 : f32 to vector<8x32xf32>
    %103 = arith.addf %102, %101 : vector<8x32xf32>
    %104 = arith.divf %102, %103 : vector<8x32xf32>
    %105 = vector.extract_strided_slice %87 {offsets = [0, 256], sizes = [8, 32], strides = [1, 1]} : vector<8x384xf32> to vector<8x32xf32>
    %106 = vector.extract_strided_slice %88 {offsets = [0, 256], sizes = [8, 32], strides = [1, 1]} : vector<8x384xf32> to vector<8x32xf32>
    %107 = arith.addf %106, %8 : vector<8x32xf32>
    %108 = arith.mulf %96, %107 : vector<8x32xf32>
    %109 = arith.addf %105, %108 : vector<8x32xf32>
    %110 = math.tanh %109 : vector<8x32xf32>
    %cst_42 = arith.constant 1.000000e+00 : f32
    %111 = vector.broadcast %cst_42 : f32 to vector<8x32xf32>
    %112 = arith.subf %111, %104 : vector<8x32xf32>
    %113 = arith.mulf %112, %110 : vector<8x32xf32>
    %114 = arith.mulf %104, %53 : vector<8x32xf32>
    %115 = arith.addf %113, %114 : vector<8x32xf32>
    %116 = arith.truncf %115 : vector<8x32xf32> to vector<8x32xbf16>
    %cst_43 = arith.constant dense<0.000000e+00> : vector<8x384xf32>
    %117 = tpu.matmul %116, %1, %cst_43 {dimension_numbers = #tpu.dot_dimension_numbers<[1], [0], [0], [1], [0, 0, 1, 1], [], []>} : vector<8x32xbf16>, vector<32x384xbf16>, vector<8x384xf32> -> vector<8x384xf32>
    %118 = arith.addf %117, %13 : vector<8x384xf32>
    %cst_44 = arith.constant dense<0.000000e+00> : vector<8x384xf32>
    %119 = tpu.matmul %85, %5, %cst_44 {dimension_numbers = #tpu.dot_dimension_numbers<[1], [0], [0], [1], [0, 0, 1, 1], [], []>} : vector<8x32xbf16>, vector<32x384xbf16>, vector<8x384xf32> -> vector<8x384xf32>
    %120 = vector.extract_strided_slice %118 {offsets = [0, 0], sizes = [8, 32], strides = [1, 1]} : vector<8x384xf32> to vector<8x32xf32>
    %121 = vector.extract_strided_slice %119 {offsets = [0, 0], sizes = [8, 32], strides = [1, 1]} : vector<8x384xf32> to vector<8x32xf32>
    %122 = arith.addf %120, %121 : vector<8x32xf32>
    %123 = arith.negf %122 : vector<8x32xf32>
    %124 = math.exp %123 : vector<8x32xf32>
    %cst_45 = arith.constant 1.000000e+00 : f32
    %125 = vector.broadcast %cst_45 : f32 to vector<8x32xf32>
    %126 = arith.addf %125, %124 : vector<8x32xf32>
    %127 = arith.divf %125, %126 : vector<8x32xf32>
    %128 = vector.extract_strided_slice %118 {offsets = [0, 128], sizes = [8, 32], strides = [1, 1]} : vector<8x384xf32> to vector<8x32xf32>
    %129 = vector.extract_strided_slice %119 {offsets = [0, 128], sizes = [8, 32], strides = [1, 1]} : vector<8x384xf32> to vector<8x32xf32>
    %130 = arith.addf %128, %129 : vector<8x32xf32>
    %131 = arith.negf %130 : vector<8x32xf32>
    %132 = math.exp %131 : vector<8x32xf32>
    %cst_46 = arith.constant 1.000000e+00 : f32
    %133 = vector.broadcast %cst_46 : f32 to vector<8x32xf32>
    %134 = arith.addf %133, %132 : vector<8x32xf32>
    %135 = arith.divf %133, %134 : vector<8x32xf32>
    %136 = vector.extract_strided_slice %118 {offsets = [0, 256], sizes = [8, 32], strides = [1, 1]} : vector<8x384xf32> to vector<8x32xf32>
    %137 = vector.extract_strided_slice %119 {offsets = [0, 256], sizes = [8, 32], strides = [1, 1]} : vector<8x384xf32> to vector<8x32xf32>
    %138 = arith.addf %137, %11 : vector<8x32xf32>
    %139 = arith.mulf %127, %138 : vector<8x32xf32>
    %140 = arith.addf %136, %139 : vector<8x32xf32>
    %141 = math.tanh %140 : vector<8x32xf32>
    %cst_47 = arith.constant 1.000000e+00 : f32
    %142 = vector.broadcast %cst_47 : f32 to vector<8x32xf32>
    %143 = arith.subf %142, %135 : vector<8x32xf32>
    %144 = arith.mulf %143, %141 : vector<8x32xf32>
    %145 = arith.mulf %135, %84 : vector<8x32xf32>
    %146 = arith.addf %144, %145 : vector<8x32xf32>
    %147 = arith.truncf %146 : vector<8x32xf32> to vector<8x32xbf16>
    %c16 = arith.constant 16 : index
    %c0_48 = arith.constant 0 : index
    %148 = vector.load %arg17[%c16, %c0_48] : memref<64x32xf32, #tpu.memory_space<vmem>>, vector<8x32xf32>
    tpu.vector_store %arg17[%c16, %c0_48], %146 {strides = array<i32>} : memref<64x32xf32, #tpu.memory_space<vmem>>, vector<8x32xf32>,
    %c16_49 = arith.constant 16 : index
    %c0_50 = arith.constant 0 : index
    %149 = vector.load %arg16[%c16_49, %c0_50] : memref<64x384xf32, #tpu.memory_space<vmem>>, vector<8x384xf32>
    %cst_51 = arith.constant dense<0.000000e+00> : vector<8x384xf32>
    %150 = tpu.matmul %116, %4, %cst_51 {dimension_numbers = #tpu.dot_dimension_numbers<[1], [0], [0], [1], [0, 0, 1, 1], [], []>} : vector<8x32xbf16>, vector<32x384xbf16>, vector<8x384xf32> -> vector<8x384xf32>
    %151 = vector.extract_strided_slice %149 {offsets = [0, 0], sizes = [8, 32], strides = [1, 1]} : vector<8x384xf32> to vector<8x32xf32>
    %152 = vector.extract_strided_slice %150 {offsets = [0, 0], sizes = [8, 32], strides = [1, 1]} : vector<8x384xf32> to vector<8x32xf32>
    %153 = arith.addf %151, %152 : vector<8x32xf32>
    %154 = arith.negf %153 : vector<8x32xf32>
    %155 = math.exp %154 : vector<8x32xf32>
    %cst_52 = arith.constant 1.000000e+00 : f32
    %156 = vector.broadcast %cst_52 : f32 to vector<8x32xf32>
    %157 = arith.addf %156, %155 : vector<8x32xf32>
    %158 = arith.divf %156, %157 : vector<8x32xf32>
    %159 = vector.extract_strided_slice %149 {offsets = [0, 128], sizes = [8, 32], strides = [1, 1]} : vector<8x384xf32> to vector<8x32xf32>
    %160 = vector.extract_strided_slice %150 {offsets = [0, 128], sizes = [8, 32], strides = [1, 1]} : vector<8x384xf32> to vector<8x32xf32>
    %161 = arith.addf %159, %160 : vector<8x32xf32>
    %162 = arith.negf %161 : vector<8x32xf32>
    %163 = math.exp %162 : vector<8x32xf32>
    %cst_53 = arith.constant 1.000000e+00 : f32
    %164 = vector.broadcast %cst_53 : f32 to vector<8x32xf32>
    %165 = arith.addf %164, %163 : vector<8x32xf32>
    %166 = arith.divf %164, %165 : vector<8x32xf32>
    %167 = vector.extract_strided_slice %149 {offsets = [0, 256], sizes = [8, 32], strides = [1, 1]} : vector<8x384xf32> to vector<8x32xf32>
    %168 = vector.extract_strided_slice %150 {offsets = [0, 256], sizes = [8, 32], strides = [1, 1]} : vector<8x384xf32> to vector<8x32xf32>
    %169 = arith.addf %168, %8 : vector<8x32xf32>
    %170 = arith.mulf %158, %169 : vector<8x32xf32>
    %171 = arith.addf %167, %170 : vector<8x32xf32>
    %172 = math.tanh %171 : vector<8x32xf32>
    %cst_54 = arith.constant 1.000000e+00 : f32
    %173 = vector.broadcast %cst_54 : f32 to vector<8x32xf32>
    %174 = arith.subf %173, %166 : vector<8x32xf32>
    %175 = arith.mulf %174, %172 : vector<8x32xf32>
    %176 = arith.mulf %166, %115 : vector<8x32xf32>
    %177 = arith.addf %175, %176 : vector<8x32xf32>
    %178 = arith.truncf %177 : vector<8x32xf32> to vector<8x32xbf16>
    %cst_55 = arith.constant dense<0.000000e+00> : vector<8x384xf32>
    %179 = tpu.matmul %178, %1, %cst_55 {dimension_numbers = #tpu.dot_dimension_numbers<[1], [0], [0], [1], [0, 0, 1, 1], [], []>} : vector<8x32xbf16>, vector<32x384xbf16>, vector<8x384xf32> -> vector<8x384xf32>
    %180 = arith.addf %179, %13 : vector<8x384xf32>
    %cst_56 = arith.constant dense<0.000000e+00> : vector<8x384xf32>
    %181 = tpu.matmul %147, %5, %cst_56 {dimension_numbers = #tpu.dot_dimension_numbers<[1], [0], [0], [1], [0, 0, 1, 1], [], []>} : vector<8x32xbf16>, vector<32x384xbf16>, vector<8x384xf32> -> vector<8x384xf32>
    %182 = vector.extract_strided_slice %180 {offsets = [0, 0], sizes = [8, 32], strides = [1, 1]} : vector<8x384xf32> to vector<8x32xf32>
    %183 = vector.extract_strided_slice %181 {offsets = [0, 0], sizes = [8, 32], strides = [1, 1]} : vector<8x384xf32> to vector<8x32xf32>
    %184 = arith.addf %182, %183 : vector<8x32xf32>
    %185 = arith.negf %184 : vector<8x32xf32>
    %186 = math.exp %185 : vector<8x32xf32>
    %cst_57 = arith.constant 1.000000e+00 : f32
    %187 = vector.broadcast %cst_57 : f32 to vector<8x32xf32>
    %188 = arith.addf %187, %186 : vector<8x32xf32>
    %189 = arith.divf %187, %188 : vector<8x32xf32>
    %190 = vector.extract_strided_slice %180 {offsets = [0, 128], sizes = [8, 32], strides = [1, 1]} : vector<8x384xf32> to vector<8x32xf32>
    %191 = vector.extract_strided_slice %181 {offsets = [0, 128], sizes = [8, 32], strides = [1, 1]} : vector<8x384xf32> to vector<8x32xf32>
    %192 = arith.addf %190, %191 : vector<8x32xf32>
    %193 = arith.negf %192 : vector<8x32xf32>
    %194 = math.exp %193 : vector<8x32xf32>
    %cst_58 = arith.constant 1.000000e+00 : f32
    %195 = vector.broadcast %cst_58 : f32 to vector<8x32xf32>
    %196 = arith.addf %195, %194 : vector<8x32xf32>
    %197 = arith.divf %195, %196 : vector<8x32xf32>
    %198 = vector.extract_strided_slice %180 {offsets = [0, 256], sizes = [8, 32], strides = [1, 1]} : vector<8x384xf32> to vector<8x32xf32>
    %199 = vector.extract_strided_slice %181 {offsets = [0, 256], sizes = [8, 32], strides = [1, 1]} : vector<8x384xf32> to vector<8x32xf32>
    %200 = arith.addf %199, %11 : vector<8x32xf32>
    %201 = arith.mulf %189, %200 : vector<8x32xf32>
    %202 = arith.addf %198, %201 : vector<8x32xf32>
    %203 = math.tanh %202 : vector<8x32xf32>
    %cst_59 = arith.constant 1.000000e+00 : f32
    %204 = vector.broadcast %cst_59 : f32 to vector<8x32xf32>
    %205 = arith.subf %204, %197 : vector<8x32xf32>
    %206 = arith.mulf %205, %203 : vector<8x32xf32>
    %207 = arith.mulf %197, %146 : vector<8x32xf32>
    %208 = arith.addf %206, %207 : vector<8x32xf32>
    %209 = arith.truncf %208 : vector<8x32xf32> to vector<8x32xbf16>
    %c24 = arith.constant 24 : index
    %c0_60 = arith.constant 0 : index
    %210 = vector.load %arg17[%c24, %c0_60] : memref<64x32xf32, #tpu.memory_space<vmem>>, vector<8x32xf32>
    tpu.vector_store %arg17[%c24, %c0_60], %208 {strides = array<i32>} : memref<64x32xf32, #tpu.memory_space<vmem>>, vector<8x32xf32>,
    %c24_61 = arith.constant 24 : index
    %c0_62 = arith.constant 0 : index
    %211 = vector.load %arg16[%c24_61, %c0_62] : memref<64x384xf32, #tpu.memory_space<vmem>>, vector<8x384xf32>
    %cst_63 = arith.constant dense<0.000000e+00> : vector<8x384xf32>
    %212 = tpu.matmul %178, %4, %cst_63 {dimension_numbers = #tpu.dot_dimension_numbers<[1], [0], [0], [1], [0, 0, 1, 1], [], []>} : vector<8x32xbf16>, vector<32x384xbf16>, vector<8x384xf32> -> vector<8x384xf32>
    %213 = vector.extract_strided_slice %211 {offsets = [0, 0], sizes = [8, 32], strides = [1, 1]} : vector<8x384xf32> to vector<8x32xf32>
    %214 = vector.extract_strided_slice %212 {offsets = [0, 0], sizes = [8, 32], strides = [1, 1]} : vector<8x384xf32> to vector<8x32xf32>
    %215 = arith.addf %213, %214 : vector<8x32xf32>
    %216 = arith.negf %215 : vector<8x32xf32>
    %217 = math.exp %216 : vector<8x32xf32>
    %cst_64 = arith.constant 1.000000e+00 : f32
    %218 = vector.broadcast %cst_64 : f32 to vector<8x32xf32>
    %219 = arith.addf %218, %217 : vector<8x32xf32>
    %220 = arith.divf %218, %219 : vector<8x32xf32>
    %221 = vector.extract_strided_slice %211 {offsets = [0, 128], sizes = [8, 32], strides = [1, 1]} : vector<8x384xf32> to vector<8x32xf32>
    %222 = vector.extract_strided_slice %212 {offsets = [0, 128], sizes = [8, 32], strides = [1, 1]} : vector<8x384xf32> to vector<8x32xf32>
    %223 = arith.addf %221, %222 : vector<8x32xf32>
    %224 = arith.negf %223 : vector<8x32xf32>
    %225 = math.exp %224 : vector<8x32xf32>
    %cst_65 = arith.constant 1.000000e+00 : f32
    %226 = vector.broadcast %cst_65 : f32 to vector<8x32xf32>
    %227 = arith.addf %226, %225 : vector<8x32xf32>
    %228 = arith.divf %226, %227 : vector<8x32xf32>
    %229 = vector.extract_strided_slice %211 {offsets = [0, 256], sizes = [8, 32], strides = [1, 1]} : vector<8x384xf32> to vector<8x32xf32>
    %230 = vector.extract_strided_slice %212 {offsets = [0, 256], sizes = [8, 32], strides = [1, 1]} : vector<8x384xf32> to vector<8x32xf32>
    %231 = arith.addf %230, %8 : vector<8x32xf32>
    %232 = arith.mulf %220, %231 : vector<8x32xf32>
    %233 = arith.addf %229, %232 : vector<8x32xf32>
    %234 = math.tanh %233 : vector<8x32xf32>
    %cst_66 = arith.constant 1.000000e+00 : f32
    %235 = vector.broadcast %cst_66 : f32 to vector<8x32xf32>
    %236 = arith.subf %235, %228 : vector<8x32xf32>
    %237 = arith.mulf %236, %234 : vector<8x32xf32>
    %238 = arith.mulf %228, %177 : vector<8x32xf32>
    %239 = arith.addf %237, %238 : vector<8x32xf32>
    %240 = arith.truncf %239 : vector<8x32xf32> to vector<8x32xbf16>
    %cst_67 = arith.constant dense<0.000000e+00> : vector<8x384xf32>
    %241 = tpu.matmul %240, %1, %cst_67 {dimension_numbers = #tpu.dot_dimension_numbers<[1], [0], [0], [1], [0, 0, 1, 1], [], []>} : vector<8x32xbf16>, vector<32x384xbf16>, vector<8x384xf32> -> vector<8x384xf32>
    %242 = arith.addf %241, %13 : vector<8x384xf32>
    %cst_68 = arith.constant dense<0.000000e+00> : vector<8x384xf32>
    %243 = tpu.matmul %209, %5, %cst_68 {dimension_numbers = #tpu.dot_dimension_numbers<[1], [0], [0], [1], [0, 0, 1, 1], [], []>} : vector<8x32xbf16>, vector<32x384xbf16>, vector<8x384xf32> -> vector<8x384xf32>
    %244 = vector.extract_strided_slice %242 {offsets = [0, 0], sizes = [8, 32], strides = [1, 1]} : vector<8x384xf32> to vector<8x32xf32>
    %245 = vector.extract_strided_slice %243 {offsets = [0, 0], sizes = [8, 32], strides = [1, 1]} : vector<8x384xf32> to vector<8x32xf32>
    %246 = arith.addf %244, %245 : vector<8x32xf32>
    %247 = arith.negf %246 : vector<8x32xf32>
    %248 = math.exp %247 : vector<8x32xf32>
    %cst_69 = arith.constant 1.000000e+00 : f32
    %249 = vector.broadcast %cst_69 : f32 to vector<8x32xf32>
    %250 = arith.addf %249, %248 : vector<8x32xf32>
    %251 = arith.divf %249, %250 : vector<8x32xf32>
    %252 = vector.extract_strided_slice %242 {offsets = [0, 128], sizes = [8, 32], strides = [1, 1]} : vector<8x384xf32> to vector<8x32xf32>
    %253 = vector.extract_strided_slice %243 {offsets = [0, 128], sizes = [8, 32], strides = [1, 1]} : vector<8x384xf32> to vector<8x32xf32>
    %254 = arith.addf %252, %253 : vector<8x32xf32>
    %255 = arith.negf %254 : vector<8x32xf32>
    %256 = math.exp %255 : vector<8x32xf32>
    %cst_70 = arith.constant 1.000000e+00 : f32
    %257 = vector.broadcast %cst_70 : f32 to vector<8x32xf32>
    %258 = arith.addf %257, %256 : vector<8x32xf32>
    %259 = arith.divf %257, %258 : vector<8x32xf32>
    %260 = vector.extract_strided_slice %242 {offsets = [0, 256], sizes = [8, 32], strides = [1, 1]} : vector<8x384xf32> to vector<8x32xf32>
    %261 = vector.extract_strided_slice %243 {offsets = [0, 256], sizes = [8, 32], strides = [1, 1]} : vector<8x384xf32> to vector<8x32xf32>
    %262 = arith.addf %261, %11 : vector<8x32xf32>
    %263 = arith.mulf %251, %262 : vector<8x32xf32>
    %264 = arith.addf %260, %263 : vector<8x32xf32>
    %265 = math.tanh %264 : vector<8x32xf32>
    %cst_71 = arith.constant 1.000000e+00 : f32
    %266 = vector.broadcast %cst_71 : f32 to vector<8x32xf32>
    %267 = arith.subf %266, %259 : vector<8x32xf32>
    %268 = arith.mulf %267, %265 : vector<8x32xf32>
    %269 = arith.mulf %259, %208 : vector<8x32xf32>
    %270 = arith.addf %268, %269 : vector<8x32xf32>
    %271 = arith.truncf %270 : vector<8x32xf32> to vector<8x32xbf16>
    %c32 = arith.constant 32 : index
    %c0_72 = arith.constant 0 : index
    %272 = vector.load %arg17[%c32, %c0_72] : memref<64x32xf32, #tpu.memory_space<vmem>>, vector<8x32xf32>
    tpu.vector_store %arg17[%c32, %c0_72], %270 {strides = array<i32>} : memref<64x32xf32, #tpu.memory_space<vmem>>, vector<8x32xf32>,
    %c32_73 = arith.constant 32 : index
    %c0_74 = arith.constant 0 : index
    %273 = vector.load %arg16[%c32_73, %c0_74] : memref<64x384xf32, #tpu.memory_space<vmem>>, vector<8x384xf32>
    %cst_75 = arith.constant dense<0.000000e+00> : vector<8x384xf32>
    %274 = tpu.matmul %240, %4, %cst_75 {dimension_numbers = #tpu.dot_dimension_numbers<[1], [0], [0], [1], [0, 0, 1, 1], [], []>} : vector<8x32xbf16>, vector<32x384xbf16>, vector<8x384xf32> -> vector<8x384xf32>
    %275 = vector.extract_strided_slice %273 {offsets = [0, 0], sizes = [8, 32], strides = [1, 1]} : vector<8x384xf32> to vector<8x32xf32>
    %276 = vector.extract_strided_slice %274 {offsets = [0, 0], sizes = [8, 32], strides = [1, 1]} : vector<8x384xf32> to vector<8x32xf32>
    %277 = arith.addf %275, %276 : vector<8x32xf32>
    %278 = arith.negf %277 : vector<8x32xf32>
    %279 = math.exp %278 : vector<8x32xf32>
    %cst_76 = arith.constant 1.000000e+00 : f32
    %280 = vector.broadcast %cst_76 : f32 to vector<8x32xf32>
    %281 = arith.addf %280, %279 : vector<8x32xf32>
    %282 = arith.divf %280, %281 : vector<8x32xf32>
    %283 = vector.extract_strided_slice %273 {offsets = [0, 128], sizes = [8, 32], strides = [1, 1]} : vector<8x384xf32> to vector<8x32xf32>
    %284 = vector.extract_strided_slice %274 {offsets = [0, 128], sizes = [8, 32], strides = [1, 1]} : vector<8x384xf32> to vector<8x32xf32>
    %285 = arith.addf %283, %284 : vector<8x32xf32>
    %286 = arith.negf %285 : vector<8x32xf32>
    %287 = math.exp %286 : vector<8x32xf32>
    %cst_77 = arith.constant 1.000000e+00 : f32
    %288 = vector.broadcast %cst_77 : f32 to vector<8x32xf32>
    %289 = arith.addf %288, %287 : vector<8x32xf32>
    %290 = arith.divf %288, %289 : vector<8x32xf32>
    %291 = vector.extract_strided_slice %273 {offsets = [0, 256], sizes = [8, 32], strides = [1, 1]} : vector<8x384xf32> to vector<8x32xf32>
    %292 = vector.extract_strided_slice %274 {offsets = [0, 256], sizes = [8, 32], strides = [1, 1]} : vector<8x384xf32> to vector<8x32xf32>
    %293 = arith.addf %292, %8 : vector<8x32xf32>
    %294 = arith.mulf %282, %293 : vector<8x32xf32>
    %295 = arith.addf %291, %294 : vector<8x32xf32>
    %296 = math.tanh %295 : vector<8x32xf32>
    %cst_78 = arith.constant 1.000000e+00 : f32
    %297 = vector.broadcast %cst_78 : f32 to vector<8x32xf32>
    %298 = arith.subf %297, %290 : vector<8x32xf32>
    %299 = arith.mulf %298, %296 : vector<8x32xf32>
    %300 = arith.mulf %290, %239 : vector<8x32xf32>
    %301 = arith.addf %299, %300 : vector<8x32xf32>
    %302 = arith.truncf %301 : vector<8x32xf32> to vector<8x32xbf16>
    %cst_79 = arith.constant dense<0.000000e+00> : vector<8x384xf32>
    %303 = tpu.matmul %302, %1, %cst_79 {dimension_numbers = #tpu.dot_dimension_numbers<[1], [0], [0], [1], [0, 0, 1, 1], [], []>} : vector<8x32xbf16>, vector<32x384xbf16>, vector<8x384xf32> -> vector<8x384xf32>
    %304 = arith.addf %303, %13 : vector<8x384xf32>
    %cst_80 = arith.constant dense<0.000000e+00> : vector<8x384xf32>
    %305 = tpu.matmul %271, %5, %cst_80 {dimension_numbers = #tpu.dot_dimension_numbers<[1], [0], [0], [1], [0, 0, 1, 1], [], []>} : vector<8x32xbf16>, vector<32x384xbf16>, vector<8x384xf32> -> vector<8x384xf32>
    %306 = vector.extract_strided_slice %304 {offsets = [0, 0], sizes = [8, 32], strides = [1, 1]} : vector<8x384xf32> to vector<8x32xf32>
    %307 = vector.extract_strided_slice %305 {offsets = [0, 0], sizes = [8, 32], strides = [1, 1]} : vector<8x384xf32> to vector<8x32xf32>
    %308 = arith.addf %306, %307 : vector<8x32xf32>
    %309 = arith.negf %308 : vector<8x32xf32>
    %310 = math.exp %309 : vector<8x32xf32>
    %cst_81 = arith.constant 1.000000e+00 : f32
    %311 = vector.broadcast %cst_81 : f32 to vector<8x32xf32>
    %312 = arith.addf %311, %310 : vector<8x32xf32>
    %313 = arith.divf %311, %312 : vector<8x32xf32>
    %314 = vector.extract_strided_slice %304 {offsets = [0, 128], sizes = [8, 32], strides = [1, 1]} : vector<8x384xf32> to vector<8x32xf32>
    %315 = vector.extract_strided_slice %305 {offsets = [0, 128], sizes = [8, 32], strides = [1, 1]} : vector<8x384xf32> to vector<8x32xf32>
    %316 = arith.addf %314, %315 : vector<8x32xf32>
    %317 = arith.negf %316 : vector<8x32xf32>
    %318 = math.exp %317 : vector<8x32xf32>
    %cst_82 = arith.constant 1.000000e+00 : f32
    %319 = vector.broadcast %cst_82 : f32 to vector<8x32xf32>
    %320 = arith.addf %319, %318 : vector<8x32xf32>
    %321 = arith.divf %319, %320 : vector<8x32xf32>
    %322 = vector.extract_strided_slice %304 {offsets = [0, 256], sizes = [8, 32], strides = [1, 1]} : vector<8x384xf32> to vector<8x32xf32>
    %323 = vector.extract_strided_slice %305 {offsets = [0, 256], sizes = [8, 32], strides = [1, 1]} : vector<8x384xf32> to vector<8x32xf32>
    %324 = arith.addf %323, %11 : vector<8x32xf32>
    %325 = arith.mulf %313, %324 : vector<8x32xf32>
    %326 = arith.addf %322, %325 : vector<8x32xf32>
    %327 = math.tanh %326 : vector<8x32xf32>
    %cst_83 = arith.constant 1.000000e+00 : f32
    %328 = vector.broadcast %cst_83 : f32 to vector<8x32xf32>
    %329 = arith.subf %328, %321 : vector<8x32xf32>
    %330 = arith.mulf %329, %327 : vector<8x32xf32>
    %331 = arith.mulf %321, %270 : vector<8x32xf32>
    %332 = arith.addf %330, %331 : vector<8x32xf32>
    %333 = arith.truncf %332 : vector<8x32xf32> to vector<8x32xbf16>
    %c40 = arith.constant 40 : index
    %c0_84 = arith.constant 0 : index
    %334 = vector.load %arg17[%c40, %c0_84] : memref<64x32xf32, #tpu.memory_space<vmem>>, vector<8x32xf32>
    tpu.vector_store %arg17[%c40, %c0_84], %332 {strides = array<i32>} : memref<64x32xf32, #tpu.memory_space<vmem>>, vector<8x32xf32>,
    %c40_85 = arith.constant 40 : index
    %c0_86 = arith.constant 0 : index
    %335 = vector.load %arg16[%c40_85, %c0_86] : memref<64x384xf32, #tpu.memory_space<vmem>>, vector<8x384xf32>
    %cst_87 = arith.constant dense<0.000000e+00> : vector<8x384xf32>
    %336 = tpu.matmul %302, %4, %cst_87 {dimension_numbers = #tpu.dot_dimension_numbers<[1], [0], [0], [1], [0, 0, 1, 1], [], []>} : vector<8x32xbf16>, vector<32x384xbf16>, vector<8x384xf32> -> vector<8x384xf32>
    %337 = vector.extract_strided_slice %335 {offsets = [0, 0], sizes = [8, 32], strides = [1, 1]} : vector<8x384xf32> to vector<8x32xf32>
    %338 = vector.extract_strided_slice %336 {offsets = [0, 0], sizes = [8, 32], strides = [1, 1]} : vector<8x384xf32> to vector<8x32xf32>
    %339 = arith.addf %337, %338 : vector<8x32xf32>
    %340 = arith.negf %339 : vector<8x32xf32>
    %341 = math.exp %340 : vector<8x32xf32>
    %cst_88 = arith.constant 1.000000e+00 : f32
    %342 = vector.broadcast %cst_88 : f32 to vector<8x32xf32>
    %343 = arith.addf %342, %341 : vector<8x32xf32>
    %344 = arith.divf %342, %343 : vector<8x32xf32>
    %345 = vector.extract_strided_slice %335 {offsets = [0, 128], sizes = [8, 32], strides = [1, 1]} : vector<8x384xf32> to vector<8x32xf32>
    %346 = vector.extract_strided_slice %336 {offsets = [0, 128], sizes = [8, 32], strides = [1, 1]} : vector<8x384xf32> to vector<8x32xf32>
    %347 = arith.addf %345, %346 : vector<8x32xf32>
    %348 = arith.negf %347 : vector<8x32xf32>
    %349 = math.exp %348 : vector<8x32xf32>
    %cst_89 = arith.constant 1.000000e+00 : f32
    %350 = vector.broadcast %cst_89 : f32 to vector<8x32xf32>
    %351 = arith.addf %350, %349 : vector<8x32xf32>
    %352 = arith.divf %350, %351 : vector<8x32xf32>
    %353 = vector.extract_strided_slice %335 {offsets = [0, 256], sizes = [8, 32], strides = [1, 1]} : vector<8x384xf32> to vector<8x32xf32>
    %354 = vector.extract_strided_slice %336 {offsets = [0, 256], sizes = [8, 32], strides = [1, 1]} : vector<8x384xf32> to vector<8x32xf32>
    %355 = arith.addf %354, %8 : vector<8x32xf32>
    %356 = arith.mulf %344, %355 : vector<8x32xf32>
    %357 = arith.addf %353, %356 : vector<8x32xf32>
    %358 = math.tanh %357 : vector<8x32xf32>
    %cst_90 = arith.constant 1.000000e+00 : f32
    %359 = vector.broadcast %cst_90 : f32 to vector<8x32xf32>
    %360 = arith.subf %359, %352 : vector<8x32xf32>
    %361 = arith.mulf %360, %358 : vector<8x32xf32>
    %362 = arith.mulf %352, %301 : vector<8x32xf32>
    %363 = arith.addf %361, %362 : vector<8x32xf32>
    %364 = arith.truncf %363 : vector<8x32xf32> to vector<8x32xbf16>
    %cst_91 = arith.constant dense<0.000000e+00> : vector<8x384xf32>
    %365 = tpu.matmul %364, %1, %cst_91 {dimension_numbers = #tpu.dot_dimension_numbers<[1], [0], [0], [1], [0, 0, 1, 1], [], []>} : vector<8x32xbf16>, vector<32x384xbf16>, vector<8x384xf32> -> vector<8x384xf32>
    %366 = arith.addf %365, %13 : vector<8x384xf32>
    %cst_92 = arith.constant dense<0.000000e+00> : vector<8x384xf32>
    %367 = tpu.matmul %333, %5, %cst_92 {dimension_numbers = #tpu.dot_dimension_numbers<[1], [0], [0], [1], [0, 0, 1, 1], [], []>} : vector<8x32xbf16>, vector<32x384xbf16>, vector<8x384xf32> -> vector<8x384xf32>
    %368 = vector.extract_strided_slice %366 {offsets = [0, 0], sizes = [8, 32], strides = [1, 1]} : vector<8x384xf32> to vector<8x32xf32>
    %369 = vector.extract_strided_slice %367 {offsets = [0, 0], sizes = [8, 32], strides = [1, 1]} : vector<8x384xf32> to vector<8x32xf32>
    %370 = arith.addf %368, %369 : vector<8x32xf32>
    %371 = arith.negf %370 : vector<8x32xf32>
    %372 = math.exp %371 : vector<8x32xf32>
    %cst_93 = arith.constant 1.000000e+00 : f32
    %373 = vector.broadcast %cst_93 : f32 to vector<8x32xf32>
    %374 = arith.addf %373, %372 : vector<8x32xf32>
    %375 = arith.divf %373, %374 : vector<8x32xf32>
    %376 = vector.extract_strided_slice %366 {offsets = [0, 128], sizes = [8, 32], strides = [1, 1]} : vector<8x384xf32> to vector<8x32xf32>
    %377 = vector.extract_strided_slice %367 {offsets = [0, 128], sizes = [8, 32], strides = [1, 1]} : vector<8x384xf32> to vector<8x32xf32>
    %378 = arith.addf %376, %377 : vector<8x32xf32>
    %379 = arith.negf %378 : vector<8x32xf32>
    %380 = math.exp %379 : vector<8x32xf32>
    %cst_94 = arith.constant 1.000000e+00 : f32
    %381 = vector.broadcast %cst_94 : f32 to vector<8x32xf32>
    %382 = arith.addf %381, %380 : vector<8x32xf32>
    %383 = arith.divf %381, %382 : vector<8x32xf32>
    %384 = vector.extract_strided_slice %366 {offsets = [0, 256], sizes = [8, 32], strides = [1, 1]} : vector<8x384xf32> to vector<8x32xf32>
    %385 = vector.extract_strided_slice %367 {offsets = [0, 256], sizes = [8, 32], strides = [1, 1]} : vector<8x384xf32> to vector<8x32xf32>
    %386 = arith.addf %385, %11 : vector<8x32xf32>
    %387 = arith.mulf %375, %386 : vector<8x32xf32>
    %388 = arith.addf %384, %387 : vector<8x32xf32>
    %389 = math.tanh %388 : vector<8x32xf32>
    %cst_95 = arith.constant 1.000000e+00 : f32
    %390 = vector.broadcast %cst_95 : f32 to vector<8x32xf32>
    %391 = arith.subf %390, %383 : vector<8x32xf32>
    %392 = arith.mulf %391, %389 : vector<8x32xf32>
    %393 = arith.mulf %383, %332 : vector<8x32xf32>
    %394 = arith.addf %392, %393 : vector<8x32xf32>
    %395 = arith.truncf %394 : vector<8x32xf32> to vector<8x32xbf16>
    %c48 = arith.constant 48 : index
    %c0_96 = arith.constant 0 : index
    %396 = vector.load %arg17[%c48, %c0_96] : memref<64x32xf32, #tpu.memory_space<vmem>>, vector<8x32xf32>
    tpu.vector_store %arg17[%c48, %c0_96], %394 {strides = array<i32>} : memref<64x32xf32, #tpu.memory_space<vmem>>, vector<8x32xf32>,
    %c48_97 = arith.constant 48 : index
    %c0_98 = arith.constant 0 : index
    %397 = vector.load %arg16[%c48_97, %c0_98] : memref<64x384xf32, #tpu.memory_space<vmem>>, vector<8x384xf32>
    %cst_99 = arith.constant dense<0.000000e+00> : vector<8x384xf32>
    %398 = tpu.matmul %364, %4, %cst_99 {dimension_numbers = #tpu.dot_dimension_numbers<[1], [0], [0], [1], [0, 0, 1, 1], [], []>} : vector<8x32xbf16>, vector<32x384xbf16>, vector<8x384xf32> -> vector<8x384xf32>
    %399 = vector.extract_strided_slice %397 {offsets = [0, 0], sizes = [8, 32], strides = [1, 1]} : vector<8x384xf32> to vector<8x32xf32>
    %400 = vector.extract_strided_slice %398 {offsets = [0, 0], sizes = [8, 32], strides = [1, 1]} : vector<8x384xf32> to vector<8x32xf32>
    %401 = arith.addf %399, %400 : vector<8x32xf32>
    %402 = arith.negf %401 : vector<8x32xf32>
    %403 = math.exp %402 : vector<8x32xf32>
    %cst_100 = arith.constant 1.000000e+00 : f32
    %404 = vector.broadcast %cst_100 : f32 to vector<8x32xf32>
    %405 = arith.addf %404, %403 : vector<8x32xf32>
    %406 = arith.divf %404, %405 : vector<8x32xf32>
    %407 = vector.extract_strided_slice %397 {offsets = [0, 128], sizes = [8, 32], strides = [1, 1]} : vector<8x384xf32> to vector<8x32xf32>
    %408 = vector.extract_strided_slice %398 {offsets = [0, 128], sizes = [8, 32], strides = [1, 1]} : vector<8x384xf32> to vector<8x32xf32>
    %409 = arith.addf %407, %408 : vector<8x32xf32>
    %410 = arith.negf %409 : vector<8x32xf32>
    %411 = math.exp %410 : vector<8x32xf32>
    %cst_101 = arith.constant 1.000000e+00 : f32
    %412 = vector.broadcast %cst_101 : f32 to vector<8x32xf32>
    %413 = arith.addf %412, %411 : vector<8x32xf32>
    %414 = arith.divf %412, %413 : vector<8x32xf32>
    %415 = vector.extract_strided_slice %397 {offsets = [0, 256], sizes = [8, 32], strides = [1, 1]} : vector<8x384xf32> to vector<8x32xf32>
    %416 = vector.extract_strided_slice %398 {offsets = [0, 256], sizes = [8, 32], strides = [1, 1]} : vector<8x384xf32> to vector<8x32xf32>
    %417 = arith.addf %416, %8 : vector<8x32xf32>
    %418 = arith.mulf %406, %417 : vector<8x32xf32>
    %419 = arith.addf %415, %418 : vector<8x32xf32>
    %420 = math.tanh %419 : vector<8x32xf32>
    %cst_102 = arith.constant 1.000000e+00 : f32
    %421 = vector.broadcast %cst_102 : f32 to vector<8x32xf32>
    %422 = arith.subf %421, %414 : vector<8x32xf32>
    %423 = arith.mulf %422, %420 : vector<8x32xf32>
    %424 = arith.mulf %414, %363 : vector<8x32xf32>
    %425 = arith.addf %423, %424 : vector<8x32xf32>
    %426 = arith.truncf %425 : vector<8x32xf32> to vector<8x32xbf16>
    %cst_103 = arith.constant dense<0.000000e+00> : vector<8x384xf32>
    %427 = tpu.matmul %426, %1, %cst_103 {dimension_numbers = #tpu.dot_dimension_numbers<[1], [0], [0], [1], [0, 0, 1, 1], [], []>} : vector<8x32xbf16>, vector<32x384xbf16>, vector<8x384xf32> -> vector<8x384xf32>
    %428 = arith.addf %427, %13 : vector<8x384xf32>
    %cst_104 = arith.constant dense<0.000000e+00> : vector<8x384xf32>
    %429 = tpu.matmul %395, %5, %cst_104 {dimension_numbers = #tpu.dot_dimension_numbers<[1], [0], [0], [1], [0, 0, 1, 1], [], []>} : vector<8x32xbf16>, vector<32x384xbf16>, vector<8x384xf32> -> vector<8x384xf32>
    %430 = vector.extract_strided_slice %428 {offsets = [0, 0], sizes = [8, 32], strides = [1, 1]} : vector<8x384xf32> to vector<8x32xf32>
    %431 = vector.extract_strided_slice %429 {offsets = [0, 0], sizes = [8, 32], strides = [1, 1]} : vector<8x384xf32> to vector<8x32xf32>
    %432 = arith.addf %430, %431 : vector<8x32xf32>
    %433 = arith.negf %432 : vector<8x32xf32>
    %434 = math.exp %433 : vector<8x32xf32>
    %cst_105 = arith.constant 1.000000e+00 : f32
    %435 = vector.broadcast %cst_105 : f32 to vector<8x32xf32>
    %436 = arith.addf %435, %434 : vector<8x32xf32>
    %437 = arith.divf %435, %436 : vector<8x32xf32>
    %438 = vector.extract_strided_slice %428 {offsets = [0, 128], sizes = [8, 32], strides = [1, 1]} : vector<8x384xf32> to vector<8x32xf32>
    %439 = vector.extract_strided_slice %429 {offsets = [0, 128], sizes = [8, 32], strides = [1, 1]} : vector<8x384xf32> to vector<8x32xf32>
    %440 = arith.addf %438, %439 : vector<8x32xf32>
    %441 = arith.negf %440 : vector<8x32xf32>
    %442 = math.exp %441 : vector<8x32xf32>
    %cst_106 = arith.constant 1.000000e+00 : f32
    %443 = vector.broadcast %cst_106 : f32 to vector<8x32xf32>
    %444 = arith.addf %443, %442 : vector<8x32xf32>
    %445 = arith.divf %443, %444 : vector<8x32xf32>
    %446 = vector.extract_strided_slice %428 {offsets = [0, 256], sizes = [8, 32], strides = [1, 1]} : vector<8x384xf32> to vector<8x32xf32>
    %447 = vector.extract_strided_slice %429 {offsets = [0, 256], sizes = [8, 32], strides = [1, 1]} : vector<8x384xf32> to vector<8x32xf32>
    %448 = arith.addf %447, %11 : vector<8x32xf32>
    %449 = arith.mulf %437, %448 : vector<8x32xf32>
    %450 = arith.addf %446, %449 : vector<8x32xf32>
    %451 = math.tanh %450 : vector<8x32xf32>
    %cst_107 = arith.constant 1.000000e+00 : f32
    %452 = vector.broadcast %cst_107 : f32 to vector<8x32xf32>
    %453 = arith.subf %452, %445 : vector<8x32xf32>
    %454 = arith.mulf %453, %451 : vector<8x32xf32>
    %455 = arith.mulf %445, %394 : vector<8x32xf32>
    %456 = arith.addf %454, %455 : vector<8x32xf32>
    %c56 = arith.constant 56 : index
    %c0_108 = arith.constant 0 : index
    %457 = vector.load %arg17[%c56, %c0_108] : memref<64x32xf32, #tpu.memory_space<vmem>>, vector<8x32xf32>
    tpu.vector_store %arg17[%c56, %c0_108], %456 {strides = array<i32>} : memref<64x32xf32, #tpu.memory_space<vmem>>, vector<8x32xf32>,
    %c0_109 = arith.constant 0 : index
    %c0_110 = arith.constant 0 : index
    %458 = vector.load %arg17[%c0_109, %c0_110] : memref<64x32xf32, #tpu.memory_space<vmem>>, vector<64x32xf32>
    %c0_111 = arith.constant 0 : index
    %c0_112 = arith.constant 0 : index
    %459 = vector.load %arg2[%c0_111, %c0_112] : memref<1x32xf32, #tpu.memory_space<vmem>>, vector<1x32xf32>
    %460 = vector.shape_cast %459 : vector<1x32xf32> to vector<1x32xf32>
    %461 = vector.broadcast %460 : vector<1x32xf32> to vector<64x32xf32>
    %c0_113 = arith.constant 0 : index
    %c0_114 = arith.constant 0 : index
    %462 = vector.load %arg4[%c0_113, %c0_114] : memref<1x32xf32, #tpu.memory_space<vmem>>, vector<1x32xf32>
    %463 = vector.shape_cast %462 : vector<1x32xf32> to vector<1x32xf32>
    %464 = vector.broadcast %463 : vector<1x32xf32> to vector<64x32xf32>
    %c0_115 = arith.constant 0 : index
    %c0_116 = arith.constant 0 : index
    %465 = vector.load %arg6[%c0_115, %c0_116] : memref<1x8xf32, #tpu.memory_space<vmem>>, vector<1x8xf32>
    %466 = vector.shape_cast %465 : vector<1x8xf32> to vector<1x8xf32>
    %467 = vector.broadcast %466 : vector<1x8xf32> to vector<64x8xf32>
    %c0_117 = arith.constant 0 : index
    %c0_118 = arith.constant 0 : index
    %468 = vector.load %arg1[%c0_117, %c0_118] : memref<32x32xf32, #tpu.memory_space<vmem>>, vector<32x32xf32>
    %cst_119 = arith.constant dense<0.000000e+00> : vector<64x32xf32>
    %469 = tpu.matmul %458, %468, %cst_119 {dimension_numbers = #tpu.dot_dimension_numbers<[1], [0], [0], [1], [0, 0, 1, 1], [], []>} : vector<64x32xf32>, vector<32x32xf32>, vector<64x32xf32> -> vector<64x32xf32>
    %470 = arith.addf %469, %461 : vector<64x32xf32>
    %cst_120 = arith.constant 0.000000e+00 : f32
    %471 = vector.broadcast %cst_120 : f32 to vector<64x32xf32>
    %472 = arith.maximumf %470, %471 : vector<64x32xf32>
    %c0_121 = arith.constant 0 : index
    %c0_122 = arith.constant 0 : index
    %473 = vector.load %arg3[%c0_121, %c0_122] : memref<32x32xf32, #tpu.memory_space<vmem>>, vector<32x32xf32>
    %cst_123 = arith.constant dense<0.000000e+00> : vector<64x32xf32>
    %474 = tpu.matmul %472, %473, %cst_123 {dimension_numbers = #tpu.dot_dimension_numbers<[1], [0], [0], [1], [0, 0, 1, 1], [], []>} : vector<64x32xf32>, vector<32x32xf32>, vector<64x32xf32> -> vector<64x32xf32>
    %475 = arith.addf %474, %464 : vector<64x32xf32>
    %cst_124 = arith.constant 0.000000e+00 : f32
    %476 = vector.broadcast %cst_124 : f32 to vector<64x32xf32>
    %477 = arith.maximumf %475, %476 : vector<64x32xf32>
    %c0_125 = arith.constant 0 : index
    %c0_126 = arith.constant 0 : index
    %478 = vector.load %arg5[%c0_125, %c0_126] : memref<32x8xf32, #tpu.memory_space<vmem>>, vector<32x8xf32>
    %cst_127 = arith.constant dense<0.000000e+00> : vector<64x8xf32>
    %479 = tpu.matmul %477, %478, %cst_127 {dimension_numbers = #tpu.dot_dimension_numbers<[1], [0], [0], [1], [0, 0, 1, 1], [], []>} : vector<64x32xf32>, vector<32x8xf32>, vector<64x8xf32> -> vector<64x8xf32>
    %480 = arith.addf %479, %467 : vector<64x8xf32>
    %481 = vector.extract_strided_slice %480 {offsets = [0, 0], sizes = [64, 4], strides = [1, 1]} : vector<64x8xf32> to vector<64x4xf32>
    %482 = vector.extract_strided_slice %480 {offsets = [0, 4], sizes = [64, 4], strides = [1, 1]} : vector<64x8xf32> to vector<64x4xf32>
    %cst_128 = arith.constant 2.000000e+01 : f32
    %483 = vector.broadcast %cst_128 : f32 to vector<64x4xf32>
    %484 = arith.cmpf ogt, %482, %483 : vector<64x4xf32>
    %cst_129 = arith.constant 2.000000e+01 : f32
    %485 = vector.broadcast %cst_129 : f32 to vector<64x4xf32>
    %486 = arith.minimumf %482, %485 : vector<64x4xf32>
    %487 = math.exp %486 : vector<64x4xf32>
    %488 = math.log1p %487 : vector<64x4xf32>
    %489 = arith.select %484, %482, %488 : vector<64x4xi1>, vector<64x4xf32>
    %490 = arith.subf %14, %481 : vector<64x4xf32>
    %491 = arith.mulf %490, %490 : vector<64x4xf32>
    %492 = arith.mulf %489, %489 : vector<64x4xf32>
    %493 = arith.divf %491, %492 : vector<64x4xf32>
    %494 = math.log %489 : vector<64x4xf32>
    %cst_130 = arith.constant 2.000000e+00 : f32
    %495 = vector.broadcast %cst_130 : f32 to vector<64x4xf32>
    %496 = arith.mulf %495, %494 : vector<64x4xf32>
    %497 = arith.addf %493, %496 : vector<64x4xf32>
    %cst_131 = arith.constant 1.83787704 : f32
    %498 = vector.broadcast %cst_131 : f32 to vector<64x4xf32>
    %499 = arith.addf %497, %498 : vector<64x4xf32>
    %500 = vector.shape_cast %499 : vector<64x4xf32> to vector<1x64x4xf32>
    %cst_132 = arith.constant dense<0.000000e+00> : vector<1xf32>
    %501 = vector.multi_reduction <add>, %500, %cst_132 [1, 2] : vector<1x64x4xf32> to vector<1xf32>
    %502 = vector.shape_cast %501 : vector<1xf32> to vector<1x1x1xf32>
    %503 = vector.extract %502[0, 0, 0] : f32 from vector<1x1x1xf32>
    %504 = vector.broadcast %503 : f32 to vector<1x1xf32>
    %cst_133 = arith.constant 5.000000e-01 : f32
    %505 = vector.broadcast %cst_133 : f32 to vector<1x1xf32>
    %506 = arith.mulf %505, %504 : vector<1x1xf32>
    %c0_134 = arith.constant 0 : index
    %c0_135 = arith.constant 0 : index
    %507 = vector.load %arg15[%c0_134, %c0_135] : memref<1x1xf32, #tpu.memory_space<vmem>>, vector<1x1xf32>
    tpu.vector_store %arg15[%c0_134, %c0_135], %506 {strides = array<i32>} : memref<1x1xf32, #tpu.memory_space<vmem>>, vector<1x1xf32>,
    return
  }
}

</mosaic_0001>

<llo_original>
// kernel: tpu_custom_call.1
$region0: #{tpu_custom_call.1}
  #allocation0 [shape = 'u32[]', space=smem, size = 0x4, offset = 0x4, fixed_abs, tag = 'smem constant byte address 0x4 - core index']
  #allocation1 [shape = 'u32[144,128]{1,0:T(1,128)}', space=vmem, size = 0x12000, scoped, tag = 'internal scratch']
  #allocation2 [shape = 'f32[64,384]{1,0:T(8,128)}', space=vmem, size = 0x18000, scoped, tag = 'scratch operand']
  #allocation3 [shape = 'f32[64,32]{1,0:T(8,128)}', space=vmem, size = 0x8000, scoped, tag = 'scratch operand']
  %s0 = inlined_call_operand.vmem [shape: f32[64,4], index: 0, kind: input, shape index: {}]
  %s1 = inlined_call_operand.hbm [shape: f32[32,32], index: 1, kind: input, shape index: {}]
  %s2 = inlined_call_operand.hbm [shape: f32[1,32], index: 2, kind: input, shape index: {}]
  %s3 = inlined_call_operand.hbm [shape: f32[32,32], index: 3, kind: input, shape index: {}]
  %s4 = inlined_call_operand.hbm [shape: f32[1,32], index: 4, kind: input, shape index: {}]
  %s5 = inlined_call_operand.vmem [shape: f32[32,8], index: 5, kind: input, shape index: {}]
  %s6 = inlined_call_operand.hbm [shape: f32[1,8], index: 6, kind: input, shape index: {}]
  %s7 = inlined_call_operand.vmem [shape: f32[4,384], index: 7, kind: input, shape index: {}]
  %s8 = inlined_call_operand.vmem [shape: f32[1,384], index: 8, kind: input, shape index: {}]
  %s9 = inlined_call_operand.vmem [shape: bf16[32,384], index: 9, kind: input, shape index: {}]
  %s10 = inlined_call_operand.vmem [shape: f32[1,32], index: 10, kind: input, shape index: {}]
  %s11 = inlined_call_operand.vmem [shape: bf16[32,384], index: 11, kind: input, shape index: {}]
  %s12 = inlined_call_operand.vmem [shape: f32[1,384], index: 12, kind: input, shape index: {}]
  %s13 = inlined_call_operand.hbm [shape: bf16[32,384], index: 13, kind: input, shape index: {}]
  %s14 = inlined_call_operand.vmem [shape: f32[1,32], index: 14, kind: input, shape index: {}]
  %s15 = inlined_call_operand.hbm [shape: f32[1,1], index: 15, kind: output, shape index: {}]
  %s16 = sld [smem:[#allocation0]]
  $region94: #{tpu_custom_call.1} parent=0
    _
  %s18 = ssub.s32 1, %s16
  %s19 = scalar_select 0, %s18, %s16
  $region1: #{tpu_custom_call.1} parent=0
    #allocation4 [shape = 'u8[16384]{0}', space=vmem, size = 0x4000, scoped, tag = 'input window, operand 1, single buffered']
    #allocation5 [shape = 's32[1]{0}', space=sflag, size = 0x4, scoped, tag = 'scoped memory for tpu_custom_call.1']
    #allocation6 [shape = 's32[1]{0}', space=sflag, size = 0x4, scoped, tag = 'scoped memory for tpu_custom_call.1']
    #allocation7 [shape = 'u8[512]{0}', space=vmem, size = 0x400, scoped, tag = 'input window, operand 2, single buffered']
    #allocation8 [shape = 's32[1]{0}', space=sflag, size = 0x4, scoped, tag = 'scoped memory for tpu_custom_call.1']
    #allocation9 [shape = 'u8[16384]{0}', space=vmem, size = 0x4000, scoped, tag = 'input window, operand 3, single buffered']
    #allocation10 [shape = 'u8[512]{0}', space=vmem, size = 0x400, scoped, tag = 'input window, operand 4, single buffered']
    #allocation11 [shape = 's32[1]{0}', space=sflag, size = 0x4, scoped, tag = 'scoped memory for tpu_custom_call.1']
    #allocation12 [shape = 'u8[512]{0}', space=vmem, size = 0x400, scoped, tag = 'input window, operand 6, single buffered']
    #allocation13 [shape = 'u8[24576]{0}', space=vmem, size = 0x6000, scoped, tag = 'input window, operand 13, single buffered']
    #allocation14 [shape = 's32[1]{0}', space=sflag, size = 0x4, scoped, tag = 'scoped memory for tpu_custom_call.1']
    #allocation15 [shape = 'u8[512]{0}', space=vmem, size = 0x400, scoped, tag = 'output window, operand 0, single buffered']
    %20 = vsyncpa [#allocation5], 0
    %21 = vsyncpa [#allocation8], 0
    %22 = vsyncpa [#allocation11], 0
    %23 = vsyncpa [#allocation14], 0
    %24 = vsyncpa [#allocation6], 0
    // Predicated region
    $region2: #{tpu_custom_call.1} parent=1 // pred_check
      _
    $region3: #{tpu_custom_call.1} parent=1 // pred_check_branch
      %26 = sbr.rel (0) target = $region5
    $region4: #{tpu_custom_call.1} parent=1 // pred_region
      _
    $region5: #{tpu_custom_call.1} parent=1 // pred_fallthru
      _
    // Predicated region
    $region6: #{tpu_custom_call.1} parent=1 // pred_check
      _
    $region7: #{tpu_custom_call.1} parent=1 // pred_check_branch
      %28 = sbr.rel (0) target = $region9
    $region8: #{tpu_custom_call.1} parent=1 // pred_region
      %s30 = ssub.s32 512, 512
      %31 = vsyncadd [#allocation5], %s30
      %s32 = sshll.u32 [#allocation4], 4
      %s33 = int_to_ptr.vmem [resolvable:$true] %s32
      %38 = dma.hbm_to_vmem [thread:$0]  %s1, 512, %s33, [#allocation5], 128, 128, 8
    $region9: #{tpu_custom_call.1} parent=1 // pred_fallthru
      _
    // Predicated region
    $region10: #{tpu_custom_call.1} parent=1 // pred_check
      _
    $region11: #{tpu_custom_call.1} parent=1 // pred_check_branch
      %40 = sbr.rel (0) target = $region13
    $region12: #{tpu_custom_call.1} parent=1 // pred_region
      %s42 = ssub.s32 16, 16
      %43 = vsyncadd [#allocation8], %s42
      %s45 = sshll.u32 [#allocation7], 4
      %s46 = int_to_ptr.vmem [resolvable:$true] %s45
      %48 = dma.hbm_to_vmem [thread:$0]  %s2, 16, %s46, [#allocation8]
    $region13: #{tpu_custom_call.1} parent=1 // pred_fallthru
      _
    // Predicated region
    $region14: #{tpu_custom_call.1} parent=1 // pred_check
      _
    $region15: #{tpu_custom_call.1} parent=1 // pred_check_branch
      %50 = sbr.rel (0) target = $region17
    $region16: #{tpu_custom_call.1} parent=1 // pred_region
      %s52 = ssub.s32 512, 512
      %53 = vsyncadd [#allocation8], %s52
      %s54 = sshll.u32 [#allocation9], 4
      %s55 = int_to_ptr.vmem [resolvable:$true] %s54
      %60 = dma.hbm_to_vmem [thread:$0]  %s3, 512, %s55, [#allocation8], 128, 128, 8
    $region17: #{tpu_custom_call.1} parent=1 // pred_fallthru
      _
    // Predicated region
    $region18: #{tpu_custom_call.1} parent=1 // pred_check
      _
    $region19: #{tpu_custom_call.1} parent=1 // pred_check_branch
      %62 = sbr.rel (0) target = $region21
    $region20: #{tpu_custom_call.1} parent=1 // pred_region
      %s64 = ssub.s32 16, 16
      %65 = vsyncadd [#allocation11], %s64
      %s67 = sshll.u32 [#allocation10], 4
      %s68 = int_to_ptr.vmem [resolvable:$true] %s67
      %70 = dma.hbm_to_vmem [thread:$0]  %s4, 16, %s68, [#allocation11]
    $region21: #{tpu_custom_call.1} parent=1 // pred_fallthru
      _
    // Predicated region
    $region22: #{tpu_custom_call.1} parent=1 // pred_check
      _
    $region23: #{tpu_custom_call.1} parent=1 // pred_check_branch
      %72 = sbr.rel (0) target = $region25
    $region24: #{tpu_custom_call.1} parent=1 // pred_region
      _
    $region25: #{tpu_custom_call.1} parent=1 // pred_fallthru
      _
    // Predicated region
    $region26: #{tpu_custom_call.1} parent=1 // pred_check
      _
    $region27: #{tpu_custom_call.1} parent=1 // pred_check_branch
      %74 = sbr.rel (0) target = $region29
    $region28: #{tpu_custom_call.1} parent=1 // pred_region
      %s76 = ssub.s32 16, 16
      %77 = vsyncadd [#allocation11], %s76
      %s79 = sshll.u32 [#allocation12], 4
      %s80 = int_to_ptr.vmem [resolvable:$true] %s79
      %82 = dma.hbm_to_vmem [thread:$0]  %s6, 16, %s80, [#allocation11]
    $region29: #{tpu_custom_call.1} parent=1 // pred_fallthru
      _
    // Predicated region
    $region30: #{tpu_custom_call.1} parent=1 // pred_check
      _
    $region31: #{tpu_custom_call.1} parent=1 // pred_check_branch
      %84 = sbr.rel (0) target = $region33
    $region32: #{tpu_custom_call.1} parent=1 // pred_region
      _
    $region33: #{tpu_custom_call.1} parent=1 // pred_fallthru
      _
    // Predicated region
    $region34: #{tpu_custom_call.1} parent=1 // pred_check
      _
    $region35: #{tpu_custom_call.1} parent=1 // pred_check_branch
      %86 = sbr.rel (0) target = $region37
    $region36: #{tpu_custom_call.1} parent=1 // pred_region
      _
    $region37: #{tpu_custom_call.1} parent=1 // pred_fallthru
      _
    // Predicated region
    $region38: #{tpu_custom_call.1} parent=1 // pred_check
      _
    $region39: #{tpu_custom_call.1} parent=1 // pred_check_branch
      %88 = sbr.rel (0) target = $region41
    $region40: #{tpu_custom_call.1} parent=1 // pred_region
      _
    $region41: #{tpu_custom_call.1} parent=1 // pred_fallthru
      _
    // Predicated region
    $region42: #{tpu_custom_call.1} parent=1 // pred_check
      _
    $region43: #{tpu_custom_call.1} parent=1 // pred_check_branch
      %90 = sbr.rel (0) target = $region45
    $region44: #{tpu_custom_call.1} parent=1 // pred_region
      _
    $region45: #{tpu_custom_call.1} parent=1 // pred_fallthru
      _
    // Predicated region
    $region46: #{tpu_custom_call.1} parent=1 // pred_check
      _
    $region47: #{tpu_custom_call.1} parent=1 // pred_check_branch
      %92 = sbr.rel (0) target = $region49
    $region48: #{tpu_custom_call.1} parent=1 // pred_region
      _
    $region49: #{tpu_custom_call.1} parent=1 // pred_fallthru
      _
    // Predicated region
    $region50: #{tpu_custom_call.1} parent=1 // pred_check
      _
    $region51: #{tpu_custom_call.1} parent=1 // pred_check_branch
      %94 = sbr.rel (0) target = $region53
    $region52: #{tpu_custom_call.1} parent=1 // pred_region
      _
    $region53: #{tpu_custom_call.1} parent=1 // pred_fallthru
      _
    // Predicated region
    $region54: #{tpu_custom_call.1} parent=1 // pred_check
      _
    $region55: #{tpu_custom_call.1} parent=1 // pred_check_branch
      %96 = sbr.rel (0) target = $region57
    $region56: #{tpu_custom_call.1} parent=1 // pred_region
      %s98 = ssub.s32 768, 768
      %99 = vsyncadd [#allocation14], %s98
      %s100 = sshll.u32 [#allocation13], 4
      %s101 = int_to_ptr.vmem [resolvable:$true] %s100
      %106 = dma.hbm_to_vmem [thread:$0]  %s13, 768, %s101, [#allocation14], 192, 192, 12
    $region57: #{tpu_custom_call.1} parent=1 // pred_fallthru
      _
    // Predicated region
    $region58: #{tpu_custom_call.1} parent=1 // pred_check
      _
    $region59: #{tpu_custom_call.1} parent=1 // pred_check_branch
      %108 = sbr.rel (0) target = $region61
    $region60: #{tpu_custom_call.1} parent=1 // pred_region
      _
    $region61: #{tpu_custom_call.1} parent=1 // pred_fallthru
      _
    // Predicated region
    $region62: #{tpu_custom_call.1} parent=1 // pred_check
      _
    $region63: #{tpu_custom_call.1} parent=1 // pred_check_branch
      %110 = sbr.rel (0) target = $region65
    $region64: #{tpu_custom_call.1} parent=1 // pred_region
      %111 = dma.done [#allocation5], 512
    $region65: #{tpu_custom_call.1} parent=1 // pred_fallthru
      _
    // Predicated region
    $region66: #{tpu_custom_call.1} parent=1 // pred_check
      _
    $region67: #{tpu_custom_call.1} parent=1 // pred_check_branch
      %113 = sbr.rel (0) target = $region69
    $region68: #{tpu_custom_call.1} parent=1 // pred_region
      %114 = dma.done [#allocation8], 16
    $region69: #{tpu_custom_call.1} parent=1 // pred_fallthru
      _
    // Predicated region
    $region70: #{tpu_custom_call.1} parent=1 // pred_check
      _
    $region71: #{tpu_custom_call.1} parent=1 // pred_check_branch
      %116 = sbr.rel (0) target = $region73
    $region72: #{tpu_custom_call.1} parent=1 // pred_region
      %117 = dma.done [#allocation8], 512
    $region73: #{tpu_custom_call.1} parent=1 // pred_fallthru
      _
    // Predicated region
    $region74: #{tpu_custom_call.1} parent=1 // pred_check
      _
    $region75: #{tpu_custom_call.1} parent=1 // pred_check_branch
      %119 = sbr.rel (0) target = $region77
    $region76: #{tpu_custom_call.1} parent=1 // pred_region
      %120 = dma.done [#allocation11], 16
    $region77: #{tpu_custom_call.1} parent=1 // pred_fallthru
      _
    // Predicated region
    $region78: #{tpu_custom_call.1} parent=1 // pred_check
      _
    $region79: #{tpu_custom_call.1} parent=1 // pred_check_branch
      %122 = sbr.rel (0) target = $region81
    $region80: #{tpu_custom_call.1} parent=1 // pred_region
      %123 = dma.done [#allocation11], 16
    $region81: #{tpu_custom_call.1} parent=1 // pred_fallthru
      _
    // Predicated region
    $region82: #{tpu_custom_call.1} parent=1 // pred_check
      _
    $region83: #{tpu_custom_call.1} parent=1 // pred_check_branch
      %125 = sbr.rel (0) target = $region85
    $region84: #{tpu_custom_call.1} parent=1 // pred_region
      %126 = dma.done [#allocation14], 768
    $region85: #{tpu_custom_call.1} parent=1 // pred_fallthru
      _
    %v128 = vld [vmem:[%s7] sm:$0xff]
    %v129 = vld [vmem:[%s7 + $0x8] sm:$0xf]
    %v130 = vld [vmem:[%s11] sm:$0xff]
    %v131 = vld [vmem:[%s11 + $0x8] sm:$0xf]
    %v132 = vld [vmem:[%s11 + $0xc] sm:$0xff]
    %v133 = vld [vmem:[%s11 + $0x14] sm:$0xf]
    %v134 = vld [vmem:[%s11 + $0x18] sm:$0xff]
    %v135 = vld [vmem:[%s11 + $0x20] sm:$0xf]
    %v136 = vld [vmem:[%s11 + $0x24] sm:$0xff]
    %v137 = vld [vmem:[%s11 + $0x2c] sm:$0xf]
    %v138 = vld [vmem:[%s8] sm:$0x7]
    %v139 = vld [vmem:[%s12] sm:$0x7]
    %v140 = vld [vmem:[%s9] sm:$0xff]
    %v141 = vld [vmem:[%s9 + $0x8] sm:$0xf]
    %v142 = vld [vmem:[%s9 + $0xc] sm:$0xff]
    %v143 = vld [vmem:[%s9 + $0x14] sm:$0xf]
    %v144 = vld [vmem:[%s9 + $0x18] sm:$0xff]
    %v145 = vld [vmem:[%s9 + $0x20] sm:$0xf]
    %v146 = vld [vmem:[%s9 + $0x24] sm:$0xff]
    %v147 = vld [vmem:[%s9 + $0x2c] sm:$0xf]
    %v148 = vld [vmem:[#allocation13] sm:$0xff]
    %v149 = vld [vmem:[#allocation13 + $0x8] sm:$0xf]
    %v150 = vld [vmem:[#allocation13 + $0xc] sm:$0xff]
    %v151 = vld [vmem:[#allocation13 + $0x14] sm:$0xf]
    %v152 = vld [vmem:[#allocation13 + $0x18] sm:$0xff]
    %v153 = vld [vmem:[#allocation13 + $0x20] sm:$0xf]
    %v154 = vld [vmem:[#allocation13 + $0x24] sm:$0xff]
    %v155 = vld [vmem:[#allocation13 + $0x2c] sm:$0xf]
    %v156 = vld [vmem:[%s10] sm:$0x1]
    %v158 = vlaneseq
    %v159 = vshrl.u32 %v158, 7
    %v160 = vsub.s32 0, %v159
    %v161 = vrot.slane %v156, %v160
    %v163 = vld [vmem:[%s14] sm:$0x1]
    %v165 = vlaneseq
    %v166 = vshrl.u32 %v165, 7
    %v167 = vsub.s32 0, %v166
    %v168 = vrot.slane %v163, %v167
    %v171 = vlaneseq
    %v172 = vshrl.u32 %v171, 7
    %v173 = vsub.s32 0, %v172
    %v174 = vrot.slane %v139, %v173
    %v175 = vlaneseq
    %v176 = vshrl.u32 %v175, 7
    %v177 = vsub.s32 1, %v176
    %v178 = vrot.slane %v139, %v177
    %v179 = vlaneseq
    %v180 = vshrl.u32 %v179, 7
    %v181 = vsub.s32 2, %v180
    %v182 = vrot.slane %v139, %v181
    %v186 = vld [vmem:[%s0] sm:$0xff]
    %v187 = vld [vmem:[%s0 + $0x8] sm:$0xff]
    %v188 = vld [vmem:[%s0 + $0x10] sm:$0xff]
    %v189 = vld [vmem:[%s0 + $0x18] sm:$0xff]
    %v190 = vld [vmem:[%s0 + $0x20] sm:$0xff]
    %v191 = vld [vmem:[%s0 + $0x28] sm:$0xff]
    %v192 = vld [vmem:[%s0 + $0x30] sm:$0xff]
    %v193 = vld [vmem:[%s0 + $0x38] sm:$0xff]
    %v195 = vlaneseq
    %v196 = vshrl.u32 %v195, 7
    %v197 = vsub.s32 0, %v196
    %v198 = vrot.slane %v138, %v197
    %v199 = vlaneseq
    %v200 = vshrl.u32 %v199, 7
    %v201 = vsub.s32 1, %v200
    %v202 = vrot.slane %v138, %v201
    %v203 = vlaneseq
    %v204 = vshrl.u32 %v203, 7
    %v205 = vsub.s32 2, %v204
    %v206 = vrot.slane %v138, %v205
    %v212 = vcombine.high %v128, %v128
    %vm213 = vcmask 31744
    %v215 = vsel %vm213, %v186, 0
    %v218 = vsel %vm213, %v187, 0
    %v221 = vsel %vm213, %v188, 0
    %v224 = vsel %vm213, %v189, 0
    %v227 = vsel %vm213, %v190, 0
    %v230 = vsel %vm213, %v191, 0
    %v233 = vsel %vm213, %v192, 0
    %v236 = vsel %vm213, %v193, 0
    %vm238 = vcmask 1043456
    %v239 = vsel %vm238, %v128, 0
    %v241 = vsel %vm238, %v212, 0
    %v243 = vsel %vm238, %v129, 0
    %245 = vmatprep.subr.mxu0 0.0
    %246 = vmatpush1.msra.mxu0 0.0
    %247 = vmatprep.subr.mxu0 0.0
    %248 = vmatpush1.msra.mxu0 0.0
    %249 = vmatprep.subr.mxu0 0.0
    %250 = vmatpush1.msra.mxu0 0.0
    %251 = vmatprep.subr.mxu0 0.0
    %252 = vmatpush1.msra.mxu0 0.0
    %253 = vmatprep.subr.mxu0 0.0
    %254 = vmatpush1.msra.mxu0 0.0
    %255 = vmatprep.subr.mxu0 0.0
    %256 = vmatpush1.msra.mxu0 0.0
    %257 = vmatprep.subr.mxu0 0.0
    %258 = vmatpush1.msra.mxu0 0.0
    %259 = vmatprep.subr.mxu0 0.0
    %260 = vmatpush1.msra.mxu0 0.0
    %261 = vmatprep.subr.mxu0 0.0
    %262 = vmatpush1.msra.mxu0 0.0
    %263 = vmatprep.subr.mxu0 0.0
    %264 = vmatpush1.msra.mxu0 0.0
    %265 = vmatprep.subr.mxu0 0.0
    %266 = vmatpush1.msra.mxu0 0.0
    %267 = vmatprep.subr.mxu0 0.0
    %268 = vmatpush1.msra.mxu0 0.0
    %269 = vmatprep.subr.mxu0 0.0
    %270 = vmatpush1.msra.mxu0 0.0
    %271 = vmatprep.subr.mxu0 0.0
    %272 = vmatpush1.msra.mxu0 0.0
    %273 = vmatprep.subr.mxu0 0.0
    %274 = vmatpush1.msra.mxu0 0.0
    %275 = vmatprep.subr.mxu0 %v241
    %276 = vmatpush1.msra.mxu0 %v239
    %277 = vmatprep.subr.mxu0 0.0
    %278 = vmatpush2.msra.mxu0 0.0
    %279 = vmatprep.subr.mxu0 0.0
    %280 = vmatpush2.msra.mxu0 0.0
    %281 = vmatprep.subr.mxu0 0.0
    %282 = vmatpush2.msra.mxu0 0.0
    %283 = vmatprep.subr.mxu0 0.0
    %284 = vmatpush2.msra.mxu0 0.0
    %285 = vmatprep.subr.mxu0 0.0
    %286 = vmatpush2.msra.mxu0 0.0
    %287 = vmatprep.subr.mxu0 0.0
    %288 = vmatpush2.msra.mxu0 0.0
    %289 = vmatprep.subr.mxu0 0.0
    %290 = vmatpush2.msra.mxu0 0.0
    %291 = vmatprep.subr.mxu0 0.0
    %292 = vmatpush2.msra.mxu0 0.0
    %293 = vmatprep.subr.mxu0 0.0
    %294 = vmatpush2.msra.mxu0 0.0
    %295 = vmatprep.subr.mxu0 0.0
    %296 = vmatpush2.msra.mxu0 0.0
    %297 = vmatprep.subr.mxu0 0.0
    %298 = vmatpush2.msra.mxu0 0.0
    %299 = vmatprep.subr.mxu0 0.0
    %300 = vmatpush2.msra.mxu0 0.0
    %301 = vmatprep.subr.mxu0 0.0
    %302 = vmatpush2.msra.mxu0 0.0
    %303 = vmatprep.subr.mxu0 0.0
    %304 = vmatpush2.msra.mxu0 0.0
    %305 = vmatprep.subr.mxu0 0.0
    %306 = vmatpush2.msra.mxu0 0.0
    %307 = vmatprep.subr.mxu0 0.0
    %308 = vmatpush2.msra.mxu0 0.0
    %309 = vmatprep.mubr.f32.mxu0 0.0
    %310 = vmatmul.mubr.f32.gmra.mxu0 %v215
    %v311 = vpop.f32.mrf.mxu0
    %v312 = vadd.f32 %v198, %v311
    %v313 = vpop.f32.mrf.mxu0
    %v314 = vadd.f32 %v202, %v313
    %315 = vmatprep.mubr.f32.mxu0 0.0
    %316 = vmatmul.mubr.f32.gmra.mxu0 %v218
    %v317 = vpop.f32.mrf.mxu0
    %v318 = vadd.f32 %v198, %v317
    %v319 = vpop.f32.mrf.mxu0
    %v320 = vadd.f32 %v202, %v319
    %321 = vmatprep.mubr.f32.mxu0 0.0
    %322 = vmatmul.mubr.f32.gmra.mxu0 %v221
    %v323 = vpop.f32.mrf.mxu0
    %v324 = vadd.f32 %v198, %v323
    %v325 = vpop.f32.mrf.mxu0
    %v326 = vadd.f32 %v202, %v325
    %327 = vmatprep.mubr.f32.mxu0 0.0
    %328 = vmatmul.mubr.f32.gmra.mxu0 %v224
    %v329 = vpop.f32.mrf.mxu0
    %v330 = vadd.f32 %v198, %v329
    %v331 = vpop.f32.mrf.mxu0
    %v332 = vadd.f32 %v202, %v331
    %333 = vmatprep.mubr.f32.mxu0 0.0
    %334 = vmatmul.mubr.f32.gmra.mxu0 %v227
    %v335 = vpop.f32.mrf.mxu0
    %v336 = vadd.f32 %v198, %v335
    %v337 = vpop.f32.mrf.mxu0
    %v338 = vadd.f32 %v202, %v337
    %339 = vmatprep.mubr.f32.mxu0 0.0
    %340 = vmatmul.mubr.f32.gmra.mxu0 %v230
    %v341 = vpop.f32.mrf.mxu0
    %v342 = vadd.f32 %v198, %v341
    %v343 = vpop.f32.mrf.mxu0
    %v344 = vadd.f32 %v202, %v343
    %345 = vmatprep.mubr.f32.mxu0 0.0
    %346 = vmatmul.mubr.f32.gmra.mxu0 %v233
    %v347 = vpop.f32.mrf.mxu0
    %v348 = vadd.f32 %v198, %v347
    %v349 = vpop.f32.mrf.mxu0
    %v350 = vadd.f32 %v202, %v349
    %351 = vmatprep.mubr.f32.mxu0 0.0
    %352 = vmatmul.mubr.f32.gmra.mxu0 %v236
    %v353 = vpop.f32.mrf.mxu0
    %v354 = vadd.f32 %v198, %v353
    %v355 = vpop.f32.mrf.mxu0
    %v356 = vadd.f32 %v202, %v355
    %357 = vdwg.mxu0
    %358 = vmatprep.subr.mxu0 0.0
    %359 = vmatpush1.msra.mxu0 0.0
    %360 = vmatprep.subr.mxu0 0.0
    %361 = vmatpush1.msra.mxu0 0.0
    %362 = vmatprep.subr.mxu0 0.0
    %363 = vmatpush1.msra.mxu0 0.0
    %364 = vmatprep.subr.mxu0 0.0
    %365 = vmatpush1.msra.mxu0 0.0
    %366 = vmatprep.subr.mxu0 0.0
    %367 = vmatpush1.msra.mxu0 0.0
    %368 = vmatprep.subr.mxu0 0.0
    %369 = vmatpush1.msra.mxu0 0.0
    %370 = vmatprep.subr.mxu0 0.0
    %371 = vmatpush1.msra.mxu0 0.0
    %372 = vmatprep.subr.mxu0 0.0
    %373 = vmatpush1.msra.mxu0 0.0
    %374 = vmatprep.subr.mxu0 0.0
    %375 = vmatpush1.msra.mxu0 0.0
    %376 = vmatprep.subr.mxu0 0.0
    %377 = vmatpush1.msra.mxu0 0.0
    %378 = vmatprep.subr.mxu0 0.0
    %379 = vmatpush1.msra.mxu0 0.0
    %380 = vmatprep.subr.mxu0 0.0
    %381 = vmatpush1.msra.mxu0 0.0
    %382 = vmatprep.subr.mxu0 0.0
    %383 = vmatpush1.msra.mxu0 0.0
    %384 = vmatprep.subr.mxu0 0.0
    %385 = vmatpush1.msra.mxu0 0.0
    %386 = vmatprep.subr.mxu0 0.0
    %387 = vmatpush1.msra.mxu0 0.0
    %388 = vmatprep.subr.mxu0 0.0
    %389 = vmatpush1.msra.mxu0 %v243
    %390 = vmatprep.subr.mxu0 0.0
    %391 = vmatpush2.msra.mxu0 0.0
    %392 = vmatprep.subr.mxu0 0.0
    %393 = vmatpush2.msra.mxu0 0.0
    %394 = vmatprep.subr.mxu0 0.0
    %395 = vmatpush2.msra.mxu0 0.0
    %396 = vmatprep.subr.mxu0 0.0
    %397 = vmatpush2.msra.mxu0 0.0
    %398 = vmatprep.subr.mxu0 0.0
    %399 = vmatpush2.msra.mxu0 0.0
    %400 = vmatprep.subr.mxu0 0.0
    %401 = vmatpush2.msra.mxu0 0.0
    %402 = vmatprep.subr.mxu0 0.0
    %403 = vmatpush2.msra.mxu0 0.0
    %404 = vmatprep.subr.mxu0 0.0
    %405 = vmatpush2.msra.mxu0 0.0
    %406 = vmatprep.subr.mxu0 0.0
    %407 = vmatpush2.msra.mxu0 0.0
    %408 = vmatprep.subr.mxu0 0.0
    %409 = vmatpush2.msra.mxu0 0.0
    %410 = vmatprep.subr.mxu0 0.0
    %411 = vmatpush2.msra.mxu0 0.0
    %412 = vmatprep.subr.mxu0 0.0
    %413 = vmatpush2.msra.mxu0 0.0
    %414 = vmatprep.subr.mxu0 0.0
    %415 = vmatpush2.msra.mxu0 0.0
    %416 = vmatprep.subr.mxu0 0.0
    %417 = vmatpush2.msra.mxu0 0.0
    %418 = vmatprep.subr.mxu0 0.0
    %419 = vmatpush2.msra.mxu0 0.0
    %420 = vmatprep.subr.mxu0 0.0
    %421 = vmatpush2.msra.mxu0 0.0
    %422 = vmatprep.mubr.f32.mxu0 0.0
    %423 = vmatmul.mubr.f32.gmra.mxu0 %v215
    %v424 = vpop.f32.mrf.mxu0
    %v425 = vadd.f32 %v206, %v424
    %v426 = vpop.f32.mrf.mxu0
    %427 = vmatprep.mubr.f32.mxu0 0.0
    %428 = vmatmul.mubr.f32.gmra.mxu0 %v218
    %v429 = vpop.f32.mrf.mxu0
    %v430 = vadd.f32 %v206, %v429
    %v431 = vpop.f32.mrf.mxu0
    %432 = vmatprep.mubr.f32.mxu0 0.0
    %433 = vmatmul.mubr.f32.gmra.mxu0 %v221
    %v434 = vpop.f32.mrf.mxu0
    %v435 = vadd.f32 %v206, %v434
    %v436 = vpop.f32.mrf.mxu0
    %437 = vmatprep.mubr.f32.mxu0 0.0
    %438 = vmatmul.mubr.f32.gmra.mxu0 %v224
    %v439 = vpop.f32.mrf.mxu0
    %v440 = vadd.f32 %v206, %v439
    %v441 = vpop.f32.mrf.mxu0
    %442 = vmatprep.mubr.f32.mxu0 0.0
    %443 = vmatmul.mubr.f32.gmra.mxu0 %v227
    %v444 = vpop.f32.mrf.mxu0
    %v445 = vadd.f32 %v206, %v444
    %v446 = vpop.f32.mrf.mxu0
    %447 = vmatprep.mubr.f32.mxu0 0.0
    %448 = vmatmul.mubr.f32.gmra.mxu0 %v230
    %v449 = vpop.f32.mrf.mxu0
    %v450 = vadd.f32 %v206, %v449
    %v451 = vpop.f32.mrf.mxu0
    %452 = vmatprep.mubr.f32.mxu0 0.0
    %453 = vmatmul.mubr.f32.gmra.mxu0 %v233
    %v454 = vpop.f32.mrf.mxu0
    %v455 = vadd.f32 %v206, %v454
    %v456 = vpop.f32.mrf.mxu0
    %457 = vmatprep.mubr.f32.mxu0 0.0
    %458 = vmatmul.mubr.f32.gmra.mxu0 %v236
    %v459 = vpop.f32.mrf.mxu0
    %v460 = vadd.f32 %v206, %v459
    %v461 = vpop.f32.mrf.mxu0
    %462 = vdwg.mxu0
    %463 = vst [vmem:[#allocation2] sm:$0xff] %v312
    %464 = vst [vmem:[#allocation2 + $0x8] sm:$0xff] %v314
    %465 = vst [vmem:[#allocation2 + $0x10] sm:$0xff] %v425
    %466 = vst [vmem:[#allocation2 + $0x18] sm:$0xff] %v318
    %467 = vst [vmem:[#allocation2 + $0x20] sm:$0xff] %v320
    %468 = vst [vmem:[#allocation2 + $0x28] sm:$0xff] %v430
    %469 = vst [vmem:[#allocation2 + $0x30] sm:$0xff] %v324
    %470 = vst [vmem:[#allocation2 + $0x38] sm:$0xff] %v326
    %471 = vst [vmem:[#allocation2 + $0x40] sm:$0xff] %v435
    %472 = vst [vmem:[#allocation2 + $0x48] sm:$0xff] %v330
    %473 = vst [vmem:[#allocation2 + $0x50] sm:$0xff] %v332
    %474 = vst [vmem:[#allocation2 + $0x58] sm:$0xff] %v440
    %475 = vst [vmem:[#allocation2 + $0x60] sm:$0xff] %v336
    %476 = vst [vmem:[#allocation2 + $0x68] sm:$0xff] %v338
    %477 = vst [vmem:[#allocation2 + $0x70] sm:$0xff] %v445
    %478 = vst [vmem:[#allocation2 + $0x78] sm:$0xff] %v342
    %479 = vst [vmem:[#allocation2 + $0x80] sm:$0xff] %v344
    %480 = vst [vmem:[#allocation2 + $0x88] sm:$0xff] %v450
    %481 = vst [vmem:[#allocation2 + $0x90] sm:$0xff] %v348
    %482 = vst [vmem:[#allocation2 + $0x98] sm:$0xff] %v350
    %483 = vst [vmem:[#allocation2 + $0xa0] sm:$0xff] %v455
    %484 = vst [vmem:[#allocation2 + $0xa8] sm:$0xff] %v354
    %485 = vst [vmem:[#allocation2 + $0xb0] sm:$0xff] %v356
    %486 = vst [vmem:[#allocation2 + $0xb8] sm:$0xff] %v460
    %vm487 = vcmask 261120
    %488 = vst.msk [vmem:[#allocation3] sm:$0xff] %vm487, 0.0
    %v489 = vld [vmem:[#allocation2] sm:$0xff]
    %v490 = vld [vmem:[#allocation2 + $0x8] sm:$0xff]
    %v491 = vld [vmem:[#allocation2 + $0x10] sm:$0xff]
    %v500 = vunpack.c.l.b16 %v140
    %v501 = vunpack.c.h.b16 %v140
    %v502 = vunpack.c.l.b16 %v141
    %v503 = vunpack.c.l.b16 %v142
    %v504 = vunpack.c.h.b16 %v142
    %v505 = vunpack.c.l.b16 %v143
    %v506 = vunpack.c.l.b16 %v144
    %v507 = vunpack.c.h.b16 %v144
    %v508 = vunpack.c.l.b16 %v145
    %v509 = vunpack.c.l.b16 %v146
    %v510 = vunpack.c.h.b16 %v146
    %v511 = vunpack.c.l.b16 %v147
    %v512 = vpack.c.b16 %v503, %v500
    %v513 = vpack.c.b16 %v504, %v501
    %v514 = vpack.c.b16 %v505, %v502
    %v515 = vpack.c.b16 %v509, %v506
    %v516 = vpack.c.b16 %v510, %v507
    %v517 = vpack.c.b16 %v511, %v508
    %v525 = vsel %vm487, 0, 0
    %527 = vmatprep.subr.bf16.mxu0 0
    %528 = vmatpush1.bf16.msra.mxu0 0
    %529 = vmatprep.subr.bf16.mxu0 0
    %530 = vmatpush1.bf16.msra.mxu0 0
    %531 = vmatprep.subr.bf16.mxu0 0
    %532 = vmatpush1.bf16.msra.mxu0 0
    %533 = vmatprep.subr.bf16.mxu0 0
    %534 = vmatpush1.bf16.msra.mxu0 0
    %535 = vmatprep.subr.bf16.mxu0 0
    %536 = vmatpush1.bf16.msra.mxu0 0
    %537 = vmatprep.subr.bf16.mxu0 0
    %538 = vmatpush1.bf16.msra.mxu0 0
    %539 = vmatprep.subr.bf16.mxu0 %v516
    %540 = vmatpush1.bf16.msra.mxu0 %v515
    %541 = vmatprep.subr.bf16.mxu0 %v513
    %542 = vmatpush1.bf16.msra.mxu0 %v512
    %543 = vmatprep.subr.bf16.mxu0 0
    %544 = vmatpush2.bf16.msra.mxu0 0
    %545 = vmatprep.subr.bf16.mxu0 0
    %546 = vmatpush2.bf16.msra.mxu0 0
    %547 = vmatprep.subr.bf16.mxu0 0
    %548 = vmatpush2.bf16.msra.mxu0 0
    %549 = vmatprep.subr.bf16.mxu0 0
    %550 = vmatpush2.bf16.msra.mxu0 0
    %551 = vmatprep.subr.bf16.mxu0 0
    %552 = vmatpush2.bf16.msra.mxu0 0
    %553 = vmatprep.subr.bf16.mxu0 0
    %554 = vmatpush2.bf16.msra.mxu0 0
    %555 = vmatprep.subr.bf16.mxu0 0
    %556 = vmatpush2.bf16.msra.mxu0 0
    %557 = vmatprep.subr.bf16.mxu0 0
    %558 = vmatpush2.bf16.msra.mxu0 0
    %559 = vmatprep.mubr.bf16.mxu0 0
    %560 = vmatmul.mubr.bf16.gmra.mxu0 %v525
    %v561 = vpop.f32.mrf.mxu0
    %v562 = vadd.f32 0.0, %v561
    %v563 = vpop.f32.mrf.mxu0
    %v564 = vadd.f32 0.0, %v563
    %v565 = vpop.f32.mrf.mxu0
    %v566 = vpop.f32.mrf.mxu0
    %567 = vdwg.mxu0
    %568 = vmatprep.subr.bf16.mxu0 0
    %569 = vmatpush1.bf16.msra.mxu0 0
    %570 = vmatprep.subr.bf16.mxu0 0
    %571 = vmatpush1.bf16.msra.mxu0 0
    %572 = vmatprep.subr.bf16.mxu0 0
    %573 = vmatpush1.bf16.msra.mxu0 0
    %574 = vmatprep.subr.bf16.mxu0 0
    %575 = vmatpush1.bf16.msra.mxu0 0
    %576 = vmatprep.subr.bf16.mxu0 0
    %577 = vmatpush1.bf16.msra.mxu0 0
    %578 = vmatprep.subr.bf16.mxu0 0
    %579 = vmatpush1.bf16.msra.mxu0 0
    %580 = vmatprep.subr.bf16.mxu0 0
    %581 = vmatpush1.bf16.msra.mxu0 %v517
    %582 = vmatprep.subr.bf16.mxu0 0
    %583 = vmatpush1.bf16.msra.mxu0 %v514
    %584 = vmatprep.subr.bf16.mxu0 0
    %585 = vmatpush2.bf16.msra.mxu0 0
    %586 = vmatprep.subr.bf16.mxu0 0
    %587 = vmatpush2.bf16.msra.mxu0 0
    %588 = vmatprep.subr.bf16.mxu0 0
    %589 = vmatpush2.bf16.msra.mxu0 0
    %590 = vmatprep.subr.bf16.mxu0 0
    %591 = vmatpush2.bf16.msra.mxu0 0
    %592 = vmatprep.subr.bf16.mxu0 0
    %593 = vmatpush2.bf16.msra.mxu0 0
    %594 = vmatprep.subr.bf16.mxu0 0
    %595 = vmatpush2.bf16.msra.mxu0 0
    %596 = vmatprep.subr.bf16.mxu0 0
    %597 = vmatpush2.bf16.msra.mxu0 0
    %598 = vmatprep.subr.bf16.mxu0 0
    %599 = vmatpush2.bf16.msra.mxu0 0
    %600 = vmatprep.mubr.bf16.mxu0 0
    %601 = vmatmul.mubr.bf16.gmra.mxu0 %v525
    %v602 = vpop.f32.mrf.mxu0
    %v603 = vadd.f32 0.0, %v602
    %v604 = vpop.f32.mrf.mxu0
    %v605 = vpop.f32.mrf.mxu0
    %v606 = vpop.f32.mrf.mxu0
    %607 = vdwg.mxu0
    %v608 = vadd.f32 %v489, %v562
    %v609 = vxor.u32 %v608, 2147483648
    %v610 = vmul.f32 %v609, 1.442695
    %v611 = vpow.pop %v610
    %v612 = vadd.f32 %v611, 1.0
    %v613 = vrcp.pop %v612
    %v614 = vmul.f32 1.0, %v613
    %v615 = vadd.f32 %v490, %v564
    %v616 = vxor.u32 %v615, 2147483648
    %v617 = vmul.f32 %v616, 1.442695
    %v618 = vpow.pop %v617
    %v619 = vadd.f32 %v618, 1.0
    %v620 = vrcp.pop %v619
    %v621 = vmul.f32 1.0, %v620
    %v622 = vadd.f32 %v603, %v161
    %v623 = vmul.f32 %v614, %v622
    %v624 = vadd.f32 %v491, %v623
    %v625 = vtanh.pop %v624
    %v626 = vsub.f32 1.0, %v621
    %v627 = vmul.f32 %v626, %v625
    %v628 = vmul.f32 %v621, 0.0
    %v629 = vadd.f32 %v627, %v628
    %v630 = vpack.c.bf16 %v629, %v629
    %v639 = vunpack.c.l.b16 %v130
    %v640 = vunpack.c.h.b16 %v130
    %v641 = vunpack.c.l.b16 %v131
    %v642 = vunpack.c.l.b16 %v132
    %v643 = vunpack.c.h.b16 %v132
    %v644 = vunpack.c.l.b16 %v133
    %v645 = vunpack.c.l.b16 %v134
    %v646 = vunpack.c.h.b16 %v134
    %v647 = vunpack.c.l.b16 %v135
    %v648 = vunpack.c.l.b16 %v136
    %v649 = vunpack.c.h.b16 %v136
    %v650 = vunpack.c.l.b16 %v137
    %v651 = vpack.c.b16 %v642, %v639
    %v652 = vpack.c.b16 %v643, %v640
    %v653 = vpack.c.b16 %v644, %v641
    %v654 = vpack.c.b16 %v648, %v645
    %v655 = vpack.c.b16 %v649, %v646
    %v656 = vpack.c.b16 %v650, %v647
    %v664 = vsel %vm487, %v630, 0
    %666 = vmatprep.subr.bf16.mxu0 0
    %667 = vmatpush1.bf16.msra.mxu0 0
    %668 = vmatprep.subr.bf16.mxu0 0
    %669 = vmatpush1.bf16.msra.mxu0 0
    %670 = vmatprep.subr.bf16.mxu0 0
    %671 = vmatpush1.bf16.msra.mxu0 0
    %672 = vmatprep.subr.bf16.mxu0 0
    %673 = vmatpush1.bf16.msra.mxu0 0
    %674 = vmatprep.subr.bf16.mxu0 0
    %675 = vmatpush1.bf16.msra.mxu0 0
    %676 = vmatprep.subr.bf16.mxu0 0
    %677 = vmatpush1.bf16.msra.mxu0 0
    %678 = vmatprep.subr.bf16.mxu0 %v655
    %679 = vmatpush1.bf16.msra.mxu0 %v654
    %680 = vmatprep.subr.bf16.mxu0 %v652
    %681 = vmatpush1.bf16.msra.mxu0 %v651
    %682 = vmatprep.subr.bf16.mxu0 0
    %683 = vmatpush2.bf16.msra.mxu0 0
    %684 = vmatprep.subr.bf16.mxu0 0
    %685 = vmatpush2.bf16.msra.mxu0 0
    %686 = vmatprep.subr.bf16.mxu0 0
    %687 = vmatpush2.bf16.msra.mxu0 0
    %688 = vmatprep.subr.bf16.mxu0 0
    %689 = vmatpush2.bf16.msra.mxu0 0
    %690 = vmatprep.subr.bf16.mxu0 0
    %691 = vmatpush2.bf16.msra.mxu0 0
    %692 = vmatprep.subr.bf16.mxu0 0
    %693 = vmatpush2.bf16.msra.mxu0 0
    %694 = vmatprep.subr.bf16.mxu0 0
    %695 = vmatpush2.bf16.msra.mxu0 0
    %696 = vmatprep.subr.bf16.mxu0 0
    %697 = vmatpush2.bf16.msra.mxu0 0
    %698 = vmatprep.mubr.bf16.mxu0 0
    %699 = vmatmul.mubr.bf16.gmra.mxu0 %v664
    %v700 = vpop.f32.mrf.mxu0
    %v701 = vadd.f32 %v174, %v700
    %v702 = vpop.f32.mrf.mxu0
    %v703 = vadd.f32 %v178, %v702
    %v704 = vpop.f32.mrf.mxu0
    %v705 = vpop.f32.mrf.mxu0
    %706 = vdwg.mxu0
    %707 = vmatprep.subr.bf16.mxu0 0
    %708 = vmatpush1.bf16.msra.mxu0 0
    %709 = vmatprep.subr.bf16.mxu0 0
    %710 = vmatpush1.bf16.msra.mxu0 0
    %711 = vmatprep.subr.bf16.mxu0 0
    %712 = vmatpush1.bf16.msra.mxu0 0
    %713 = vmatprep.subr.bf16.mxu0 0
    %714 = vmatpush1.bf16.msra.mxu0 0
    %715 = vmatprep.subr.bf16.mxu0 0
    %716 = vmatpush1.bf16.msra.mxu0 0
    %717 = vmatprep.subr.bf16.mxu0 0
    %718 = vmatpush1.bf16.msra.mxu0 0
    %719 = vmatprep.subr.bf16.mxu0 0
    %720 = vmatpush1.bf16.msra.mxu0 %v656
    %721 = vmatprep.subr.bf16.mxu0 0
    %722 = vmatpush1.bf16.msra.mxu0 %v653
    %723 = vmatprep.subr.bf16.mxu0 0
    %724 = vmatpush2.bf16.msra.mxu0 0
    %725 = vmatprep.subr.bf16.mxu0 0
    %726 = vmatpush2.bf16.msra.mxu0 0
    %727 = vmatprep.subr.bf16.mxu0 0
    %728 = vmatpush2.bf16.msra.mxu0 0
    %729 = vmatprep.subr.bf16.mxu0 0
    %730 = vmatpush2.bf16.msra.mxu0 0
    %731 = vmatprep.subr.bf16.mxu0 0
    %732 = vmatpush2.bf16.msra.mxu0 0
    %733 = vmatprep.subr.bf16.mxu0 0
    %734 = vmatpush2.bf16.msra.mxu0 0
    %735 = vmatprep.subr.bf16.mxu0 0
    %736 = vmatpush2.bf16.msra.mxu0 0
    %737 = vmatprep.subr.bf16.mxu0 0
    %738 = vmatpush2.bf16.msra.mxu0 0
    %739 = vmatprep.mubr.bf16.mxu0 0
    %740 = vmatmul.mubr.bf16.gmra.mxu0 %v664
    %v741 = vpop.f32.mrf.mxu0
    %v742 = vadd.f32 %v182, %v741
    %v743 = vpop.f32.mrf.mxu0
    %v744 = vpop.f32.mrf.mxu0
    %v745 = vpop.f32.mrf.mxu0
    %746 = vdwg.mxu0
    %v755 = vunpack.c.l.b16 %v148
    %v756 = vunpack.c.h.b16 %v148
    %v757 = vunpack.c.l.b16 %v149
    %v758 = vunpack.c.l.b16 %v150
    %v759 = vunpack.c.h.b16 %v150
    %v760 = vunpack.c.l.b16 %v151
    %v761 = vunpack.c.l.b16 %v152
    %v762 = vunpack.c.h.b16 %v152
    %v763 = vunpack.c.l.b16 %v153
    %v764 = vunpack.c.l.b16 %v154
    %v765 = vunpack.c.h.b16 %v154
    %v766 = vunpack.c.l.b16 %v155
    %v767 = vpack.c.b16 %v758, %v755
    %v768 = vpack.c.b16 %v759, %v756
    %v769 = vpack.c.b16 %v760, %v757
    %v770 = vpack.c.b16 %v764, %v761
    %v771 = vpack.c.b16 %v765, %v762
    %v772 = vpack.c.b16 %v766, %v763
    %779 = vmatprep.subr.bf16.mxu0 0
    %780 = vmatpush1.bf16.msra.mxu0 0
    %781 = vmatprep.subr.bf16.mxu0 0
    %782 = vmatpush1.bf16.msra.mxu0 0
    %783 = vmatprep.subr.bf16.mxu0 0
    %784 = vmatpush1.bf16.msra.mxu0 0
    %785 = vmatprep.subr.bf16.mxu0 0
    %786 = vmatpush1.bf16.msra.mxu0 0
    %787 = vmatprep.subr.bf16.mxu0 0
    %788 = vmatpush1.bf16.msra.mxu0 0
    %789 = vmatprep.subr.bf16.mxu0 0
    %790 = vmatpush1.bf16.msra.mxu0 0
    %791 = vmatprep.subr.bf16.mxu0 %v771
    %792 = vmatpush1.bf16.msra.mxu0 %v770
    %793 = vmatprep.subr.bf16.mxu0 %v768
    %794 = vmatpush1.bf16.msra.mxu0 %v767
    %795 = vmatprep.subr.bf16.mxu0 0
    %796 = vmatpush2.bf16.msra.mxu0 0
    %797 = vmatprep.subr.bf16.mxu0 0
    %798 = vmatpush2.bf16.msra.mxu0 0
    %799 = vmatprep.subr.bf16.mxu0 0
    %800 = vmatpush2.bf16.msra.mxu0 0
    %801 = vmatprep.subr.bf16.mxu0 0
    %802 = vmatpush2.bf16.msra.mxu0 0
    %803 = vmatprep.subr.bf16.mxu0 0
    %804 = vmatpush2.bf16.msra.mxu0 0
    %805 = vmatprep.subr.bf16.mxu0 0
    %806 = vmatpush2.bf16.msra.mxu0 0
    %807 = vmatprep.subr.bf16.mxu0 0
    %808 = vmatpush2.bf16.msra.mxu0 0
    %809 = vmatprep.subr.bf16.mxu0 0
    %810 = vmatpush2.bf16.msra.mxu0 0
    %811 = vmatprep.mubr.bf16.mxu0 0
    %812 = vmatmul.mubr.bf16.gmra.mxu0 %v525
    %v813 = vpop.f32.mrf.mxu0
    %v814 = vadd.f32 0.0, %v813
    %v815 = vpop.f32.mrf.mxu0
    %v816 = vadd.f32 0.0, %v815
    %v817 = vpop.f32.mrf.mxu0
    %v818 = vpop.f32.mrf.mxu0
    %819 = vdwg.mxu0
    %820 = vmatprep.subr.bf16.mxu0 0
    %821 = vmatpush1.bf16.msra.mxu0 0
    %822 = vmatprep.subr.bf16.mxu0 0
    %823 = vmatpush1.bf16.msra.mxu0 0
    %824 = vmatprep.subr.bf16.mxu0 0
    %825 = vmatpush1.bf16.msra.mxu0 0
    %826 = vmatprep.subr.bf16.mxu0 0
    %827 = vmatpush1.bf16.msra.mxu0 0
    %828 = vmatprep.subr.bf16.mxu0 0
    %829 = vmatpush1.bf16.msra.mxu0 0
    %830 = vmatprep.subr.bf16.mxu0 0
    %831 = vmatpush1.bf16.msra.mxu0 0
    %832 = vmatprep.subr.bf16.mxu0 0
    %833 = vmatpush1.bf16.msra.mxu0 %v772
    %834 = vmatprep.subr.bf16.mxu0 0
    %835 = vmatpush1.bf16.msra.mxu0 %v769
    %836 = vmatprep.subr.bf16.mxu0 0
    %837 = vmatpush2.bf16.msra.mxu0 0
    %838 = vmatprep.subr.bf16.mxu0 0
    %839 = vmatpush2.bf16.msra.mxu0 0
    %840 = vmatprep.subr.bf16.mxu0 0
    %841 = vmatpush2.bf16.msra.mxu0 0
    %842 = vmatprep.subr.bf16.mxu0 0
    %843 = vmatpush2.bf16.msra.mxu0 0
    %844 = vmatprep.subr.bf16.mxu0 0
    %845 = vmatpush2.bf16.msra.mxu0 0
    %846 = vmatprep.subr.bf16.mxu0 0
    %847 = vmatpush2.bf16.msra.mxu0 0
    %848 = vmatprep.subr.bf16.mxu0 0
    %849 = vmatpush2.bf16.msra.mxu0 0
    %850 = vmatprep.subr.bf16.mxu0 0
    %851 = vmatpush2.bf16.msra.mxu0 0
    %852 = vmatprep.mubr.bf16.mxu0 0
    %853 = vmatmul.mubr.bf16.gmra.mxu0 %v525
    %v854 = vpop.f32.mrf.mxu0
    %v855 = vadd.f32 0.0, %v854
    %v856 = vpop.f32.mrf.mxu0
    %v857 = vpop.f32.mrf.mxu0
    %v858 = vpop.f32.mrf.mxu0
    %859 = vdwg.mxu0
    %v860 = vadd.f32 %v701, %v814
    %v861 = vxor.u32 %v860, 2147483648
    %v862 = vmul.f32 %v861, 1.442695
    %v863 = vpow.pop %v862
    %v864 = vadd.f32 %v863, 1.0
    %v865 = vrcp.pop %v864
    %v866 = vmul.f32 1.0, %v865
    %v867 = vadd.f32 %v703, %v816
    %v868 = vxor.u32 %v867, 2147483648
    %v869 = vmul.f32 %v868, 1.442695
    %v870 = vpow.pop %v869
    %v871 = vadd.f32 %v870, 1.0
    %v872 = vrcp.pop %v871
    %v873 = vmul.f32 1.0, %v872
    %v874 = vadd.f32 %v855, %v168
    %v875 = vmul.f32 %v866, %v874
    %v876 = vadd.f32 %v742, %v875
    %v877 = vtanh.pop %v876
    %v878 = vsub.f32 1.0, %v873
    %v879 = vmul.f32 %v878, %v877
    %v880 = vmul.f32 %v873, 0.0
    %v881 = vadd.f32 %v879, %v880
    %v882 = vpack.c.bf16 %v881, %v881
    %883 = vst.msk [vmem:[#allocation3 + $0x8] sm:$0xff] %vm487, %v881
    %v884 = vld [vmem:[#allocation2 + $0x18] sm:$0xff]
    %v885 = vld [vmem:[#allocation2 + $0x20] sm:$0xff]
    %v886 = vld [vmem:[#allocation2 + $0x28] sm:$0xff]
    %887 = vmatprep.subr.bf16.mxu0 0
    %888 = vmatpush1.bf16.msra.mxu0 0
    %889 = vmatprep.subr.bf16.mxu0 0
    %890 = vmatpush1.bf16.msra.mxu0 0
    %891 = vmatprep.subr.bf16.mxu0 0
    %892 = vmatpush1.bf16.msra.mxu0 0
    %893 = vmatprep.subr.bf16.mxu0 0
    %894 = vmatpush1.bf16.msra.mxu0 0
    %895 = vmatprep.subr.bf16.mxu0 0
    %896 = vmatpush1.bf16.msra.mxu0 0
    %897 = vmatprep.subr.bf16.mxu0 0
    %898 = vmatpush1.bf16.msra.mxu0 0
    %899 = vmatprep.subr.bf16.mxu0 %v516
    %900 = vmatpush1.bf16.msra.mxu0 %v515
    %901 = vmatprep.subr.bf16.mxu0 %v513
    %902 = vmatpush1.bf16.msra.mxu0 %v512
    %903 = vmatprep.subr.bf16.mxu0 0
    %904 = vmatpush2.bf16.msra.mxu0 0
    %905 = vmatprep.subr.bf16.mxu0 0
    %906 = vmatpush2.bf16.msra.mxu0 0
    %907 = vmatprep.subr.bf16.mxu0 0
    %908 = vmatpush2.bf16.msra.mxu0 0
    %909 = vmatprep.subr.bf16.mxu0 0
    %910 = vmatpush2.bf16.msra.mxu0 0
    %911 = vmatprep.subr.bf16.mxu0 0
    %912 = vmatpush2.bf16.msra.mxu0 0
    %913 = vmatprep.subr.bf16.mxu0 0
    %914 = vmatpush2.bf16.msra.mxu0 0
    %915 = vmatprep.subr.bf16.mxu0 0
    %916 = vmatpush2.bf16.msra.mxu0 0
    %917 = vmatprep.subr.bf16.mxu0 0
    %918 = vmatpush2.bf16.msra.mxu0 0
    %919 = vmatprep.mubr.bf16.mxu0 0
    %920 = vmatmul.mubr.bf16.gmra.mxu0 %v664
    %v921 = vpop.f32.mrf.mxu0
    %v922 = vadd.f32 0.0, %v921
    %v923 = vpop.f32.mrf.mxu0
    %v924 = vadd.f32 0.0, %v923
    %v925 = vpop.f32.mrf.mxu0
    %v926 = vpop.f32.mrf.mxu0
    %927 = vdwg.mxu0
    %928 = vmatprep.subr.bf16.mxu0 0
    %929 = vmatpush1.bf16.msra.mxu0 0
    %930 = vmatprep.subr.bf16.mxu0 0
    %931 = vmatpush1.bf16.msra.mxu0 0
    %932 = vmatprep.subr.bf16.mxu0 0
    %933 = vmatpush1.bf16.msra.mxu0 0
    %934 = vmatprep.subr.bf16.mxu0 0
    %935 = vmatpush1.bf16.msra.mxu0 0
    %936 = vmatprep.subr.bf16.mxu0 0
    %937 = vmatpush1.bf16.msra.mxu0 0
    %938 = vmatprep.subr.bf16.mxu0 0
    %939 = vmatpush1.bf16.msra.mxu0 0
    %940 = vmatprep.subr.bf16.mxu0 0
    %941 = vmatpush1.bf16.msra.mxu0 %v517
    %942 = vmatprep.subr.bf16.mxu0 0
    %943 = vmatpush1.bf16.msra.mxu0 %v514
    %944 = vmatprep.subr.bf16.mxu0 0
    %945 = vmatpush2.bf16.msra.mxu0 0
    %946 = vmatprep.subr.bf16.mxu0 0
    %947 = vmatpush2.bf16.msra.mxu0 0
    %948 = vmatprep.subr.bf16.mxu0 0
    %949 = vmatpush2.bf16.msra.mxu0 0
    %950 = vmatprep.subr.bf16.mxu0 0
    %951 = vmatpush2.bf16.msra.mxu0 0
    %952 = vmatprep.subr.bf16.mxu0 0
    %953 = vmatpush2.bf16.msra.mxu0 0
    %954 = vmatprep.subr.bf16.mxu0 0
    %955 = vmatpush2.bf16.msra.mxu0 0
    %956 = vmatprep.subr.bf16.mxu0 0
    %957 = vmatpush2.bf16.msra.mxu0 0
    %958 = vmatprep.subr.bf16.mxu0 0
    %959 = vmatpush2.bf16.msra.mxu0 0
    %960 = vmatprep.mubr.bf16.mxu0 0
    %961 = vmatmul.mubr.bf16.gmra.mxu0 %v664
    %v962 = vpop.f32.mrf.mxu0
    %v963 = vadd.f32 0.0, %v962
    %v964 = vpop.f32.mrf.mxu0
    %v965 = vpop.f32.mrf.mxu0
    %v966 = vpop.f32.mrf.mxu0
    %967 = vdwg.mxu0
    %v968 = vadd.f32 %v884, %v922
    %v969 = vxor.u32 %v968, 2147483648
    %v970 = vmul.f32 %v969, 1.442695
    %v971 = vpow.pop %v970
    %v972 = vadd.f32 %v971, 1.0
    %v973 = vrcp.pop %v972
    %v974 = vmul.f32 1.0, %v973
    %v975 = vadd.f32 %v885, %v924
    %v976 = vxor.u32 %v975, 2147483648
    %v977 = vmul.f32 %v976, 1.442695
    %v978 = vpow.pop %v977
    %v979 = vadd.f32 %v978, 1.0
    %v980 = vrcp.pop %v979
    %v981 = vmul.f32 1.0, %v980
    %v982 = vadd.f32 %v963, %v161
    %v983 = vmul.f32 %v974, %v982
    %v984 = vadd.f32 %v886, %v983
    %v985 = vtanh.pop %v984
    %v986 = vsub.f32 1.0, %v981
    %v987 = vmul.f32 %v986, %v985
    %v988 = vmul.f32 %v981, %v629
    %v989 = vadd.f32 %v987, %v988
    %v990 = vpack.c.bf16 %v989, %v989
    %v992 = vsel %vm487, %v990, 0
    %994 = vmatprep.subr.bf16.mxu0 0
    %995 = vmatpush1.bf16.msra.mxu0 0
    %996 = vmatprep.subr.bf16.mxu0 0
    %997 = vmatpush1.bf16.msra.mxu0 0
    %998 = vmatprep.subr.bf16.mxu0 0
    %999 = vmatpush1.bf16.msra.mxu0 0
    %1000 = vmatprep.subr.bf16.mxu0 0
    %1001 = vmatpush1.bf16.msra.mxu0 0
    %1002 = vmatprep.subr.bf16.mxu0 0
    %1003 = vmatpush1.bf16.msra.mxu0 0
    %1004 = vmatprep.subr.bf16.mxu0 0
    %1005 = vmatpush1.bf16.msra.mxu0 0
    %1006 = vmatprep.subr.bf16.mxu0 %v655
    %1007 = vmatpush1.bf16.msra.mxu0 %v654
    %1008 = vmatprep.subr.bf16.mxu0 %v652
    %1009 = vmatpush1.bf16.msra.mxu0 %v651
    %1010 = vmatprep.subr.bf16.mxu0 0
    %1011 = vmatpush2.bf16.msra.mxu0 0
    %1012 = vmatprep.subr.bf16.mxu0 0
    %1013 = vmatpush2.bf16.msra.mxu0 0
    %1014 = vmatprep.subr.bf16.mxu0 0
    %1015 = vmatpush2.bf16.msra.mxu0 0
    %1016 = vmatprep.subr.bf16.mxu0 0
    %1017 = vmatpush2.bf16.msra.mxu0 0
    %1018 = vmatprep.subr.bf16.mxu0 0
    %1019 = vmatpush2.bf16.msra.mxu0 0
    %1020 = vmatprep.subr.bf16.mxu0 0
    %1021 = vmatpush2.bf16.msra.mxu0 0
    %1022 = vmatprep.subr.bf16.mxu0 0
    %1023 = vmatpush2.bf16.msra.mxu0 0
    %1024 = vmatprep.subr.bf16.mxu0 0
    %1025 = vmatpush2.bf16.msra.mxu0 0
    %1026 = vmatprep.mubr.bf16.mxu0 0
    %1027 = vmatmul.mubr.bf16.gmra.mxu0 %v992
    %v1028 = vpop.f32.mrf.mxu0
    %v1029 = vadd.f32 %v174, %v1028
    %v1030 = vpop.f32.mrf.mxu0
    %v1031 = vadd.f32 %v178, %v1030
    %v1032 = vpop.f32.mrf.mxu0
    %v1033 = vpop.f32.mrf.mxu0
    %1034 = vdwg.mxu0
    %1035 = vmatprep.subr.bf16.mxu0 0
    %1036 = vmatpush1.bf16.msra.mxu0 0
    %1037 = vmatprep.subr.bf16.mxu0 0
    %1038 = vmatpush1.bf16.msra.mxu0 0
    %1039 = vmatprep.subr.bf16.mxu0 0
    %1040 = vmatpush1.bf16.msra.mxu0 0
    %1041 = vmatprep.subr.bf16.mxu0 0
    %1042 = vmatpush1.bf16.msra.mxu0 0
    %1043 = vmatprep.subr.bf16.mxu0 0
    %1044 = vmatpush1.bf16.msra.mxu0 0
    %1045 = vmatprep.subr.bf16.mxu0 0
    %1046 = vmatpush1.bf16.msra.mxu0 0
    %1047 = vmatprep.subr.bf16.mxu0 0
    %1048 = vmatpush1.bf16.msra.mxu0 %v656
    %1049 = vmatprep.subr.bf16.mxu0 0
    %1050 = vmatpush1.bf16.msra.mxu0 %v653
    %1051 = vmatprep.subr.bf16.mxu0 0
    %1052 = vmatpush2.bf16.msra.mxu0 0
    %1053 = vmatprep.subr.bf16.mxu0 0
    %1054 = vmatpush2.bf16.msra.mxu0 0
    %1055 = vmatprep.subr.bf16.mxu0 0
    %1056 = vmatpush2.bf16.msra.mxu0 0
    %1057 = vmatprep.subr.bf16.mxu0 0
    %1058 = vmatpush2.bf16.msra.mxu0 0
    %1059 = vmatprep.subr.bf16.mxu0 0
    %1060 = vmatpush2.bf16.msra.mxu0 0
    %1061 = vmatprep.subr.bf16.mxu0 0
    %1062 = vmatpush2.bf16.msra.mxu0 0
    %1063 = vmatprep.subr.bf16.mxu0 0
    %1064 = vmatpush2.bf16.msra.mxu0 0
    %1065 = vmatprep.subr.bf16.mxu0 0
    %1066 = vmatpush2.bf16.msra.mxu0 0
    %1067 = vmatprep.mubr.bf16.mxu0 0
    %1068 = vmatmul.mubr.bf16.gmra.mxu0 %v992
    %v1069 = vpop.f32.mrf.mxu0
    %v1070 = vadd.f32 %v182, %v1069
    %v1071 = vpop.f32.mrf.mxu0
    %v1072 = vpop.f32.mrf.mxu0
    %v1073 = vpop.f32.mrf.mxu0
    %1074 = vdwg.mxu0
    %v1076 = vsel %vm487, %v882, 0
    %1078 = vmatprep.subr.bf16.mxu0 0
    %1079 = vmatpush1.bf16.msra.mxu0 0
    %1080 = vmatprep.subr.bf16.mxu0 0
    %1081 = vmatpush1.bf16.msra.mxu0 0
    %1082 = vmatprep.subr.bf16.mxu0 0
    %1083 = vmatpush1.bf16.msra.mxu0 0
    %1084 = vmatprep.subr.bf16.mxu0 0
    %1085 = vmatpush1.bf16.msra.mxu0 0
    %1086 = vmatprep.subr.bf16.mxu0 0
    %1087 = vmatpush1.bf16.msra.mxu0 0
    %1088 = vmatprep.subr.bf16.mxu0 0
    %1089 = vmatpush1.bf16.msra.mxu0 0
    %1090 = vmatprep.subr.bf16.mxu0 %v771
    %1091 = vmatpush1.bf16.msra.mxu0 %v770
    %1092 = vmatprep.subr.bf16.mxu0 %v768
    %1093 = vmatpush1.bf16.msra.mxu0 %v767
    %1094 = vmatprep.subr.bf16.mxu0 0
    %1095 = vmatpush2.bf16.msra.mxu0 0
    %1096 = vmatprep.subr.bf16.mxu0 0
    %1097 = vmatpush2.bf16.msra.mxu0 0
    %1098 = vmatprep.subr.bf16.mxu0 0
    %1099 = vmatpush2.bf16.msra.mxu0 0
    %1100 = vmatprep.subr.bf16.mxu0 0
    %1101 = vmatpush2.bf16.msra.mxu0 0
    %1102 = vmatprep.subr.bf16.mxu0 0
    %1103 = vmatpush2.bf16.msra.mxu0 0
    %1104 = vmatprep.subr.bf16.mxu0 0
    %1105 = vmatpush2.bf16.msra.mxu0 0
    %1106 = vmatprep.subr.bf16.mxu0 0
    %1107 = vmatpush2.bf16.msra.mxu0 0
    %1108 = vmatprep.subr.bf16.mxu0 0
    %1109 = vmatpush2.bf16.msra.mxu0 0
    %1110 = vmatprep.mubr.bf16.mxu0 0
    %1111 = vmatmul.mubr.bf16.gmra.mxu0 %v1076
    %v1112 = vpop.f32.mrf.mxu0
    %v1113 = vadd.f32 0.0, %v1112
    %v1114 = vpop.f32.mrf.mxu0
    %v1115 = vadd.f32 0.0, %v1114
    %v1116 = vpop.f32.mrf.mxu0
    %v1117 = vpop.f32.mrf.mxu0
    %1118 = vdwg.mxu0
    %1119 = vmatprep.subr.bf16.mxu0 0
    %1120 = vmatpush1.bf16.msra.mxu0 0
    %1121 = vmatprep.subr.bf16.mxu0 0
    %1122 = vmatpush1.bf16.msra.mxu0 0
    %1123 = vmatprep.subr.bf16.mxu0 0
    %1124 = vmatpush1.bf16.msra.mxu0 0
    %1125 = vmatprep.subr.bf16.mxu0 0
    %1126 = vmatpush1.bf16.msra.mxu0 0
    %1127 = vmatprep.subr.bf16.mxu0 0
    %1128 = vmatpush1.bf16.msra.mxu0 0
    %1129 = vmatprep.subr.bf16.mxu0 0
    %1130 = vmatpush1.bf16.msra.mxu0 0
    %1131 = vmatprep.subr.bf16.mxu0 0
    %1132 = vmatpush1.bf16.msra.mxu0 %v772
    %1133 = vmatprep.subr.bf16.mxu0 0
    %1134 = vmatpush1.bf16.msra.mxu0 %v769
    %1135 = vmatprep.subr.bf16.mxu0 0
    %1136 = vmatpush2.bf16.msra.mxu0 0
    %1137 = vmatprep.subr.bf16.mxu0 0
    %1138 = vmatpush2.bf16.msra.mxu0 0
    %1139 = vmatprep.subr.bf16.mxu0 0
    %1140 = vmatpush2.bf16.msra.mxu0 0
    %1141 = vmatprep.subr.bf16.mxu0 0
    %1142 = vmatpush2.bf16.msra.mxu0 0
    %1143 = vmatprep.subr.bf16.mxu0 0
    %1144 = vmatpush2.bf16.msra.mxu0 0
    %1145 = vmatprep.subr.bf16.mxu0 0
    %1146 = vmatpush2.bf16.msra.mxu0 0
    %1147 = vmatprep.subr.bf16.mxu0 0
    %1148 = vmatpush2.bf16.msra.mxu0 0
    %1149 = vmatprep.subr.bf16.mxu0 0
    %1150 = vmatpush2.bf16.msra.mxu0 0
    %1151 = vmatprep.mubr.bf16.mxu0 0
    %1152 = vmatmul.mubr.bf16.gmra.mxu0 %v1076
    %v1153 = vpop.f32.mrf.mxu0
    %v1154 = vadd.f32 0.0, %v1153
    %v1155 = vpop.f32.mrf.mxu0
    %v1156 = vpop.f32.mrf.mxu0
    %v1157 = vpop.f32.mrf.mxu0
    %1158 = vdwg.mxu0
    %v1159 = vadd.f32 %v1029, %v1113
    %v1160 = vxor.u32 %v1159, 2147483648
    %v1161 = vmul.f32 %v1160, 1.442695
    %v1162 = vpow.pop %v1161
    %v1163 = vadd.f32 %v1162, 1.0
    %v1164 = vrcp.pop %v1163
    %v1165 = vmul.f32 1.0, %v1164
    %v1166 = vadd.f32 %v1031, %v1115
    %v1167 = vxor.u32 %v1166, 2147483648
    %v1168 = vmul.f32 %v1167, 1.442695
    %v1169 = vpow.pop %v1168
    %v1170 = vadd.f32 %v1169, 1.0
    %v1171 = vrcp.pop %v1170
    %v1172 = vmul.f32 1.0, %v1171
    %v1173 = vadd.f32 %v1154, %v168
    %v1174 = vmul.f32 %v1165, %v1173
    %v1175 = vadd.f32 %v1070, %v1174
    %v1176 = vtanh.pop %v1175
    %v1177 = vsub.f32 1.0, %v1172
    %v1178 = vmul.f32 %v1177, %v1176
    %v1179 = vmul.f32 %v1172, %v881
    %v1180 = vadd.f32 %v1178, %v1179
    %v1181 = vpack.c.bf16 %v1180, %v1180
    %1182 = vst.msk [vmem:[#allocation3 + $0x10] sm:$0xff] %vm487, %v1180
    %v1183 = vld [vmem:[#allocation2 + $0x30] sm:$0xff]
    %v1184 = vld [vmem:[#allocation2 + $0x38] sm:$0xff]
    %v1185 = vld [vmem:[#allocation2 + $0x40] sm:$0xff]
    %1186 = vmatprep.subr.bf16.mxu0 0
    %1187 = vmatpush1.bf16.msra.mxu0 0
    %1188 = vmatprep.subr.bf16.mxu0 0
    %1189 = vmatpush1.bf16.msra.mxu0 0
    %1190 = vmatprep.subr.bf16.mxu0 0
    %1191 = vmatpush1.bf16.msra.mxu0 0
    %1192 = vmatprep.subr.bf16.mxu0 0
    %1193 = vmatpush1.bf16.msra.mxu0 0
    %1194 = vmatprep.subr.bf16.mxu0 0
    %1195 = vmatpush1.bf16.msra.mxu0 0
    %1196 = vmatprep.subr.bf16.mxu0 0
    %1197 = vmatpush1.bf16.msra.mxu0 0
    %1198 = vmatprep.subr.bf16.mxu0 %v516
    %1199 = vmatpush1.bf16.msra.mxu0 %v515
    %1200 = vmatprep.subr.bf16.mxu0 %v513
    %1201 = vmatpush1.bf16.msra.mxu0 %v512
    %1202 = vmatprep.subr.bf16.mxu0 0
    %1203 = vmatpush2.bf16.msra.mxu0 0
    %1204 = vmatprep.subr.bf16.mxu0 0
    %1205 = vmatpush2.bf16.msra.mxu0 0
    %1206 = vmatprep.subr.bf16.mxu0 0
    %1207 = vmatpush2.bf16.msra.mxu0 0
    %1208 = vmatprep.subr.bf16.mxu0 0
    %1209 = vmatpush2.bf16.msra.mxu0 0
    %1210 = vmatprep.subr.bf16.mxu0 0
    %1211 = vmatpush2.bf16.msra.mxu0 0
    %1212 = vmatprep.subr.bf16.mxu0 0
    %1213 = vmatpush2.bf16.msra.mxu0 0
    %1214 = vmatprep.subr.bf16.mxu0 0
    %1215 = vmatpush2.bf16.msra.mxu0 0
    %1216 = vmatprep.subr.bf16.mxu0 0
    %1217 = vmatpush2.bf16.msra.mxu0 0
    %1218 = vmatprep.mubr.bf16.mxu0 0
    %1219 = vmatmul.mubr.bf16.gmra.mxu0 %v992
    %v1220 = vpop.f32.mrf.mxu0
    %v1221 = vadd.f32 0.0, %v1220
    %v1222 = vpop.f32.mrf.mxu0
    %v1223 = vadd.f32 0.0, %v1222
    %v1224 = vpop.f32.mrf.mxu0
    %v1225 = vpop.f32.mrf.mxu0
    %1226 = vdwg.mxu0
    %1227 = vmatprep.subr.bf16.mxu0 0
    %1228 = vmatpush1.bf16.msra.mxu0 0
    %1229 = vmatprep.subr.bf16.mxu0 0
    %1230 = vmatpush1.bf16.msra.mxu0 0
    %1231 = vmatprep.subr.bf16.mxu0 0
    %1232 = vmatpush1.bf16.msra.mxu0 0
    %1233 = vmatprep.subr.bf16.mxu0 0
    %1234 = vmatpush1.bf16.msra.mxu0 0
    %1235 = vmatprep.subr.bf16.mxu0 0
    %1236 = vmatpush1.bf16.msra.mxu0 0
    %1237 = vmatprep.subr.bf16.mxu0 0
    %1238 = vmatpush1.bf16.msra.mxu0 0
    %1239 = vmatprep.subr.bf16.mxu0 0
    %1240 = vmatpush1.bf16.msra.mxu0 %v517
    %1241 = vmatprep.subr.bf16.mxu0 0
    %1242 = vmatpush1.bf16.msra.mxu0 %v514
    %1243 = vmatprep.subr.bf16.mxu0 0
    %1244 = vmatpush2.bf16.msra.mxu0 0
    %1245 = vmatprep.subr.bf16.mxu0 0
    %1246 = vmatpush2.bf16.msra.mxu0 0
    %1247 = vmatprep.subr.bf16.mxu0 0
    %1248 = vmatpush2.bf16.msra.mxu0 0
    %1249 = vmatprep.subr.bf16.mxu0 0
    %1250 = vmatpush2.bf16.msra.mxu0 0
    %1251 = vmatprep.subr.bf16.mxu0 0
    %1252 = vmatpush2.bf16.msra.mxu0 0
    %1253 = vmatprep.subr.bf16.mxu0 0
    %1254 = vmatpush2.bf16.msra.mxu0 0
    %1255 = vmatprep.subr.bf16.mxu0 0
    %1256 = vmatpush2.bf16.msra.mxu0 0
    %1257 = vmatprep.subr.bf16.mxu0 0
    %1258 = vmatpush2.bf16.msra.mxu0 0
    %1259 = vmatprep.mubr.bf16.mxu0 0
    %1260 = vmatmul.mubr.bf16.gmra.mxu0 %v992
    %v1261 = vpop.f32.mrf.mxu0
    %v1262 = vadd.f32 0.0, %v1261
    %v1263 = vpop.f32.mrf.mxu0
    %v1264 = vpop.f32.mrf.mxu0
    %v1265 = vpop.f32.mrf.mxu0
    %1266 = vdwg.mxu0
    %v1267 = vadd.f32 %v1183, %v1221
    %v1268 = vxor.u32 %v1267, 2147483648
    %v1269 = vmul.f32 %v1268, 1.442695
    %v1270 = vpow.pop %v1269
    %v1271 = vadd.f32 %v1270, 1.0
    %v1272 = vrcp.pop %v1271
    %v1273 = vmul.f32 1.0, %v1272
    %v1274 = vadd.f32 %v1184, %v1223
    %v1275 = vxor.u32 %v1274, 2147483648
    %v1276 = vmul.f32 %v1275, 1.442695
    %v1277 = vpow.pop %v1276
    %v1278 = vadd.f32 %v1277, 1.0
    %v1279 = vrcp.pop %v1278
    %v1280 = vmul.f32 1.0, %v1279
    %v1281 = vadd.f32 %v1262, %v161
    %v1282 = vmul.f32 %v1273, %v1281
    %v1283 = vadd.f32 %v1185, %v1282
    %v1284 = vtanh.pop %v1283
    %v1285 = vsub.f32 1.0, %v1280
    %v1286 = vmul.f32 %v1285, %v1284
    %v1287 = vmul.f32 %v1280, %v989
    %v1288 = vadd.f32 %v1286, %v1287
    %v1289 = vpack.c.bf16 %v1288, %v1288
    %v1291 = vsel %vm487, %v1289, 0
    %1293 = vmatprep.subr.bf16.mxu0 0
    %1294 = vmatpush1.bf16.msra.mxu0 0
    %1295 = vmatprep.subr.bf16.mxu0 0
    %1296 = vmatpush1.bf16.msra.mxu0 0
    %1297 = vmatprep.subr.bf16.mxu0 0
    %1298 = vmatpush1.bf16.msra.mxu0 0
    %1299 = vmatprep.subr.bf16.mxu0 0
    %1300 = vmatpush1.bf16.msra.mxu0 0
    %1301 = vmatprep.subr.bf16.mxu0 0
    %1302 = vmatpush1.bf16.msra.mxu0 0
    %1303 = vmatprep.subr.bf16.mxu0 0
    %1304 = vmatpush1.bf16.msra.mxu0 0
    %1305 = vmatprep.subr.bf16.mxu0 %v655
    %1306 = vmatpush1.bf16.msra.mxu0 %v654
    %1307 = vmatprep.subr.bf16.mxu0 %v652
    %1308 = vmatpush1.bf16.msra.mxu0 %v651
    %1309 = vmatprep.subr.bf16.mxu0 0
    %1310 = vmatpush2.bf16.msra.mxu0 0
    %1311 = vmatprep.subr.bf16.mxu0 0
    %1312 = vmatpush2.bf16.msra.mxu0 0
    %1313 = vmatprep.subr.bf16.mxu0 0
    %1314 = vmatpush2.bf16.msra.mxu0 0
    %1315 = vmatprep.subr.bf16.mxu0 0
    %1316 = vmatpush2.bf16.msra.mxu0 0
    %1317 = vmatprep.subr.bf16.mxu0 0
    %1318 = vmatpush2.bf16.msra.mxu0 0
    %1319 = vmatprep.subr.bf16.mxu0 0
    %1320 = vmatpush2.bf16.msra.mxu0 0
    %1321 = vmatprep.subr.bf16.mxu0 0
    %1322 = vmatpush2.bf16.msra.mxu0 0
    %1323 = vmatprep.subr.bf16.mxu0 0
    %1324 = vmatpush2.bf16.msra.mxu0 0
    %1325 = vmatprep.mubr.bf16.mxu0 0
    %1326 = vmatmul.mubr.bf16.gmra.mxu0 %v1291
    %v1327 = vpop.f32.mrf.mxu0
    %v1328 = vadd.f32 %v174, %v1327
    %v1329 = vpop.f32.mrf.mxu0
    %v1330 = vadd.f32 %v178, %v1329
    %v1331 = vpop.f32.mrf.mxu0
    %v1332 = vpop.f32.mrf.mxu0
    %1333 = vdwg.mxu0
    %1334 = vmatprep.subr.bf16.mxu0 0
    %1335 = vmatpush1.bf16.msra.mxu0 0
    %1336 = vmatprep.subr.bf16.mxu0 0
    %1337 = vmatpush1.bf16.msra.mxu0 0
    %1338 = vmatprep.subr.bf16.mxu0 0
    %1339 = vmatpush1.bf16.msra.mxu0 0
    %1340 = vmatprep.subr.bf16.mxu0 0
    %1341 = vmatpush1.bf16.msra.mxu0 0
    %1342 = vmatprep.subr.bf16.mxu0 0
    %1343 = vmatpush1.bf16.msra.mxu0 0
    %1344 = vmatprep.subr.bf16.mxu0 0
    %1345 = vmatpush1.bf16.msra.mxu0 0
    %1346 = vmatprep.subr.bf16.mxu0 0
    %1347 = vmatpush1.bf16.msra.mxu0 %v656
    %1348 = vmatprep.subr.bf16.mxu0 0
    %1349 = vmatpush1.bf16.msra.mxu0 %v653
    %1350 = vmatprep.subr.bf16.mxu0 0
    %1351 = vmatpush2.bf16.msra.mxu0 0
    %1352 = vmatprep.subr.bf16.mxu0 0
    %1353 = vmatpush2.bf16.msra.mxu0 0
    %1354 = vmatprep.subr.bf16.mxu0 0
    %1355 = vmatpush2.bf16.msra.mxu0 0
    %1356 = vmatprep.subr.bf16.mxu0 0
    %1357 = vmatpush2.bf16.msra.mxu0 0
    %1358 = vmatprep.subr.bf16.mxu0 0
    %1359 = vmatpush2.bf16.msra.mxu0 0
    %1360 = vmatprep.subr.bf16.mxu0 0
    %1361 = vmatpush2.bf16.msra.mxu0 0
    %1362 = vmatprep.subr.bf16.mxu0 0
    %1363 = vmatpush2.bf16.msra.mxu0 0
    %1364 = vmatprep.subr.bf16.mxu0 0
    %1365 = vmatpush2.bf16.msra.mxu0 0
    %1366 = vmatprep.mubr.bf16.mxu0 0
    %1367 = vmatmul.mubr.bf16.gmra.mxu0 %v1291
    %v1368 = vpop.f32.mrf.mxu0
    %v1369 = vadd.f32 %v182, %v1368
    %v1370 = vpop.f32.mrf.mxu0
    %v1371 = vpop.f32.mrf.mxu0
    %v1372 = vpop.f32.mrf.mxu0
    %1373 = vdwg.mxu0
    %v1375 = vsel %vm487, %v1181, 0
    %1377 = vmatprep.subr.bf16.mxu0 0
    %1378 = vmatpush1.bf16.msra.mxu0 0
    %1379 = vmatprep.subr.bf16.mxu0 0
    %1380 = vmatpush1.bf16.msra.mxu0 0
    %1381 = vmatprep.subr.bf16.mxu0 0
    %1382 = vmatpush1.bf16.msra.mxu0 0
    %1383 = vmatprep.subr.bf16.mxu0 0
    %1384 = vmatpush1.bf16.msra.mxu0 0
    %1385 = vmatprep.subr.bf16.mxu0 0
    %1386 = vmatpush1.bf16.msra.mxu0 0
    %1387 = vmatprep.subr.bf16.mxu0 0
    %1388 = vmatpush1.bf16.msra.mxu0 0
    %1389 = vmatprep.subr.bf16.mxu0 %v771
    %1390 = vmatpush1.bf16.msra.mxu0 %v770
    %1391 = vmatprep.subr.bf16.mxu0 %v768
    %1392 = vmatpush1.bf16.msra.mxu0 %v767
    %1393 = vmatprep.subr.bf16.mxu0 0
    %1394 = vmatpush2.bf16.msra.mxu0 0
    %1395 = vmatprep.subr.bf16.mxu0 0
    %1396 = vmatpush2.bf16.msra.mxu0 0
    %1397 = vmatprep.subr.bf16.mxu0 0
    %1398 = vmatpush2.bf16.msra.mxu0 0
    %1399 = vmatprep.subr.bf16.mxu0 0
    %1400 = vmatpush2.bf16.msra.mxu0 0
    %1401 = vmatprep.subr.bf16.mxu0 0
    %1402 = vmatpush2.bf16.msra.mxu0 0
    %1403 = vmatprep.subr.bf16.mxu0 0
    %1404 = vmatpush2.bf16.msra.mxu0 0
    %1405 = vmatprep.subr.bf16.mxu0 0
    %1406 = vmatpush2.bf16.msra.mxu0 0
    %1407 = vmatprep.subr.bf16.mxu0 0
    %1408 = vmatpush2.bf16.msra.mxu0 0
    %1409 = vmatprep.mubr.bf16.mxu0 0
    %1410 = vmatmul.mubr.bf16.gmra.mxu0 %v1375
    %v1411 = vpop.f32.mrf.mxu0
    %v1412 = vadd.f32 0.0, %v1411
    %v1413 = vpop.f32.mrf.mxu0
    %v1414 = vadd.f32 0.0, %v1413
    %v1415 = vpop.f32.mrf.mxu0
    %v1416 = vpop.f32.mrf.mxu0
    %1417 = vdwg.mxu0
    %1418 = vmatprep.subr.bf16.mxu0 0
    %1419 = vmatpush1.bf16.msra.mxu0 0
    %1420 = vmatprep.subr.bf16.mxu0 0
    %1421 = vmatpush1.bf16.msra.mxu0 0
    %1422 = vmatprep.subr.bf16.mxu0 0
    %1423 = vmatpush1.bf16.msra.mxu0 0
    %1424 = vmatprep.subr.bf16.mxu0 0
    %1425 = vmatpush1.bf16.msra.mxu0 0
    %1426 = vmatprep.subr.bf16.mxu0 0
    %1427 = vmatpush1.bf16.msra.mxu0 0
    %1428 = vmatprep.subr.bf16.mxu0 0
    %1429 = vmatpush1.bf16.msra.mxu0 0
    %1430 = vmatprep.subr.bf16.mxu0 0
    %1431 = vmatpush1.bf16.msra.mxu0 %v772
    %1432 = vmatprep.subr.bf16.mxu0 0
    %1433 = vmatpush1.bf16.msra.mxu0 %v769
    %1434 = vmatprep.subr.bf16.mxu0 0
    %1435 = vmatpush2.bf16.msra.mxu0 0
    %1436 = vmatprep.subr.bf16.mxu0 0
    %1437 = vmatpush2.bf16.msra.mxu0 0
    %1438 = vmatprep.subr.bf16.mxu0 0
    %1439 = vmatpush2.bf16.msra.mxu0 0
    %1440 = vmatprep.subr.bf16.mxu0 0
    %1441 = vmatpush2.bf16.msra.mxu0 0
    %1442 = vmatprep.subr.bf16.mxu0 0
    %1443 = vmatpush2.bf16.msra.mxu0 0
    %1444 = vmatprep.subr.bf16.mxu0 0
    %1445 = vmatpush2.bf16.msra.mxu0 0
    %1446 = vmatprep.subr.bf16.mxu0 0
    %1447 = vmatpush2.bf16.msra.mxu0 0
    %1448 = vmatprep.subr.bf16.mxu0 0
    %1449 = vmatpush2.bf16.msra.mxu0 0
    %1450 = vmatprep.mubr.bf16.mxu0 0
    %1451 = vmatmul.mubr.bf16.gmra.mxu0 %v1375
    %v1452 = vpop.f32.mrf.mxu0
    %v1453 = vadd.f32 0.0, %v1452
    %v1454 = vpop.f32.mrf.mxu0
    %v1455 = vpop.f32.mrf.mxu0
    %v1456 = vpop.f32.mrf.mxu0
    %1457 = vdwg.mxu0
    %v1458 = vadd.f32 %v1328, %v1412
    %v1459 = vxor.u32 %v1458, 2147483648
    %v1460 = vmul.f32 %v1459, 1.442695
    %v1461 = vpow.pop %v1460
    %v1462 = vadd.f32 %v1461, 1.0
    %v1463 = vrcp.pop %v1462
    %v1464 = vmul.f32 1.0, %v1463
    %v1465 = vadd.f32 %v1330, %v1414
    %v1466 = vxor.u32 %v1465, 2147483648
    %v1467 = vmul.f32 %v1466, 1.442695
    %v1468 = vpow.pop %v1467
    %v1469 = vadd.f32 %v1468, 1.0
    %v1470 = vrcp.pop %v1469
    %v1471 = vmul.f32 1.0, %v1470
    %v1472 = vadd.f32 %v1453, %v168
    %v1473 = vmul.f32 %v1464, %v1472
    %v1474 = vadd.f32 %v1369, %v1473
    %v1475 = vtanh.pop %v1474
    %v1476 = vsub.f32 1.0, %v1471
    %v1477 = vmul.f32 %v1476, %v1475
    %v1478 = vmul.f32 %v1471, %v1180
    %v1479 = vadd.f32 %v1477, %v1478
    %v1480 = vpack.c.bf16 %v1479, %v1479
    %1481 = vst.msk [vmem:[#allocation3 + $0x18] sm:$0xff] %vm487, %v1479
    %v1482 = vld [vmem:[#allocation2 + $0x48] sm:$0xff]
    %v1483 = vld [vmem:[#allocation2 + $0x50] sm:$0xff]
    %v1484 = vld [vmem:[#allocation2 + $0x58] sm:$0xff]
    %1485 = vmatprep.subr.bf16.mxu0 0
    %1486 = vmatpush1.bf16.msra.mxu0 0
    %1487 = vmatprep.subr.bf16.mxu0 0
    %1488 = vmatpush1.bf16.msra.mxu0 0
    %1489 = vmatprep.subr.bf16.mxu0 0
    %1490 = vmatpush1.bf16.msra.mxu0 0
    %1491 = vmatprep.subr.bf16.mxu0 0
    %1492 = vmatpush1.bf16.msra.mxu0 0
    %1493 = vmatprep.subr.bf16.mxu0 0
    %1494 = vmatpush1.bf16.msra.mxu0 0
    %1495 = vmatprep.subr.bf16.mxu0 0
    %1496 = vmatpush1.bf16.msra.mxu0 0
    %1497 = vmatprep.subr.bf16.mxu0 %v516
    %1498 = vmatpush1.bf16.msra.mxu0 %v515
    %1499 = vmatprep.subr.bf16.mxu0 %v513
    %1500 = vmatpush1.bf16.msra.mxu0 %v512
    %1501 = vmatprep.subr.bf16.mxu0 0
    %1502 = vmatpush2.bf16.msra.mxu0 0
    %1503 = vmatprep.subr.bf16.mxu0 0
    %1504 = vmatpush2.bf16.msra.mxu0 0
    %1505 = vmatprep.subr.bf16.mxu0 0
    %1506 = vmatpush2.bf16.msra.mxu0 0
    %1507 = vmatprep.subr.bf16.mxu0 0
    %1508 = vmatpush2.bf16.msra.mxu0 0
    %1509 = vmatprep.subr.bf16.mxu0 0
    %1510 = vmatpush2.bf16.msra.mxu0 0
    %1511 = vmatprep.subr.bf16.mxu0 0
    %1512 = vmatpush2.bf16.msra.mxu0 0
    %1513 = vmatprep.subr.bf16.mxu0 0
    %1514 = vmatpush2.bf16.msra.mxu0 0
    %1515 = vmatprep.subr.bf16.mxu0 0
    %1516 = vmatpush2.bf16.msra.mxu0 0
    %1517 = vmatprep.mubr.bf16.mxu0 0
    %1518 = vmatmul.mubr.bf16.gmra.mxu0 %v1291
    %v1519 = vpop.f32.mrf.mxu0
    %v1520 = vadd.f32 0.0, %v1519
    %v1521 = vpop.f32.mrf.mxu0
    %v1522 = vadd.f32 0.0, %v1521
    %v1523 = vpop.f32.mrf.mxu0
    %v1524 = vpop.f32.mrf.mxu0
    %1525 = vdwg.mxu0
    %1526 = vmatprep.subr.bf16.mxu0 0
    %1527 = vmatpush1.bf16.msra.mxu0 0
    %1528 = vmatprep.subr.bf16.mxu0 0
    %1529 = vmatpush1.bf16.msra.mxu0 0
    %1530 = vmatprep.subr.bf16.mxu0 0
    %1531 = vmatpush1.bf16.msra.mxu0 0
    %1532 = vmatprep.subr.bf16.mxu0 0
    %1533 = vmatpush1.bf16.msra.mxu0 0
    %1534 = vmatprep.subr.bf16.mxu0 0
    %1535 = vmatpush1.bf16.msra.mxu0 0
    %1536 = vmatprep.subr.bf16.mxu0 0
    %1537 = vmatpush1.bf16.msra.mxu0 0
    %1538 = vmatprep.subr.bf16.mxu0 0
    %1539 = vmatpush1.bf16.msra.mxu0 %v517
    %1540 = vmatprep.subr.bf16.mxu0 0
    %1541 = vmatpush1.bf16.msra.mxu0 %v514
    %1542 = vmatprep.subr.bf16.mxu0 0
    %1543 = vmatpush2.bf16.msra.mxu0 0
    %1544 = vmatprep.subr.bf16.mxu0 0
    %1545 = vmatpush2.bf16.msra.mxu0 0
    %1546 = vmatprep.subr.bf16.mxu0 0
    %1547 = vmatpush2.bf16.msra.mxu0 0
    %1548 = vmatprep.subr.bf16.mxu0 0
    %1549 = vmatpush2.bf16.msra.mxu0 0
    %1550 = vmatprep.subr.bf16.mxu0 0
    %1551 = vmatpush2.bf16.msra.mxu0 0
    %1552 = vmatprep.subr.bf16.mxu0 0
    %1553 = vmatpush2.bf16.msra.mxu0 0
    %1554 = vmatprep.subr.bf16.mxu0 0
    %1555 = vmatpush2.bf16.msra.mxu0 0
    %1556 = vmatprep.subr.bf16.mxu0 0
    %1557 = vmatpush2.bf16.msra.mxu0 0
    %1558 = vmatprep.mubr.bf16.mxu0 0
    %1559 = vmatmul.mubr.bf16.gmra.mxu0 %v1291
    %v1560 = vpop.f32.mrf.mxu0
    %v1561 = vadd.f32 0.0, %v1560
    %v1562 = vpop.f32.mrf.mxu0
    %v1563 = vpop.f32.mrf.mxu0
    %v1564 = vpop.f32.mrf.mxu0
    %1565 = vdwg.mxu0
    %v1566 = vadd.f32 %v1482, %v1520
    %v1567 = vxor.u32 %v1566, 2147483648
    %v1568 = vmul.f32 %v1567, 1.442695
    %v1569 = vpow.pop %v1568
    %v1570 = vadd.f32 %v1569, 1.0
    %v1571 = vrcp.pop %v1570
    %v1572 = vmul.f32 1.0, %v1571
    %v1573 = vadd.f32 %v1483, %v1522
    %v1574 = vxor.u32 %v1573, 2147483648
    %v1575 = vmul.f32 %v1574, 1.442695
    %v1576 = vpow.pop %v1575
    %v1577 = vadd.f32 %v1576, 1.0
    %v1578 = vrcp.pop %v1577
    %v1579 = vmul.f32 1.0, %v1578
    %v1580 = vadd.f32 %v1561, %v161
    %v1581 = vmul.f32 %v1572, %v1580
    %v1582 = vadd.f32 %v1484, %v1581
    %v1583 = vtanh.pop %v1582
    %v1584 = vsub.f32 1.0, %v1579
    %v1585 = vmul.f32 %v1584, %v1583
    %v1586 = vmul.f32 %v1579, %v1288
    %v1587 = vadd.f32 %v1585, %v1586
    %v1588 = vpack.c.bf16 %v1587, %v1587
    %v1590 = vsel %vm487, %v1588, 0
    %1592 = vmatprep.subr.bf16.mxu0 0
    %1593 = vmatpush1.bf16.msra.mxu0 0
    %1594 = vmatprep.subr.bf16.mxu0 0
    %1595 = vmatpush1.bf16.msra.mxu0 0
    %1596 = vmatprep.subr.bf16.mxu0 0
    %1597 = vmatpush1.bf16.msra.mxu0 0
    %1598 = vmatprep.subr.bf16.mxu0 0
    %1599 = vmatpush1.bf16.msra.mxu0 0
    %1600 = vmatprep.subr.bf16.mxu0 0
    %1601 = vmatpush1.bf16.msra.mxu0 0
    %1602 = vmatprep.subr.bf16.mxu0 0
    %1603 = vmatpush1.bf16.msra.mxu0 0
    %1604 = vmatprep.subr.bf16.mxu0 %v655
    %1605 = vmatpush1.bf16.msra.mxu0 %v654
    %1606 = vmatprep.subr.bf16.mxu0 %v652
    %1607 = vmatpush1.bf16.msra.mxu0 %v651
    %1608 = vmatprep.subr.bf16.mxu0 0
    %1609 = vmatpush2.bf16.msra.mxu0 0
    %1610 = vmatprep.subr.bf16.mxu0 0
    %1611 = vmatpush2.bf16.msra.mxu0 0
    %1612 = vmatprep.subr.bf16.mxu0 0
    %1613 = vmatpush2.bf16.msra.mxu0 0
    %1614 = vmatprep.subr.bf16.mxu0 0
    %1615 = vmatpush2.bf16.msra.mxu0 0
    %1616 = vmatprep.subr.bf16.mxu0 0
    %1617 = vmatpush2.bf16.msra.mxu0 0
    %1618 = vmatprep.subr.bf16.mxu0 0
    %1619 = vmatpush2.bf16.msra.mxu0 0
    %1620 = vmatprep.subr.bf16.mxu0 0
    %1621 = vmatpush2.bf16.msra.mxu0 0
    %1622 = vmatprep.subr.bf16.mxu0 0
    %1623 = vmatpush2.bf16.msra.mxu0 0
    %1624 = vmatprep.mubr.bf16.mxu0 0
    %1625 = vmatmul.mubr.bf16.gmra.mxu0 %v1590
    %v1626 = vpop.f32.mrf.mxu0
    %v1627 = vadd.f32 %v174, %v1626
    %v1628 = vpop.f32.mrf.mxu0
    %v1629 = vadd.f32 %v178, %v1628
    %v1630 = vpop.f32.mrf.mxu0
    %v1631 = vpop.f32.mrf.mxu0
    %1632 = vdwg.mxu0
    %1633 = vmatprep.subr.bf16.mxu0 0
    %1634 = vmatpush1.bf16.msra.mxu0 0
    %1635 = vmatprep.subr.bf16.mxu0 0
    %1636 = vmatpush1.bf16.msra.mxu0 0
    %1637 = vmatprep.subr.bf16.mxu0 0
    %1638 = vmatpush1.bf16.msra.mxu0 0
    %1639 = vmatprep.subr.bf16.mxu0 0
    %1640 = vmatpush1.bf16.msra.mxu0 0
    %1641 = vmatprep.subr.bf16.mxu0 0
    %1642 = vmatpush1.bf16.msra.mxu0 0
    %1643 = vmatprep.subr.bf16.mxu0 0
    %1644 = vmatpush1.bf16.msra.mxu0 0
    %1645 = vmatprep.subr.bf16.mxu0 0
    %1646 = vmatpush1.bf16.msra.mxu0 %v656
    %1647 = vmatprep.subr.bf16.mxu0 0
    %1648 = vmatpush1.bf16.msra.mxu0 %v653
    %1649 = vmatprep.subr.bf16.mxu0 0
    %1650 = vmatpush2.bf16.msra.mxu0 0
    %1651 = vmatprep.subr.bf16.mxu0 0
    %1652 = vmatpush2.bf16.msra.mxu0 0
    %1653 = vmatprep.subr.bf16.mxu0 0
    %1654 = vmatpush2.bf16.msra.mxu0 0
    %1655 = vmatprep.subr.bf16.mxu0 0
    %1656 = vmatpush2.bf16.msra.mxu0 0
    %1657 = vmatprep.subr.bf16.mxu0 0
    %1658 = vmatpush2.bf16.msra.mxu0 0
    %1659 = vmatprep.subr.bf16.mxu0 0
    %1660 = vmatpush2.bf16.msra.mxu0 0
    %1661 = vmatprep.subr.bf16.mxu0 0
    %1662 = vmatpush2.bf16.msra.mxu0 0
    %1663 = vmatprep.subr.bf16.mxu0 0
    %1664 = vmatpush2.bf16.msra.mxu0 0
    %1665 = vmatprep.mubr.bf16.mxu0 0
    %1666 = vmatmul.mubr.bf16.gmra.mxu0 %v1590
    %v1667 = vpop.f32.mrf.mxu0
    %v1668 = vadd.f32 %v182, %v1667
    %v1669 = vpop.f32.mrf.mxu0
    %v1670 = vpop.f32.mrf.mxu0
    %v1671 = vpop.f32.mrf.mxu0
    %1672 = vdwg.mxu0
    %v1674 = vsel %vm487, %v1480, 0
    %1676 = vmatprep.subr.bf16.mxu0 0
    %1677 = vmatpush1.bf16.msra.mxu0 0
    %1678 = vmatprep.subr.bf16.mxu0 0
    %1679 = vmatpush1.bf16.msra.mxu0 0
    %1680 = vmatprep.subr.bf16.mxu0 0
    %1681 = vmatpush1.bf16.msra.mxu0 0
    %1682 = vmatprep.subr.bf16.mxu0 0
    %1683 = vmatpush1.bf16.msra.mxu0 0
    %1684 = vmatprep.subr.bf16.mxu0 0
    %1685 = vmatpush1.bf16.msra.mxu0 0
    %1686 = vmatprep.subr.bf16.mxu0 0
    %1687 = vmatpush1.bf16.msra.mxu0 0
    %1688 = vmatprep.subr.bf16.mxu0 %v771
    %1689 = vmatpush1.bf16.msra.mxu0 %v770
    %1690 = vmatprep.subr.bf16.mxu0 %v768
    %1691 = vmatpush1.bf16.msra.mxu0 %v767
    %1692 = vmatprep.subr.bf16.mxu0 0
    %1693 = vmatpush2.bf16.msra.mxu0 0
    %1694 = vmatprep.subr.bf16.mxu0 0
    %1695 = vmatpush2.bf16.msra.mxu0 0
    %1696 = vmatprep.subr.bf16.mxu0 0
    %1697 = vmatpush2.bf16.msra.mxu0 0
    %1698 = vmatprep.subr.bf16.mxu0 0
    %1699 = vmatpush2.bf16.msra.mxu0 0
    %1700 = vmatprep.subr.bf16.mxu0 0
    %1701 = vmatpush2.bf16.msra.mxu0 0
    %1702 = vmatprep.subr.bf16.mxu0 0
    %1703 = vmatpush2.bf16.msra.mxu0 0
    %1704 = vmatprep.subr.bf16.mxu0 0
    %1705 = vmatpush2.bf16.msra.mxu0 0
    %1706 = vmatprep.subr.bf16.mxu0 0
    %1707 = vmatpush2.bf16.msra.mxu0 0
    %1708 = vmatprep.mubr.bf16.mxu0 0
    %1709 = vmatmul.mubr.bf16.gmra.mxu0 %v1674
    %v1710 = vpop.f32.mrf.mxu0
    %v1711 = vadd.f32 0.0, %v1710
    %v1712 = vpop.f32.mrf.mxu0
    %v1713 = vadd.f32 0.0, %v1712
    %v1714 = vpop.f32.mrf.mxu0
    %v1715 = vpop.f32.mrf.mxu0
    %1716 = vdwg.mxu0
    %1717 = vmatprep.subr.bf16.mxu0 0
    %1718 = vmatpush1.bf16.msra.mxu0 0
    %1719 = vmatprep.subr.bf16.mxu0 0
    %1720 = vmatpush1.bf16.msra.mxu0 0
    %1721 = vmatprep.subr.bf16.mxu0 0
    %1722 = vmatpush1.bf16.msra.mxu0 0
    %1723 = vmatprep.subr.bf16.mxu0 0
    %1724 = vmatpush1.bf16.msra.mxu0 0
    %1725 = vmatprep.subr.bf16.mxu0 0
    %1726 = vmatpush1.bf16.msra.mxu0 0
    %1727 = vmatprep.subr.bf16.mxu0 0
    %1728 = vmatpush1.bf16.msra.mxu0 0
    %1729 = vmatprep.subr.bf16.mxu0 0
    %1730 = vmatpush1.bf16.msra.mxu0 %v772
    %1731 = vmatprep.subr.bf16.mxu0 0
    %1732 = vmatpush1.bf16.msra.mxu0 %v769
    %1733 = vmatprep.subr.bf16.mxu0 0
    %1734 = vmatpush2.bf16.msra.mxu0 0
    %1735 = vmatprep.subr.bf16.mxu0 0
    %1736 = vmatpush2.bf16.msra.mxu0 0
    %1737 = vmatprep.subr.bf16.mxu0 0
    %1738 = vmatpush2.bf16.msra.mxu0 0
    %1739 = vmatprep.subr.bf16.mxu0 0
    %1740 = vmatpush2.bf16.msra.mxu0 0
    %1741 = vmatprep.subr.bf16.mxu0 0
    %1742 = vmatpush2.bf16.msra.mxu0 0
    %1743 = vmatprep.subr.bf16.mxu0 0
    %1744 = vmatpush2.bf16.msra.mxu0 0
    %1745 = vmatprep.subr.bf16.mxu0 0
    %1746 = vmatpush2.bf16.msra.mxu0 0
    %1747 = vmatprep.subr.bf16.mxu0 0
    %1748 = vmatpush2.bf16.msra.mxu0 0
    %1749 = vmatprep.mubr.bf16.mxu0 0
    %1750 = vmatmul.mubr.bf16.gmra.mxu0 %v1674
    %v1751 = vpop.f32.mrf.mxu0
    %v1752 = vadd.f32 0.0, %v1751
    %v1753 = vpop.f32.mrf.mxu0
    %v1754 = vpop.f32.mrf.mxu0
    %v1755 = vpop.f32.mrf.mxu0
    %1756 = vdwg.mxu0
    %v1757 = vadd.f32 %v1627, %v1711
    %v1758 = vxor.u32 %v1757, 2147483648
    %v1759 = vmul.f32 %v1758, 1.442695
    %v1760 = vpow.pop %v1759
    %v1761 = vadd.f32 %v1760, 1.0
    %v1762 = vrcp.pop %v1761
    %v1763 = vmul.f32 1.0, %v1762
    %v1764 = vadd.f32 %v1629, %v1713
    %v1765 = vxor.u32 %v1764, 2147483648
    %v1766 = vmul.f32 %v1765, 1.442695
    %v1767 = vpow.pop %v1766
    %v1768 = vadd.f32 %v1767, 1.0
    %v1769 = vrcp.pop %v1768
    %v1770 = vmul.f32 1.0, %v1769
    %v1771 = vadd.f32 %v1752, %v168
    %v1772 = vmul.f32 %v1763, %v1771
    %v1773 = vadd.f32 %v1668, %v1772
    %v1774 = vtanh.pop %v1773
    %v1775 = vsub.f32 1.0, %v1770
    %v1776 = vmul.f32 %v1775, %v1774
    %v1777 = vmul.f32 %v1770, %v1479
    %v1778 = vadd.f32 %v1776, %v1777
    %v1779 = vpack.c.bf16 %v1778, %v1778
    %1780 = vst.msk [vmem:[#allocation3 + $0x20] sm:$0xff] %vm487, %v1778
    %v1781 = vld [vmem:[#allocation2 + $0x60] sm:$0xff]
    %v1782 = vld [vmem:[#allocation2 + $0x68] sm:$0xff]
    %v1783 = vld [vmem:[#allocation2 + $0x70] sm:$0xff]
    %1784 = vmatprep.subr.bf16.mxu0 0
    %1785 = vmatpush1.bf16.msra.mxu0 0
    %1786 = vmatprep.subr.bf16.mxu0 0
    %1787 = vmatpush1.bf16.msra.mxu0 0
    %1788 = vmatprep.subr.bf16.mxu0 0
    %1789 = vmatpush1.bf16.msra.mxu0 0
    %1790 = vmatprep.subr.bf16.mxu0 0
    %1791 = vmatpush1.bf16.msra.mxu0 0
    %1792 = vmatprep.subr.bf16.mxu0 0
    %1793 = vmatpush1.bf16.msra.mxu0 0
    %1794 = vmatprep.subr.bf16.mxu0 0
    %1795 = vmatpush1.bf16.msra.mxu0 0
    %1796 = vmatprep.subr.bf16.mxu0 %v516
    %1797 = vmatpush1.bf16.msra.mxu0 %v515
    %1798 = vmatprep.subr.bf16.mxu0 %v513
    %1799 = vmatpush1.bf16.msra.mxu0 %v512
    %1800 = vmatprep.subr.bf16.mxu0 0
    %1801 = vmatpush2.bf16.msra.mxu0 0
    %1802 = vmatprep.subr.bf16.mxu0 0
    %1803 = vmatpush2.bf16.msra.mxu0 0
    %1804 = vmatprep.subr.bf16.mxu0 0
    %1805 = vmatpush2.bf16.msra.mxu0 0
    %1806 = vmatprep.subr.bf16.mxu0 0
    %1807 = vmatpush2.bf16.msra.mxu0 0
    %1808 = vmatprep.subr.bf16.mxu0 0
    %1809 = vmatpush2.bf16.msra.mxu0 0
    %1810 = vmatprep.subr.bf16.mxu0 0
    %1811 = vmatpush2.bf16.msra.mxu0 0
    %1812 = vmatprep.subr.bf16.mxu0 0
    %1813 = vmatpush2.bf16.msra.mxu0 0
    %1814 = vmatprep.subr.bf16.mxu0 0
    %1815 = vmatpush2.bf16.msra.mxu0 0
    %1816 = vmatprep.mubr.bf16.mxu0 0
    %1817 = vmatmul.mubr.bf16.gmra.mxu0 %v1590
    %v1818 = vpop.f32.mrf.mxu0
    %v1819 = vadd.f32 0.0, %v1818
    %v1820 = vpop.f32.mrf.mxu0
    %v1821 = vadd.f32 0.0, %v1820
    %v1822 = vpop.f32.mrf.mxu0
    %v1823 = vpop.f32.mrf.mxu0
    %1824 = vdwg.mxu0
    %1825 = vmatprep.subr.bf16.mxu0 0
    %1826 = vmatpush1.bf16.msra.mxu0 0
    %1827 = vmatprep.subr.bf16.mxu0 0
    %1828 = vmatpush1.bf16.msra.mxu0 0
    %1829 = vmatprep.subr.bf16.mxu0 0
    %1830 = vmatpush1.bf16.msra.mxu0 0
    %1831 = vmatprep.subr.bf16.mxu0 0
    %1832 = vmatpush1.bf16.msra.mxu0 0
    %1833 = vmatprep.subr.bf16.mxu0 0
    %1834 = vmatpush1.bf16.msra.mxu0 0
    %1835 = vmatprep.subr.bf16.mxu0 0
    %1836 = vmatpush1.bf16.msra.mxu0 0
    %1837 = vmatprep.subr.bf16.mxu0 0
    %1838 = vmatpush1.bf16.msra.mxu0 %v517
    %1839 = vmatprep.subr.bf16.mxu0 0
    %1840 = vmatpush1.bf16.msra.mxu0 %v514
    %1841 = vmatprep.subr.bf16.mxu0 0
    %1842 = vmatpush2.bf16.msra.mxu0 0
    %1843 = vmatprep.subr.bf16.mxu0 0
    %1844 = vmatpush2.bf16.msra.mxu0 0
    %1845 = vmatprep.subr.bf16.mxu0 0
    %1846 = vmatpush2.bf16.msra.mxu0 0
    %1847 = vmatprep.subr.bf16.mxu0 0
    %1848 = vmatpush2.bf16.msra.mxu0 0
    %1849 = vmatprep.subr.bf16.mxu0 0
    %1850 = vmatpush2.bf16.msra.mxu0 0
    %1851 = vmatprep.subr.bf16.mxu0 0
    %1852 = vmatpush2.bf16.msra.mxu0 0
    %1853 = vmatprep.subr.bf16.mxu0 0
    %1854 = vmatpush2.bf16.msra.mxu0 0
    %1855 = vmatprep.subr.bf16.mxu0 0
    %1856 = vmatpush2.bf16.msra.mxu0 0
    %1857 = vmatprep.mubr.bf16.mxu0 0
    %1858 = vmatmul.mubr.bf16.gmra.mxu0 %v1590
    %v1859 = vpop.f32.mrf.mxu0
    %v1860 = vadd.f32 0.0, %v1859
    %v1861 = vpop.f32.mrf.mxu0
    %v1862 = vpop.f32.mrf.mxu0
    %v1863 = vpop.f32.mrf.mxu0
    %1864 = vdwg.mxu0
    %v1865 = vadd.f32 %v1781, %v1819
    %v1866 = vxor.u32 %v1865, 2147483648
    %v1867 = vmul.f32 %v1866, 1.442695
    %v1868 = vpow.pop %v1867
    %v1869 = vadd.f32 %v1868, 1.0
    %v1870 = vrcp.pop %v1869
    %v1871 = vmul.f32 1.0, %v1870
    %v1872 = vadd.f32 %v1782, %v1821
    %v1873 = vxor.u32 %v1872, 2147483648
    %v1874 = vmul.f32 %v1873, 1.442695
    %v1875 = vpow.pop %v1874
    %v1876 = vadd.f32 %v1875, 1.0
    %v1877 = vrcp.pop %v1876
    %v1878 = vmul.f32 1.0, %v1877
    %v1879 = vadd.f32 %v1860, %v161
    %v1880 = vmul.f32 %v1871, %v1879
    %v1881 = vadd.f32 %v1783, %v1880
    %v1882 = vtanh.pop %v1881
    %v1883 = vsub.f32 1.0, %v1878
    %v1884 = vmul.f32 %v1883, %v1882
    %v1885 = vmul.f32 %v1878, %v1587
    %v1886 = vadd.f32 %v1884, %v1885
    %v1887 = vpack.c.bf16 %v1886, %v1886
    %v1889 = vsel %vm487, %v1887, 0
    %1891 = vmatprep.subr.bf16.mxu0 0
    %1892 = vmatpush1.bf16.msra.mxu0 0
    %1893 = vmatprep.subr.bf16.mxu0 0
    %1894 = vmatpush1.bf16.msra.mxu0 0
    %1895 = vmatprep.subr.bf16.mxu0 0
    %1896 = vmatpush1.bf16.msra.mxu0 0
    %1897 = vmatprep.subr.bf16.mxu0 0
    %1898 = vmatpush1.bf16.msra.mxu0 0
    %1899 = vmatprep.subr.bf16.mxu0 0
    %1900 = vmatpush1.bf16.msra.mxu0 0
    %1901 = vmatprep.subr.bf16.mxu0 0
    %1902 = vmatpush1.bf16.msra.mxu0 0
    %1903 = vmatprep.subr.bf16.mxu0 %v655
    %1904 = vmatpush1.bf16.msra.mxu0 %v654
    %1905 = vmatprep.subr.bf16.mxu0 %v652
    %1906 = vmatpush1.bf16.msra.mxu0 %v651
    %1907 = vmatprep.subr.bf16.mxu0 0
    %1908 = vmatpush2.bf16.msra.mxu0 0
    %1909 = vmatprep.subr.bf16.mxu0 0
    %1910 = vmatpush2.bf16.msra.mxu0 0
    %1911 = vmatprep.subr.bf16.mxu0 0
    %1912 = vmatpush2.bf16.msra.mxu0 0
    %1913 = vmatprep.subr.bf16.mxu0 0
    %1914 = vmatpush2.bf16.msra.mxu0 0
    %1915 = vmatprep.subr.bf16.mxu0 0
    %1916 = vmatpush2.bf16.msra.mxu0 0
    %1917 = vmatprep.subr.bf16.mxu0 0
    %1918 = vmatpush2.bf16.msra.mxu0 0
    %1919 = vmatprep.subr.bf16.mxu0 0
    %1920 = vmatpush2.bf16.msra.mxu0 0
    %1921 = vmatprep.subr.bf16.mxu0 0
    %1922 = vmatpush2.bf16.msra.mxu0 0
    %1923 = vmatprep.mubr.bf16.mxu0 0
    %1924 = vmatmul.mubr.bf16.gmra.mxu0 %v1889
    %v1925 = vpop.f32.mrf.mxu0
    %v1926 = vadd.f32 %v174, %v1925
    %v1927 = vpop.f32.mrf.mxu0
    %v1928 = vadd.f32 %v178, %v1927
    %v1929 = vpop.f32.mrf.mxu0
    %v1930 = vpop.f32.mrf.mxu0
    %1931 = vdwg.mxu0
    %1932 = vmatprep.subr.bf16.mxu0 0
    %1933 = vmatpush1.bf16.msra.mxu0 0
    %1934 = vmatprep.subr.bf16.mxu0 0
    %1935 = vmatpush1.bf16.msra.mxu0 0
    %1936 = vmatprep.subr.bf16.mxu0 0
    %1937 = vmatpush1.bf16.msra.mxu0 0
    %1938 = vmatprep.subr.bf16.mxu0 0
    %1939 = vmatpush1.bf16.msra.mxu0 0
    %1940 = vmatprep.subr.bf16.mxu0 0
    %1941 = vmatpush1.bf16.msra.mxu0 0
    %1942 = vmatprep.subr.bf16.mxu0 0
    %1943 = vmatpush1.bf16.msra.mxu0 0
    %1944 = vmatprep.subr.bf16.mxu0 0
    %1945 = vmatpush1.bf16.msra.mxu0 %v656
    %1946 = vmatprep.subr.bf16.mxu0 0
    %1947 = vmatpush1.bf16.msra.mxu0 %v653
    %1948 = vmatprep.subr.bf16.mxu0 0
    %1949 = vmatpush2.bf16.msra.mxu0 0
    %1950 = vmatprep.subr.bf16.mxu0 0
    %1951 = vmatpush2.bf16.msra.mxu0 0
    %1952 = vmatprep.subr.bf16.mxu0 0
    %1953 = vmatpush2.bf16.msra.mxu0 0
    %1954 = vmatprep.subr.bf16.mxu0 0
    %1955 = vmatpush2.bf16.msra.mxu0 0
    %1956 = vmatprep.subr.bf16.mxu0 0
    %1957 = vmatpush2.bf16.msra.mxu0 0
    %1958 = vmatprep.subr.bf16.mxu0 0
    %1959 = vmatpush2.bf16.msra.mxu0 0
    %1960 = vmatprep.subr.bf16.mxu0 0
    %1961 = vmatpush2.bf16.msra.mxu0 0
    %1962 = vmatprep.subr.bf16.mxu0 0
    %1963 = vmatpush2.bf16.msra.mxu0 0
    %1964 = vmatprep.mubr.bf16.mxu0 0
    %1965 = vmatmul.mubr.bf16.gmra.mxu0 %v1889
    %v1966 = vpop.f32.mrf.mxu0
    %v1967 = vadd.f32 %v182, %v1966
    %v1968 = vpop.f32.mrf.mxu0
    %v1969 = vpop.f32.mrf.mxu0
    %v1970 = vpop.f32.mrf.mxu0
    %1971 = vdwg.mxu0
    %v1973 = vsel %vm487, %v1779, 0
    %1975 = vmatprep.subr.bf16.mxu0 0
    %1976 = vmatpush1.bf16.msra.mxu0 0
    %1977 = vmatprep.subr.bf16.mxu0 0
    %1978 = vmatpush1.bf16.msra.mxu0 0
    %1979 = vmatprep.subr.bf16.mxu0 0
    %1980 = vmatpush1.bf16.msra.mxu0 0
    %1981 = vmatprep.subr.bf16.mxu0 0
    %1982 = vmatpush1.bf16.msra.mxu0 0
    %1983 = vmatprep.subr.bf16.mxu0 0
    %1984 = vmatpush1.bf16.msra.mxu0 0
    %1985 = vmatprep.subr.bf16.mxu0 0
    %1986 = vmatpush1.bf16.msra.mxu0 0
    %1987 = vmatprep.subr.bf16.mxu0 %v771
    %1988 = vmatpush1.bf16.msra.mxu0 %v770
    %1989 = vmatprep.subr.bf16.mxu0 %v768
    %1990 = vmatpush1.bf16.msra.mxu0 %v767
    %1991 = vmatprep.subr.bf16.mxu0 0
    %1992 = vmatpush2.bf16.msra.mxu0 0
    %1993 = vmatprep.subr.bf16.mxu0 0
    %1994 = vmatpush2.bf16.msra.mxu0 0
    %1995 = vmatprep.subr.bf16.mxu0 0
    %1996 = vmatpush2.bf16.msra.mxu0 0
    %1997 = vmatprep.subr.bf16.mxu0 0
    %1998 = vmatpush2.bf16.msra.mxu0 0
    %1999 = vmatprep.subr.bf16.mxu0 0
    %2000 = vmatpush2.bf16.msra.mxu0 0
    %2001 = vmatprep.subr.bf16.mxu0 0
    %2002 = vmatpush2.bf16.msra.mxu0 0
    %2003 = vmatprep.subr.bf16.mxu0 0
    %2004 = vmatpush2.bf16.msra.mxu0 0
    %2005 = vmatprep.subr.bf16.mxu0 0
    %2006 = vmatpush2.bf16.msra.mxu0 0
    %2007 = vmatprep.mubr.bf16.mxu0 0
    %2008 = vmatmul.mubr.bf16.gmra.mxu0 %v1973
    %v2009 = vpop.f32.mrf.mxu0
    %v2010 = vadd.f32 0.0, %v2009
    %v2011 = vpop.f32.mrf.mxu0
    %v2012 = vadd.f32 0.0, %v2011
    %v2013 = vpop.f32.mrf.mxu0
    %v2014 = vpop.f32.mrf.mxu0
    %2015 = vdwg.mxu0
    %2016 = vmatprep.subr.bf16.mxu0 0
    %2017 = vmatpush1.bf16.msra.mxu0 0
    %2018 = vmatprep.subr.bf16.mxu0 0
    %2019 = vmatpush1.bf16.msra.mxu0 0
    %2020 = vmatprep.subr.bf16.mxu0 0
    %2021 = vmatpush1.bf16.msra.mxu0 0
    %2022 = vmatprep.subr.bf16.mxu0 0
    %2023 = vmatpush1.bf16.msra.mxu0 0
    %2024 = vmatprep.subr.bf16.mxu0 0
    %2025 = vmatpush1.bf16.msra.mxu0 0
    %2026 = vmatprep.subr.bf16.mxu0 0
    %2027 = vmatpush1.bf16.msra.mxu0 0
    %2028 = vmatprep.subr.bf16.mxu0 0
    %2029 = vmatpush1.bf16.msra.mxu0 %v772
    %2030 = vmatprep.subr.bf16.mxu0 0
    %2031 = vmatpush1.bf16.msra.mxu0 %v769
    %2032 = vmatprep.subr.bf16.mxu0 0
    %2033 = vmatpush2.bf16.msra.mxu0 0
    %2034 = vmatprep.subr.bf16.mxu0 0
    %2035 = vmatpush2.bf16.msra.mxu0 0
    %2036 = vmatprep.subr.bf16.mxu0 0
    %2037 = vmatpush2.bf16.msra.mxu0 0
    %2038 = vmatprep.subr.bf16.mxu0 0
    %2039 = vmatpush2.bf16.msra.mxu0 0
    %2040 = vmatprep.subr.bf16.mxu0 0
    %2041 = vmatpush2.bf16.msra.mxu0 0
    %2042 = vmatprep.subr.bf16.mxu0 0
    %2043 = vmatpush2.bf16.msra.mxu0 0
    %2044 = vmatprep.subr.bf16.mxu0 0
    %2045 = vmatpush2.bf16.msra.mxu0 0
    %2046 = vmatprep.subr.bf16.mxu0 0
    %2047 = vmatpush2.bf16.msra.mxu0 0
    %2048 = vmatprep.mubr.bf16.mxu0 0
    %2049 = vmatmul.mubr.bf16.gmra.mxu0 %v1973
    %v2050 = vpop.f32.mrf.mxu0
    %v2051 = vadd.f32 0.0, %v2050
    %v2052 = vpop.f32.mrf.mxu0
    %v2053 = vpop.f32.mrf.mxu0
    %v2054 = vpop.f32.mrf.mxu0
    %2055 = vdwg.mxu0
    %v2056 = vadd.f32 %v1926, %v2010
    %v2057 = vxor.u32 %v2056, 2147483648
    %v2058 = vmul.f32 %v2057, 1.442695
    %v2059 = vpow.pop %v2058
    %v2060 = vadd.f32 %v2059, 1.0
    %v2061 = vrcp.pop %v2060
    %v2062 = vmul.f32 1.0, %v2061
    %v2063 = vadd.f32 %v1928, %v2012
    %v2064 = vxor.u32 %v2063, 2147483648
    %v2065 = vmul.f32 %v2064, 1.442695
    %v2066 = vpow.pop %v2065
    %v2067 = vadd.f32 %v2066, 1.0
    %v2068 = vrcp.pop %v2067
    %v2069 = vmul.f32 1.0, %v2068
    %v2070 = vadd.f32 %v2051, %v168
    %v2071 = vmul.f32 %v2062, %v2070
    %v2072 = vadd.f32 %v1967, %v2071
    %v2073 = vtanh.pop %v2072
    %v2074 = vsub.f32 1.0, %v2069
    %v2075 = vmul.f32 %v2074, %v2073
    %v2076 = vmul.f32 %v2069, %v1778
    %v2077 = vadd.f32 %v2075, %v2076
    %v2078 = vpack.c.bf16 %v2077, %v2077
    %2079 = vst.msk [vmem:[#allocation3 + $0x28] sm:$0xff] %vm487, %v2077
    %v2080 = vld [vmem:[#allocation2 + $0x78] sm:$0xff]
    %v2081 = vld [vmem:[#allocation2 + $0x80] sm:$0xff]
    %v2082 = vld [vmem:[#allocation2 + $0x88] sm:$0xff]
    %2083 = vmatprep.subr.bf16.mxu0 0
    %2084 = vmatpush1.bf16.msra.mxu0 0
    %2085 = vmatprep.subr.bf16.mxu0 0
    %2086 = vmatpush1.bf16.msra.mxu0 0
    %2087 = vmatprep.subr.bf16.mxu0 0
    %2088 = vmatpush1.bf16.msra.mxu0 0
    %2089 = vmatprep.subr.bf16.mxu0 0
    %2090 = vmatpush1.bf16.msra.mxu0 0
    %2091 = vmatprep.subr.bf16.mxu0 0
    %2092 = vmatpush1.bf16.msra.mxu0 0
    %2093 = vmatprep.subr.bf16.mxu0 0
    %2094 = vmatpush1.bf16.msra.mxu0 0
    %2095 = vmatprep.subr.bf16.mxu0 %v516
    %2096 = vmatpush1.bf16.msra.mxu0 %v515
    %2097 = vmatprep.subr.bf16.mxu0 %v513
    %2098 = vmatpush1.bf16.msra.mxu0 %v512
    %2099 = vmatprep.subr.bf16.mxu0 0
    %2100 = vmatpush2.bf16.msra.mxu0 0
    %2101 = vmatprep.subr.bf16.mxu0 0
    %2102 = vmatpush2.bf16.msra.mxu0 0
    %2103 = vmatprep.subr.bf16.mxu0 0
    %2104 = vmatpush2.bf16.msra.mxu0 0
    %2105 = vmatprep.subr.bf16.mxu0 0
    %2106 = vmatpush2.bf16.msra.mxu0 0
    %2107 = vmatprep.subr.bf16.mxu0 0
    %2108 = vmatpush2.bf16.msra.mxu0 0
    %2109 = vmatprep.subr.bf16.mxu0 0
    %2110 = vmatpush2.bf16.msra.mxu0 0
    %2111 = vmatprep.subr.bf16.mxu0 0
    %2112 = vmatpush2.bf16.msra.mxu0 0
    %2113 = vmatprep.subr.bf16.mxu0 0
    %2114 = vmatpush2.bf16.msra.mxu0 0
    %2115 = vmatprep.mubr.bf16.mxu0 0
    %2116 = vmatmul.mubr.bf16.gmra.mxu0 %v1889
    %v2117 = vpop.f32.mrf.mxu0
    %v2118 = vadd.f32 0.0, %v2117
    %v2119 = vpop.f32.mrf.mxu0
    %v2120 = vadd.f32 0.0, %v2119
    %v2121 = vpop.f32.mrf.mxu0
    %v2122 = vpop.f32.mrf.mxu0
    %2123 = vdwg.mxu0
    %2124 = vmatprep.subr.bf16.mxu0 0
    %2125 = vmatpush1.bf16.msra.mxu0 0
    %2126 = vmatprep.subr.bf16.mxu0 0
    %2127 = vmatpush1.bf16.msra.mxu0 0
    %2128 = vmatprep.subr.bf16.mxu0 0
    %2129 = vmatpush1.bf16.msra.mxu0 0
    %2130 = vmatprep.subr.bf16.mxu0 0
    %2131 = vmatpush1.bf16.msra.mxu0 0
    %2132 = vmatprep.subr.bf16.mxu0 0
    %2133 = vmatpush1.bf16.msra.mxu0 0
    %2134 = vmatprep.subr.bf16.mxu0 0
    %2135 = vmatpush1.bf16.msra.mxu0 0
    %2136 = vmatprep.subr.bf16.mxu0 0
    %2137 = vmatpush1.bf16.msra.mxu0 %v517
    %2138 = vmatprep.subr.bf16.mxu0 0
    %2139 = vmatpush1.bf16.msra.mxu0 %v514
    %2140 = vmatprep.subr.bf16.mxu0 0
    %2141 = vmatpush2.bf16.msra.mxu0 0
    %2142 = vmatprep.subr.bf16.mxu0 0
    %2143 = vmatpush2.bf16.msra.mxu0 0
    %2144 = vmatprep.subr.bf16.mxu0 0
    %2145 = vmatpush2.bf16.msra.mxu0 0
    %2146 = vmatprep.subr.bf16.mxu0 0
    %2147 = vmatpush2.bf16.msra.mxu0 0
    %2148 = vmatprep.subr.bf16.mxu0 0
    %2149 = vmatpush2.bf16.msra.mxu0 0
    %2150 = vmatprep.subr.bf16.mxu0 0
    %2151 = vmatpush2.bf16.msra.mxu0 0
    %2152 = vmatprep.subr.bf16.mxu0 0
    %2153 = vmatpush2.bf16.msra.mxu0 0
    %2154 = vmatprep.subr.bf16.mxu0 0
    %2155 = vmatpush2.bf16.msra.mxu0 0
    %2156 = vmatprep.mubr.bf16.mxu0 0
    %2157 = vmatmul.mubr.bf16.gmra.mxu0 %v1889
    %v2158 = vpop.f32.mrf.mxu0
    %v2159 = vadd.f32 0.0, %v2158
    %v2160 = vpop.f32.mrf.mxu0
    %v2161 = vpop.f32.mrf.mxu0
    %v2162 = vpop.f32.mrf.mxu0
    %2163 = vdwg.mxu0
    %v2164 = vadd.f32 %v2080, %v2118
    %v2165 = vxor.u32 %v2164, 2147483648
    %v2166 = vmul.f32 %v2165, 1.442695
    %v2167 = vpow.pop %v2166
    %v2168 = vadd.f32 %v2167, 1.0
    %v2169 = vrcp.pop %v2168
    %v2170 = vmul.f32 1.0, %v2169
    %v2171 = vadd.f32 %v2081, %v2120
    %v2172 = vxor.u32 %v2171, 2147483648
    %v2173 = vmul.f32 %v2172, 1.442695
    %v2174 = vpow.pop %v2173
    %v2175 = vadd.f32 %v2174, 1.0
    %v2176 = vrcp.pop %v2175
    %v2177 = vmul.f32 1.0, %v2176
    %v2178 = vadd.f32 %v2159, %v161
    %v2179 = vmul.f32 %v2170, %v2178
    %v2180 = vadd.f32 %v2082, %v2179
    %v2181 = vtanh.pop %v2180
    %v2182 = vsub.f32 1.0, %v2177
    %v2183 = vmul.f32 %v2182, %v2181
    %v2184 = vmul.f32 %v2177, %v1886
    %v2185 = vadd.f32 %v2183, %v2184
    %v2186 = vpack.c.bf16 %v2185, %v2185
    %v2188 = vsel %vm487, %v2186, 0
    %2190 = vmatprep.subr.bf16.mxu0 0
    %2191 = vmatpush1.bf16.msra.mxu0 0
    %2192 = vmatprep.subr.bf16.mxu0 0
    %2193 = vmatpush1.bf16.msra.mxu0 0
    %2194 = vmatprep.subr.bf16.mxu0 0
    %2195 = vmatpush1.bf16.msra.mxu0 0
    %2196 = vmatprep.subr.bf16.mxu0 0
    %2197 = vmatpush1.bf16.msra.mxu0 0
    %2198 = vmatprep.subr.bf16.mxu0 0
    %2199 = vmatpush1.bf16.msra.mxu0 0
    %2200 = vmatprep.subr.bf16.mxu0 0
    %2201 = vmatpush1.bf16.msra.mxu0 0
    %2202 = vmatprep.subr.bf16.mxu0 %v655
    %2203 = vmatpush1.bf16.msra.mxu0 %v654
    %2204 = vmatprep.subr.bf16.mxu0 %v652
    %2205 = vmatpush1.bf16.msra.mxu0 %v651
    %2206 = vmatprep.subr.bf16.mxu0 0
    %2207 = vmatpush2.bf16.msra.mxu0 0
    %2208 = vmatprep.subr.bf16.mxu0 0
    %2209 = vmatpush2.bf16.msra.mxu0 0
    %2210 = vmatprep.subr.bf16.mxu0 0
    %2211 = vmatpush2.bf16.msra.mxu0 0
    %2212 = vmatprep.subr.bf16.mxu0 0
    %2213 = vmatpush2.bf16.msra.mxu0 0
    %2214 = vmatprep.subr.bf16.mxu0 0
    %2215 = vmatpush2.bf16.msra.mxu0 0
    %2216 = vmatprep.subr.bf16.mxu0 0
    %2217 = vmatpush2.bf16.msra.mxu0 0
    %2218 = vmatprep.subr.bf16.mxu0 0
    %2219 = vmatpush2.bf16.msra.mxu0 0
    %2220 = vmatprep.subr.bf16.mxu0 0
    %2221 = vmatpush2.bf16.msra.mxu0 0
    %2222 = vmatprep.mubr.bf16.mxu0 0
    %2223 = vmatmul.mubr.bf16.gmra.mxu0 %v2188
    %v2224 = vpop.f32.mrf.mxu0
    %v2225 = vadd.f32 %v174, %v2224
    %v2226 = vpop.f32.mrf.mxu0
    %v2227 = vadd.f32 %v178, %v2226
    %v2228 = vpop.f32.mrf.mxu0
    %v2229 = vpop.f32.mrf.mxu0
    %2230 = vdwg.mxu0
    %2231 = vmatprep.subr.bf16.mxu0 0
    %2232 = vmatpush1.bf16.msra.mxu0 0
    %2233 = vmatprep.subr.bf16.mxu0 0
    %2234 = vmatpush1.bf16.msra.mxu0 0
    %2235 = vmatprep.subr.bf16.mxu0 0
    %2236 = vmatpush1.bf16.msra.mxu0 0
    %2237 = vmatprep.subr.bf16.mxu0 0
    %2238 = vmatpush1.bf16.msra.mxu0 0
    %2239 = vmatprep.subr.bf16.mxu0 0
    %2240 = vmatpush1.bf16.msra.mxu0 0
    %2241 = vmatprep.subr.bf16.mxu0 0
    %2242 = vmatpush1.bf16.msra.mxu0 0
    %2243 = vmatprep.subr.bf16.mxu0 0
    %2244 = vmatpush1.bf16.msra.mxu0 %v656
    %2245 = vmatprep.subr.bf16.mxu0 0
    %2246 = vmatpush1.bf16.msra.mxu0 %v653
    %2247 = vmatprep.subr.bf16.mxu0 0
    %2248 = vmatpush2.bf16.msra.mxu0 0
    %2249 = vmatprep.subr.bf16.mxu0 0
    %2250 = vmatpush2.bf16.msra.mxu0 0
    %2251 = vmatprep.subr.bf16.mxu0 0
    %2252 = vmatpush2.bf16.msra.mxu0 0
    %2253 = vmatprep.subr.bf16.mxu0 0
    %2254 = vmatpush2.bf16.msra.mxu0 0
    %2255 = vmatprep.subr.bf16.mxu0 0
    %2256 = vmatpush2.bf16.msra.mxu0 0
    %2257 = vmatprep.subr.bf16.mxu0 0
    %2258 = vmatpush2.bf16.msra.mxu0 0
    %2259 = vmatprep.subr.bf16.mxu0 0
    %2260 = vmatpush2.bf16.msra.mxu0 0
    %2261 = vmatprep.subr.bf16.mxu0 0
    %2262 = vmatpush2.bf16.msra.mxu0 0
    %2263 = vmatprep.mubr.bf16.mxu0 0
    %2264 = vmatmul.mubr.bf16.gmra.mxu0 %v2188
    %v2265 = vpop.f32.mrf.mxu0
    %v2266 = vadd.f32 %v182, %v2265
    %v2267 = vpop.f32.mrf.mxu0
    %v2268 = vpop.f32.mrf.mxu0
    %v2269 = vpop.f32.mrf.mxu0
    %2270 = vdwg.mxu0
    %v2272 = vsel %vm487, %v2078, 0
    %2274 = vmatprep.subr.bf16.mxu0 0
    %2275 = vmatpush1.bf16.msra.mxu0 0
    %2276 = vmatprep.subr.bf16.mxu0 0
    %2277 = vmatpush1.bf16.msra.mxu0 0
    %2278 = vmatprep.subr.bf16.mxu0 0
    %2279 = vmatpush1.bf16.msra.mxu0 0
    %2280 = vmatprep.subr.bf16.mxu0 0
    %2281 = vmatpush1.bf16.msra.mxu0 0
    %2282 = vmatprep.subr.bf16.mxu0 0
    %2283 = vmatpush1.bf16.msra.mxu0 0
    %2284 = vmatprep.subr.bf16.mxu0 0
    %2285 = vmatpush1.bf16.msra.mxu0 0
    %2286 = vmatprep.subr.bf16.mxu0 %v771
    %2287 = vmatpush1.bf16.msra.mxu0 %v770
    %2288 = vmatprep.subr.bf16.mxu0 %v768
    %2289 = vmatpush1.bf16.msra.mxu0 %v767
    %2290 = vmatprep.subr.bf16.mxu0 0
    %2291 = vmatpush2.bf16.msra.mxu0 0
    %2292 = vmatprep.subr.bf16.mxu0 0
    %2293 = vmatpush2.bf16.msra.mxu0 0
    %2294 = vmatprep.subr.bf16.mxu0 0
    %2295 = vmatpush2.bf16.msra.mxu0 0
    %2296 = vmatprep.subr.bf16.mxu0 0
    %2297 = vmatpush2.bf16.msra.mxu0 0
    %2298 = vmatprep.subr.bf16.mxu0 0
    %2299 = vmatpush2.bf16.msra.mxu0 0
    %2300 = vmatprep.subr.bf16.mxu0 0
    %2301 = vmatpush2.bf16.msra.mxu0 0
    %2302 = vmatprep.subr.bf16.mxu0 0
    %2303 = vmatpush2.bf16.msra.mxu0 0
    %2304 = vmatprep.subr.bf16.mxu0 0
    %2305 = vmatpush2.bf16.msra.mxu0 0
    %2306 = vmatprep.mubr.bf16.mxu0 0
    %2307 = vmatmul.mubr.bf16.gmra.mxu0 %v2272
    %v2308 = vpop.f32.mrf.mxu0
    %v2309 = vadd.f32 0.0, %v2308
    %v2310 = vpop.f32.mrf.mxu0
    %v2311 = vadd.f32 0.0, %v2310
    %v2312 = vpop.f32.mrf.mxu0
    %v2313 = vpop.f32.mrf.mxu0
    %2314 = vdwg.mxu0
    %2315 = vmatprep.subr.bf16.mxu0 0
    %2316 = vmatpush1.bf16.msra.mxu0 0
    %2317 = vmatprep.subr.bf16.mxu0 0
    %2318 = vmatpush1.bf16.msra.mxu0 0
    %2319 = vmatprep.subr.bf16.mxu0 0
    %2320 = vmatpush1.bf16.msra.mxu0 0
    %2321 = vmatprep.subr.bf16.mxu0 0
    %2322 = vmatpush1.bf16.msra.mxu0 0
    %2323 = vmatprep.subr.bf16.mxu0 0
    %2324 = vmatpush1.bf16.msra.mxu0 0
    %2325 = vmatprep.subr.bf16.mxu0 0
    %2326 = vmatpush1.bf16.msra.mxu0 0
    %2327 = vmatprep.subr.bf16.mxu0 0
    %2328 = vmatpush1.bf16.msra.mxu0 %v772
    %2329 = vmatprep.subr.bf16.mxu0 0
    %2330 = vmatpush1.bf16.msra.mxu0 %v769
    %2331 = vmatprep.subr.bf16.mxu0 0
    %2332 = vmatpush2.bf16.msra.mxu0 0
    %2333 = vmatprep.subr.bf16.mxu0 0
    %2334 = vmatpush2.bf16.msra.mxu0 0
    %2335 = vmatprep.subr.bf16.mxu0 0
    %2336 = vmatpush2.bf16.msra.mxu0 0
    %2337 = vmatprep.subr.bf16.mxu0 0
    %2338 = vmatpush2.bf16.msra.mxu0 0
    %2339 = vmatprep.subr.bf16.mxu0 0
    %2340 = vmatpush2.bf16.msra.mxu0 0
    %2341 = vmatprep.subr.bf16.mxu0 0
    %2342 = vmatpush2.bf16.msra.mxu0 0
    %2343 = vmatprep.subr.bf16.mxu0 0
    %2344 = vmatpush2.bf16.msra.mxu0 0
    %2345 = vmatprep.subr.bf16.mxu0 0
    %2346 = vmatpush2.bf16.msra.mxu0 0
    %2347 = vmatprep.mubr.bf16.mxu0 0
    %2348 = vmatmul.mubr.bf16.gmra.mxu0 %v2272
    %v2349 = vpop.f32.mrf.mxu0
    %v2350 = vadd.f32 0.0, %v2349
    %v2351 = vpop.f32.mrf.mxu0
    %v2352 = vpop.f32.mrf.mxu0
    %v2353 = vpop.f32.mrf.mxu0
    %2354 = vdwg.mxu0
    %v2355 = vadd.f32 %v2225, %v2309
    %v2356 = vxor.u32 %v2355, 2147483648
    %v2357 = vmul.f32 %v2356, 1.442695
    %v2358 = vpow.pop %v2357
    %v2359 = vadd.f32 %v2358, 1.0
    %v2360 = vrcp.pop %v2359
    %v2361 = vmul.f32 1.0, %v2360
    %v2362 = vadd.f32 %v2227, %v2311
    %v2363 = vxor.u32 %v2362, 2147483648
    %v2364 = vmul.f32 %v2363, 1.442695
    %v2365 = vpow.pop %v2364
    %v2366 = vadd.f32 %v2365, 1.0
    %v2367 = vrcp.pop %v2366
    %v2368 = vmul.f32 1.0, %v2367
    %v2369 = vadd.f32 %v2350, %v168
    %v2370 = vmul.f32 %v2361, %v2369
    %v2371 = vadd.f32 %v2266, %v2370
    %v2372 = vtanh.pop %v2371
    %v2373 = vsub.f32 1.0, %v2368
    %v2374 = vmul.f32 %v2373, %v2372
    %v2375 = vmul.f32 %v2368, %v2077
    %v2376 = vadd.f32 %v2374, %v2375
    %v2377 = vpack.c.bf16 %v2376, %v2376
    %2378 = vst.msk [vmem:[#allocation3 + $0x30] sm:$0xff] %vm487, %v2376
    %v2379 = vld [vmem:[#allocation2 + $0x90] sm:$0xff]
    %v2380 = vld [vmem:[#allocation2 + $0x98] sm:$0xff]
    %v2381 = vld [vmem:[#allocation2 + $0xa0] sm:$0xff]
    %2382 = vmatprep.subr.bf16.mxu0 0
    %2383 = vmatpush1.bf16.msra.mxu0 0
    %2384 = vmatprep.subr.bf16.mxu0 0
    %2385 = vmatpush1.bf16.msra.mxu0 0
    %2386 = vmatprep.subr.bf16.mxu0 0
    %2387 = vmatpush1.bf16.msra.mxu0 0
    %2388 = vmatprep.subr.bf16.mxu0 0
    %2389 = vmatpush1.bf16.msra.mxu0 0
    %2390 = vmatprep.subr.bf16.mxu0 0
    %2391 = vmatpush1.bf16.msra.mxu0 0
    %2392 = vmatprep.subr.bf16.mxu0 0
    %2393 = vmatpush1.bf16.msra.mxu0 0
    %2394 = vmatprep.subr.bf16.mxu0 %v516
    %2395 = vmatpush1.bf16.msra.mxu0 %v515
    %2396 = vmatprep.subr.bf16.mxu0 %v513
    %2397 = vmatpush1.bf16.msra.mxu0 %v512
    %2398 = vmatprep.subr.bf16.mxu0 0
    %2399 = vmatpush2.bf16.msra.mxu0 0
    %2400 = vmatprep.subr.bf16.mxu0 0
    %2401 = vmatpush2.bf16.msra.mxu0 0
    %2402 = vmatprep.subr.bf16.mxu0 0
    %2403 = vmatpush2.bf16.msra.mxu0 0
    %2404 = vmatprep.subr.bf16.mxu0 0
    %2405 = vmatpush2.bf16.msra.mxu0 0
    %2406 = vmatprep.subr.bf16.mxu0 0
    %2407 = vmatpush2.bf16.msra.mxu0 0
    %2408 = vmatprep.subr.bf16.mxu0 0
    %2409 = vmatpush2.bf16.msra.mxu0 0
    %2410 = vmatprep.subr.bf16.mxu0 0
    %2411 = vmatpush2.bf16.msra.mxu0 0
    %2412 = vmatprep.subr.bf16.mxu0 0
    %2413 = vmatpush2.bf16.msra.mxu0 0
    %2414 = vmatprep.mubr.bf16.mxu0 0
    %2415 = vmatmul.mubr.bf16.gmra.mxu0 %v2188
    %v2416 = vpop.f32.mrf.mxu0
    %v2417 = vadd.f32 0.0, %v2416
    %v2418 = vpop.f32.mrf.mxu0
    %v2419 = vadd.f32 0.0, %v2418
    %v2420 = vpop.f32.mrf.mxu0
    %v2421 = vpop.f32.mrf.mxu0
    %2422 = vdwg.mxu0
    %2423 = vmatprep.subr.bf16.mxu0 0
    %2424 = vmatpush1.bf16.msra.mxu0 0
    %2425 = vmatprep.subr.bf16.mxu0 0
    %2426 = vmatpush1.bf16.msra.mxu0 0
    %2427 = vmatprep.subr.bf16.mxu0 0
    %2428 = vmatpush1.bf16.msra.mxu0 0
    %2429 = vmatprep.subr.bf16.mxu0 0
    %2430 = vmatpush1.bf16.msra.mxu0 0
    %2431 = vmatprep.subr.bf16.mxu0 0
    %2432 = vmatpush1.bf16.msra.mxu0 0
    %2433 = vmatprep.subr.bf16.mxu0 0
    %2434 = vmatpush1.bf16.msra.mxu0 0
    %2435 = vmatprep.subr.bf16.mxu0 0
    %2436 = vmatpush1.bf16.msra.mxu0 %v517
    %2437 = vmatprep.subr.bf16.mxu0 0
    %2438 = vmatpush1.bf16.msra.mxu0 %v514
    %2439 = vmatprep.subr.bf16.mxu0 0
    %2440 = vmatpush2.bf16.msra.mxu0 0
    %2441 = vmatprep.subr.bf16.mxu0 0
    %2442 = vmatpush2.bf16.msra.mxu0 0
    %2443 = vmatprep.subr.bf16.mxu0 0
    %2444 = vmatpush2.bf16.msra.mxu0 0
    %2445 = vmatprep.subr.bf16.mxu0 0
    %2446 = vmatpush2.bf16.msra.mxu0 0
    %2447 = vmatprep.subr.bf16.mxu0 0
    %2448 = vmatpush2.bf16.msra.mxu0 0
    %2449 = vmatprep.subr.bf16.mxu0 0
    %2450 = vmatpush2.bf16.msra.mxu0 0
    %2451 = vmatprep.subr.bf16.mxu0 0
    %2452 = vmatpush2.bf16.msra.mxu0 0
    %2453 = vmatprep.subr.bf16.mxu0 0
    %2454 = vmatpush2.bf16.msra.mxu0 0
    %2455 = vmatprep.mubr.bf16.mxu0 0
    %2456 = vmatmul.mubr.bf16.gmra.mxu0 %v2188
    %v2457 = vpop.f32.mrf.mxu0
    %v2458 = vadd.f32 0.0, %v2457
    %v2459 = vpop.f32.mrf.mxu0
    %v2460 = vpop.f32.mrf.mxu0
    %v2461 = vpop.f32.mrf.mxu0
    %2462 = vdwg.mxu0
    %v2463 = vadd.f32 %v2379, %v2417
    %v2464 = vxor.u32 %v2463, 2147483648
    %v2465 = vmul.f32 %v2464, 1.442695
    %v2466 = vpow.pop %v2465
    %v2467 = vadd.f32 %v2466, 1.0
    %v2468 = vrcp.pop %v2467
    %v2469 = vmul.f32 1.0, %v2468
    %v2470 = vadd.f32 %v2380, %v2419
    %v2471 = vxor.u32 %v2470, 2147483648
    %v2472 = vmul.f32 %v2471, 1.442695
    %v2473 = vpow.pop %v2472
    %v2474 = vadd.f32 %v2473, 1.0
    %v2475 = vrcp.pop %v2474
    %v2476 = vmul.f32 1.0, %v2475
    %v2477 = vadd.f32 %v2458, %v161
    %v2478 = vmul.f32 %v2469, %v2477
    %v2479 = vadd.f32 %v2381, %v2478
    %v2480 = vtanh.pop %v2479
    %v2481 = vsub.f32 1.0, %v2476
    %v2482 = vmul.f32 %v2481, %v2480
    %v2483 = vmul.f32 %v2476, %v2185
    %v2484 = vadd.f32 %v2482, %v2483
    %v2485 = vpack.c.bf16 %v2484, %v2484
    %v2487 = vsel %vm487, %v2485, 0
    %2489 = vmatprep.subr.bf16.mxu0 0
    %2490 = vmatpush1.bf16.msra.mxu0 0
    %2491 = vmatprep.subr.bf16.mxu0 0
    %2492 = vmatpush1.bf16.msra.mxu0 0
    %2493 = vmatprep.subr.bf16.mxu0 0
    %2494 = vmatpush1.bf16.msra.mxu0 0
    %2495 = vmatprep.subr.bf16.mxu0 0
    %2496 = vmatpush1.bf16.msra.mxu0 0
    %2497 = vmatprep.subr.bf16.mxu0 0
    %2498 = vmatpush1.bf16.msra.mxu0 0
    %2499 = vmatprep.subr.bf16.mxu0 0
    %2500 = vmatpush1.bf16.msra.mxu0 0
    %2501 = vmatprep.subr.bf16.mxu0 %v655
    %2502 = vmatpush1.bf16.msra.mxu0 %v654
    %2503 = vmatprep.subr.bf16.mxu0 %v652
    %2504 = vmatpush1.bf16.msra.mxu0 %v651
    %2505 = vmatprep.subr.bf16.mxu0 0
    %2506 = vmatpush2.bf16.msra.mxu0 0
    %2507 = vmatprep.subr.bf16.mxu0 0
    %2508 = vmatpush2.bf16.msra.mxu0 0
    %2509 = vmatprep.subr.bf16.mxu0 0
    %2510 = vmatpush2.bf16.msra.mxu0 0
    %2511 = vmatprep.subr.bf16.mxu0 0
    %2512 = vmatpush2.bf16.msra.mxu0 0
    %2513 = vmatprep.subr.bf16.mxu0 0
    %2514 = vmatpush2.bf16.msra.mxu0 0
    %2515 = vmatprep.subr.bf16.mxu0 0
    %2516 = vmatpush2.bf16.msra.mxu0 0
    %2517 = vmatprep.subr.bf16.mxu0 0
    %2518 = vmatpush2.bf16.msra.mxu0 0
    %2519 = vmatprep.subr.bf16.mxu0 0
    %2520 = vmatpush2.bf16.msra.mxu0 0
    %2521 = vmatprep.mubr.bf16.mxu0 0
    %2522 = vmatmul.mubr.bf16.gmra.mxu0 %v2487
    %v2523 = vpop.f32.mrf.mxu0
    %v2524 = vadd.f32 %v174, %v2523
    %v2525 = vpop.f32.mrf.mxu0
    %v2526 = vadd.f32 %v178, %v2525
    %v2527 = vpop.f32.mrf.mxu0
    %v2528 = vpop.f32.mrf.mxu0
    %2529 = vdwg.mxu0
    %2530 = vmatprep.subr.bf16.mxu0 0
    %2531 = vmatpush1.bf16.msra.mxu0 0
    %2532 = vmatprep.subr.bf16.mxu0 0
    %2533 = vmatpush1.bf16.msra.mxu0 0
    %2534 = vmatprep.subr.bf16.mxu0 0
    %2535 = vmatpush1.bf16.msra.mxu0 0
    %2536 = vmatprep.subr.bf16.mxu0 0
    %2537 = vmatpush1.bf16.msra.mxu0 0
    %2538 = vmatprep.subr.bf16.mxu0 0
    %2539 = vmatpush1.bf16.msra.mxu0 0
    %2540 = vmatprep.subr.bf16.mxu0 0
    %2541 = vmatpush1.bf16.msra.mxu0 0
    %2542 = vmatprep.subr.bf16.mxu0 0
    %2543 = vmatpush1.bf16.msra.mxu0 %v656
    %2544 = vmatprep.subr.bf16.mxu0 0
    %2545 = vmatpush1.bf16.msra.mxu0 %v653
    %2546 = vmatprep.subr.bf16.mxu0 0
    %2547 = vmatpush2.bf16.msra.mxu0 0
    %2548 = vmatprep.subr.bf16.mxu0 0
    %2549 = vmatpush2.bf16.msra.mxu0 0
    %2550 = vmatprep.subr.bf16.mxu0 0
    %2551 = vmatpush2.bf16.msra.mxu0 0
    %2552 = vmatprep.subr.bf16.mxu0 0
    %2553 = vmatpush2.bf16.msra.mxu0 0
    %2554 = vmatprep.subr.bf16.mxu0 0
    %2555 = vmatpush2.bf16.msra.mxu0 0
    %2556 = vmatprep.subr.bf16.mxu0 0
    %2557 = vmatpush2.bf16.msra.mxu0 0
    %2558 = vmatprep.subr.bf16.mxu0 0
    %2559 = vmatpush2.bf16.msra.mxu0 0
    %2560 = vmatprep.subr.bf16.mxu0 0
    %2561 = vmatpush2.bf16.msra.mxu0 0
    %2562 = vmatprep.mubr.bf16.mxu0 0
    %2563 = vmatmul.mubr.bf16.gmra.mxu0 %v2487
    %v2564 = vpop.f32.mrf.mxu0
    %v2565 = vadd.f32 %v182, %v2564
    %v2566 = vpop.f32.mrf.mxu0
    %v2567 = vpop.f32.mrf.mxu0
    %v2568 = vpop.f32.mrf.mxu0
    %2569 = vdwg.mxu0
    %v2571 = vsel %vm487, %v2377, 0
    %2573 = vmatprep.subr.bf16.mxu0 0
    %2574 = vmatpush1.bf16.msra.mxu0 0
    %2575 = vmatprep.subr.bf16.mxu0 0
    %2576 = vmatpush1.bf16.msra.mxu0 0
    %2577 = vmatprep.subr.bf16.mxu0 0
    %2578 = vmatpush1.bf16.msra.mxu0 0
    %2579 = vmatprep.subr.bf16.mxu0 0
    %2580 = vmatpush1.bf16.msra.mxu0 0
    %2581 = vmatprep.subr.bf16.mxu0 0
    %2582 = vmatpush1.bf16.msra.mxu0 0
    %2583 = vmatprep.subr.bf16.mxu0 0
    %2584 = vmatpush1.bf16.msra.mxu0 0
    %2585 = vmatprep.subr.bf16.mxu0 %v771
    %2586 = vmatpush1.bf16.msra.mxu0 %v770
    %2587 = vmatprep.subr.bf16.mxu0 %v768
    %2588 = vmatpush1.bf16.msra.mxu0 %v767
    %2589 = vmatprep.subr.bf16.mxu0 0
    %2590 = vmatpush2.bf16.msra.mxu0 0
    %2591 = vmatprep.subr.bf16.mxu0 0
    %2592 = vmatpush2.bf16.msra.mxu0 0
    %2593 = vmatprep.subr.bf16.mxu0 0
    %2594 = vmatpush2.bf16.msra.mxu0 0
    %2595 = vmatprep.subr.bf16.mxu0 0
    %2596 = vmatpush2.bf16.msra.mxu0 0
    %2597 = vmatprep.subr.bf16.mxu0 0
    %2598 = vmatpush2.bf16.msra.mxu0 0
    %2599 = vmatprep.subr.bf16.mxu0 0
    %2600 = vmatpush2.bf16.msra.mxu0 0
    %2601 = vmatprep.subr.bf16.mxu0 0
    %2602 = vmatpush2.bf16.msra.mxu0 0
    %2603 = vmatprep.subr.bf16.mxu0 0
    %2604 = vmatpush2.bf16.msra.mxu0 0
    %2605 = vmatprep.mubr.bf16.mxu0 0
    %2606 = vmatmul.mubr.bf16.gmra.mxu0 %v2571
    %v2607 = vpop.f32.mrf.mxu0
    %v2608 = vadd.f32 0.0, %v2607
    %v2609 = vpop.f32.mrf.mxu0
    %v2610 = vadd.f32 0.0, %v2609
    %v2611 = vpop.f32.mrf.mxu0
    %v2612 = vpop.f32.mrf.mxu0
    %2613 = vdwg.mxu0
    %2614 = vmatprep.subr.bf16.mxu0 0
    %2615 = vmatpush1.bf16.msra.mxu0 0
    %2616 = vmatprep.subr.bf16.mxu0 0
    %2617 = vmatpush1.bf16.msra.mxu0 0
    %2618 = vmatprep.subr.bf16.mxu0 0
    %2619 = vmatpush1.bf16.msra.mxu0 0
    %2620 = vmatprep.subr.bf16.mxu0 0
    %2621 = vmatpush1.bf16.msra.mxu0 0
    %2622 = vmatprep.subr.bf16.mxu0 0
    %2623 = vmatpush1.bf16.msra.mxu0 0
    %2624 = vmatprep.subr.bf16.mxu0 0
    %2625 = vmatpush1.bf16.msra.mxu0 0
    %2626 = vmatprep.subr.bf16.mxu0 0
    %2627 = vmatpush1.bf16.msra.mxu0 %v772
    %2628 = vmatprep.subr.bf16.mxu0 0
    %2629 = vmatpush1.bf16.msra.mxu0 %v769
    %2630 = vmatprep.subr.bf16.mxu0 0
    %2631 = vmatpush2.bf16.msra.mxu0 0
    %2632 = vmatprep.subr.bf16.mxu0 0
    %2633 = vmatpush2.bf16.msra.mxu0 0
    %2634 = vmatprep.subr.bf16.mxu0 0
    %2635 = vmatpush2.bf16.msra.mxu0 0
    %2636 = vmatprep.subr.bf16.mxu0 0
    %2637 = vmatpush2.bf16.msra.mxu0 0
    %2638 = vmatprep.subr.bf16.mxu0 0
    %2639 = vmatpush2.bf16.msra.mxu0 0
    %2640 = vmatprep.subr.bf16.mxu0 0
    %2641 = vmatpush2.bf16.msra.mxu0 0
    %2642 = vmatprep.subr.bf16.mxu0 0
    %2643 = vmatpush2.bf16.msra.mxu0 0
    %2644 = vmatprep.subr.bf16.mxu0 0
    %2645 = vmatpush2.bf16.msra.mxu0 0
    %2646 = vmatprep.mubr.bf16.mxu0 0
    %2647 = vmatmul.mubr.bf16.gmra.mxu0 %v2571
    %v2648 = vpop.f32.mrf.mxu0
    %v2649 = vadd.f32 0.0, %v2648
    %v2650 = vpop.f32.mrf.mxu0
    %v2651 = vpop.f32.mrf.mxu0
    %v2652 = vpop.f32.mrf.mxu0
    %2653 = vdwg.mxu0
    %v2654 = vadd.f32 %v2524, %v2608
    %v2655 = vxor.u32 %v2654, 2147483648
    %v2656 = vmul.f32 %v2655, 1.442695
    %v2657 = vpow.pop %v2656
    %v2658 = vadd.f32 %v2657, 1.0
    %v2659 = vrcp.pop %v2658
    %v2660 = vmul.f32 1.0, %v2659
    %v2661 = vadd.f32 %v2526, %v2610
    %v2662 = vxor.u32 %v2661, 2147483648
    %v2663 = vmul.f32 %v2662, 1.442695
    %v2664 = vpow.pop %v2663
    %v2665 = vadd.f32 %v2664, 1.0
    %v2666 = vrcp.pop %v2665
    %v2667 = vmul.f32 1.0, %v2666
    %v2668 = vadd.f32 %v2649, %v168
    %v2669 = vmul.f32 %v2660, %v2668
    %v2670 = vadd.f32 %v2565, %v2669
    %v2671 = vtanh.pop %v2670
    %v2672 = vsub.f32 1.0, %v2667
    %v2673 = vmul.f32 %v2672, %v2671
    %v2674 = vmul.f32 %v2667, %v2376
    %v2675 = vadd.f32 %v2673, %v2674
    %2676 = vst.msk [vmem:[#allocation3 + $0x38] sm:$0xff] %vm487, %v2675
    %v2677 = vld [vmem:[#allocation3] sm:$0xff]
    %v2678 = vld [vmem:[#allocation3 + $0x8] sm:$0xff]
    %v2679 = vld [vmem:[#allocation3 + $0x10] sm:$0xff]
    %v2680 = vld [vmem:[#allocation3 + $0x18] sm:$0xff]
    %v2681 = vld [vmem:[#allocation3 + $0x20] sm:$0xff]
    %v2682 = vld [vmem:[#allocation3 + $0x28] sm:$0xff]
    %v2683 = vld [vmem:[#allocation3 + $0x30] sm:$0xff]
    %v2684 = vld [vmem:[#allocation3 + $0x38] sm:$0xff]
    %v2685 = vld [vmem:[#allocation7] sm:$0x1]
    %v2687 = vlaneseq
    %v2688 = vshrl.u32 %v2687, 7
    %v2689 = vsub.s32 0, %v2688
    %v2690 = vrot.slane %v2685, %v2689
    %v2692 = vld [vmem:[#allocation10] sm:$0x1]
    %v2694 = vlaneseq
    %v2695 = vshrl.u32 %v2694, 7
    %v2696 = vsub.s32 0, %v2695
    %v2697 = vrot.slane %v2692, %v2696
    %v2699 = vld [vmem:[#allocation12] sm:$0x1]
    %v2701 = vlaneseq
    %v2702 = vshrl.u32 %v2701, 7
    %v2703 = vsub.s32 0, %v2702
    %v2704 = vrot.slane %v2699, %v2703
    %v2706 = vld [vmem:[#allocation4] sm:$0xff]
    %v2707 = vld [vmem:[#allocation4 + $0x8] sm:$0xff]
    %v2708 = vld [vmem:[#allocation4 + $0x10] sm:$0xff]
    %v2709 = vld [vmem:[#allocation4 + $0x18] sm:$0xff]
    %v2711 = vsel %vm487, %v2677, 0
    %v2714 = vsel %vm487, %v2678, 0
    %v2717 = vsel %vm487, %v2679, 0
    %v2720 = vsel %vm487, %v2680, 0
    %v2723 = vsel %vm487, %v2681, 0
    %v2726 = vsel %vm487, %v2682, 0
    %v2729 = vsel %vm487, %v2683, 0
    %v2732 = vsel %vm487, %v2684, 0
    %2734 = vmatprep.subr.mxu0 0.0
    %2735 = vmatpush1.msra.mxu0 0.0
    %2736 = vmatprep.subr.mxu0 0.0
    %2737 = vmatpush1.msra.mxu0 0.0
    %2738 = vmatprep.subr.mxu0 0.0
    %2739 = vmatpush1.msra.mxu0 0.0
    %2740 = vmatprep.subr.mxu0 0.0
    %2741 = vmatpush1.msra.mxu0 0.0
    %2742 = vmatprep.subr.mxu0 0.0
    %2743 = vmatpush1.msra.mxu0 0.0
    %2744 = vmatprep.subr.mxu0 0.0
    %2745 = vmatpush1.msra.mxu0 0.0
    %2746 = vmatprep.subr.mxu0 0.0
    %2747 = vmatpush1.msra.mxu0 0.0
    %2748 = vmatprep.subr.mxu0 0.0
    %2749 = vmatpush1.msra.mxu0 0.0
    %2750 = vmatprep.subr.mxu0 0.0
    %2751 = vmatpush1.msra.mxu0 0.0
    %2752 = vmatprep.subr.mxu0 0.0
    %2753 = vmatpush1.msra.mxu0 0.0
    %2754 = vmatprep.subr.mxu0 0.0
    %2755 = vmatpush1.msra.mxu0 0.0
    %2756 = vmatprep.subr.mxu0 0.0
    %2757 = vmatpush1.msra.mxu0 0.0
    %2758 = vmatprep.subr.mxu0 0.0
    %2759 = vmatpush1.msra.mxu0 %v2709
    %2760 = vmatprep.subr.mxu0 0.0
    %2761 = vmatpush1.msra.mxu0 %v2708
    %2762 = vmatprep.subr.mxu0 0.0
    %2763 = vmatpush1.msra.mxu0 %v2707
    %2764 = vmatprep.subr.mxu0 0.0
    %2765 = vmatpush1.msra.mxu0 %v2706
    %2766 = vmatprep.subr.mxu0 0.0
    %2767 = vmatpush2.msra.mxu0 0.0
    %2768 = vmatprep.subr.mxu0 0.0
    %2769 = vmatpush2.msra.mxu0 0.0
    %2770 = vmatprep.subr.mxu0 0.0
    %2771 = vmatpush2.msra.mxu0 0.0
    %2772 = vmatprep.subr.mxu0 0.0
    %2773 = vmatpush2.msra.mxu0 0.0
    %2774 = vmatprep.subr.mxu0 0.0
    %2775 = vmatpush2.msra.mxu0 0.0
    %2776 = vmatprep.subr.mxu0 0.0
    %2777 = vmatpush2.msra.mxu0 0.0
    %2778 = vmatprep.subr.mxu0 0.0
    %2779 = vmatpush2.msra.mxu0 0.0
    %2780 = vmatprep.subr.mxu0 0.0
    %2781 = vmatpush2.msra.mxu0 0.0
    %2782 = vmatprep.subr.mxu0 0.0
    %2783 = vmatpush2.msra.mxu0 0.0
    %2784 = vmatprep.subr.mxu0 0.0
    %2785 = vmatpush2.msra.mxu0 0.0
    %2786 = vmatprep.subr.mxu0 0.0
    %2787 = vmatpush2.msra.mxu0 0.0
    %2788 = vmatprep.subr.mxu0 0.0
    %2789 = vmatpush2.msra.mxu0 0.0
    %2790 = vmatprep.subr.mxu0 0.0
    %2791 = vmatpush2.msra.mxu0 0.0
    %2792 = vmatprep.subr.mxu0 0.0
    %2793 = vmatpush2.msra.mxu0 0.0
    %2794 = vmatprep.subr.mxu0 0.0
    %2795 = vmatpush2.msra.mxu0 0.0
    %2796 = vmatprep.subr.mxu0 0.0
    %2797 = vmatpush2.msra.mxu0 0.0
    %2798 = vmatprep.mubr.f32.mxu0 0.0
    %2799 = vmatmul.mubr.f32.gmra.mxu0 %v2711
    %v2800 = vpop.f32.mrf.mxu0
    %v2801 = vadd.f32 %v2690, %v2800
    %v2802 = vpop.f32.mrf.mxu0
    %2803 = vmatprep.mubr.f32.mxu0 0.0
    %2804 = vmatmul.mubr.f32.gmra.mxu0 %v2714
    %v2805 = vpop.f32.mrf.mxu0
    %v2806 = vadd.f32 %v2690, %v2805
    %v2807 = vpop.f32.mrf.mxu0
    %2808 = vmatprep.mubr.f32.mxu0 0.0
    %2809 = vmatmul.mubr.f32.gmra.mxu0 %v2717
    %v2810 = vpop.f32.mrf.mxu0
    %v2811 = vadd.f32 %v2690, %v2810
    %v2812 = vpop.f32.mrf.mxu0
    %2813 = vmatprep.mubr.f32.mxu0 0.0
    %2814 = vmatmul.mubr.f32.gmra.mxu0 %v2720
    %v2815 = vpop.f32.mrf.mxu0
    %v2816 = vadd.f32 %v2690, %v2815
    %v2817 = vpop.f32.mrf.mxu0
    %2818 = vmatprep.mubr.f32.mxu0 0.0
    %2819 = vmatmul.mubr.f32.gmra.mxu0 %v2723
    %v2820 = vpop.f32.mrf.mxu0
    %v2821 = vadd.f32 %v2690, %v2820
    %v2822 = vpop.f32.mrf.mxu0
    %2823 = vmatprep.mubr.f32.mxu0 0.0
    %2824 = vmatmul.mubr.f32.gmra.mxu0 %v2726
    %v2825 = vpop.f32.mrf.mxu0
    %v2826 = vadd.f32 %v2690, %v2825
    %v2827 = vpop.f32.mrf.mxu0
    %2828 = vmatprep.mubr.f32.mxu0 0.0
    %2829 = vmatmul.mubr.f32.gmra.mxu0 %v2729
    %v2830 = vpop.f32.mrf.mxu0
    %v2831 = vadd.f32 %v2690, %v2830
    %v2832 = vpop.f32.mrf.mxu0
    %2833 = vmatprep.mubr.f32.mxu0 0.0
    %2834 = vmatmul.mubr.f32.gmra.mxu0 %v2732
    %v2835 = vpop.f32.mrf.mxu0
    %v2836 = vadd.f32 %v2690, %v2835
    %v2837 = vpop.f32.mrf.mxu0
    %2838 = vdwg.mxu0
    %v2839 = vmax.f32 %v2801, 0.0
    %v2840 = vmax.f32 %v2806, 0.0
    %v2841 = vmax.f32 %v2811, 0.0
    %v2842 = vmax.f32 %v2816, 0.0
    %v2843 = vmax.f32 %v2821, 0.0
    %v2844 = vmax.f32 %v2826, 0.0
    %v2845 = vmax.f32 %v2831, 0.0
    %v2846 = vmax.f32 %v2836, 0.0
    %v2847 = vld [vmem:[#allocation9] sm:$0xff]
    %v2848 = vld [vmem:[#allocation9 + $0x8] sm:$0xff]
    %v2849 = vld [vmem:[#allocation9 + $0x10] sm:$0xff]
    %v2850 = vld [vmem:[#allocation9 + $0x18] sm:$0xff]
    %v2852 = vsel %vm487, %v2839, 0
    %v2855 = vsel %vm487, %v2840, 0
    %v2858 = vsel %vm487, %v2841, 0
    %v2861 = vsel %vm487, %v2842, 0
    %v2864 = vsel %vm487, %v2843, 0
    %v2867 = vsel %vm487, %v2844, 0
    %v2870 = vsel %vm487, %v2845, 0
    %v2873 = vsel %vm487, %v2846, 0
    %2875 = vmatprep.subr.mxu0 0.0
    %2876 = vmatpush1.msra.mxu0 0.0
    %2877 = vmatprep.subr.mxu0 0.0
    %2878 = vmatpush1.msra.mxu0 0.0
    %2879 = vmatprep.subr.mxu0 0.0
    %2880 = vmatpush1.msra.mxu0 0.0
    %2881 = vmatprep.subr.mxu0 0.0
    %2882 = vmatpush1.msra.mxu0 0.0
    %2883 = vmatprep.subr.mxu0 0.0
    %2884 = vmatpush1.msra.mxu0 0.0
    %2885 = vmatprep.subr.mxu0 0.0
    %2886 = vmatpush1.msra.mxu0 0.0
    %2887 = vmatprep.subr.mxu0 0.0
    %2888 = vmatpush1.msra.mxu0 0.0
    %2889 = vmatprep.subr.mxu0 0.0
    %2890 = vmatpush1.msra.mxu0 0.0
    %2891 = vmatprep.subr.mxu0 0.0
    %2892 = vmatpush1.msra.mxu0 0.0
    %2893 = vmatprep.subr.mxu0 0.0
    %2894 = vmatpush1.msra.mxu0 0.0
    %2895 = vmatprep.subr.mxu0 0.0
    %2896 = vmatpush1.msra.mxu0 0.0
    %2897 = vmatprep.subr.mxu0 0.0
    %2898 = vmatpush1.msra.mxu0 0.0
    %2899 = vmatprep.subr.mxu0 0.0
    %2900 = vmatpush1.msra.mxu0 %v2850
    %2901 = vmatprep.subr.mxu0 0.0
    %2902 = vmatpush1.msra.mxu0 %v2849
    %2903 = vmatprep.subr.mxu0 0.0
    %2904 = vmatpush1.msra.mxu0 %v2848
    %2905 = vmatprep.subr.mxu0 0.0
    %2906 = vmatpush1.msra.mxu0 %v2847
    %2907 = vmatprep.subr.mxu0 0.0
    %2908 = vmatpush2.msra.mxu0 0.0
    %2909 = vmatprep.subr.mxu0 0.0
    %2910 = vmatpush2.msra.mxu0 0.0
    %2911 = vmatprep.subr.mxu0 0.0
    %2912 = vmatpush2.msra.mxu0 0.0
    %2913 = vmatprep.subr.mxu0 0.0
    %2914 = vmatpush2.msra.mxu0 0.0
    %2915 = vmatprep.subr.mxu0 0.0
    %2916 = vmatpush2.msra.mxu0 0.0
    %2917 = vmatprep.subr.mxu0 0.0
    %2918 = vmatpush2.msra.mxu0 0.0
    %2919 = vmatprep.subr.mxu0 0.0
    %2920 = vmatpush2.msra.mxu0 0.0
    %2921 = vmatprep.subr.mxu0 0.0
    %2922 = vmatpush2.msra.mxu0 0.0
    %2923 = vmatprep.subr.mxu0 0.0
    %2924 = vmatpush2.msra.mxu0 0.0
    %2925 = vmatprep.subr.mxu0 0.0
    %2926 = vmatpush2.msra.mxu0 0.0
    %2927 = vmatprep.subr.mxu0 0.0
    %2928 = vmatpush2.msra.mxu0 0.0
    %2929 = vmatprep.subr.mxu0 0.0
    %2930 = vmatpush2.msra.mxu0 0.0
    %2931 = vmatprep.subr.mxu0 0.0
    %2932 = vmatpush2.msra.mxu0 0.0
    %2933 = vmatprep.subr.mxu0 0.0
    %2934 = vmatpush2.msra.mxu0 0.0
    %2935 = vmatprep.subr.mxu0 0.0
    %2936 = vmatpush2.msra.mxu0 0.0
    %2937 = vmatprep.subr.mxu0 0.0
    %2938 = vmatpush2.msra.mxu0 0.0
    %2939 = vmatprep.mubr.f32.mxu0 0.0
    %2940 = vmatmul.mubr.f32.gmra.mxu0 %v2852
    %v2941 = vpop.f32.mrf.mxu0
    %v2942 = vadd.f32 %v2697, %v2941
    %v2943 = vpop.f32.mrf.mxu0
    %2944 = vmatprep.mubr.f32.mxu0 0.0
    %2945 = vmatmul.mubr.f32.gmra.mxu0 %v2855
    %v2946 = vpop.f32.mrf.mxu0
    %v2947 = vadd.f32 %v2697, %v2946
    %v2948 = vpop.f32.mrf.mxu0
    %2949 = vmatprep.mubr.f32.mxu0 0.0
    %2950 = vmatmul.mubr.f32.gmra.mxu0 %v2858
    %v2951 = vpop.f32.mrf.mxu0
    %v2952 = vadd.f32 %v2697, %v2951
    %v2953 = vpop.f32.mrf.mxu0
    %2954 = vmatprep.mubr.f32.mxu0 0.0
    %2955 = vmatmul.mubr.f32.gmra.mxu0 %v2861
    %v2956 = vpop.f32.mrf.mxu0
    %v2957 = vadd.f32 %v2697, %v2956
    %v2958 = vpop.f32.mrf.mxu0
    %2959 = vmatprep.mubr.f32.mxu0 0.0
    %2960 = vmatmul.mubr.f32.gmra.mxu0 %v2864
    %v2961 = vpop.f32.mrf.mxu0
    %v2962 = vadd.f32 %v2697, %v2961
    %v2963 = vpop.f32.mrf.mxu0
    %2964 = vmatprep.mubr.f32.mxu0 0.0
    %2965 = vmatmul.mubr.f32.gmra.mxu0 %v2867
    %v2966 = vpop.f32.mrf.mxu0
    %v2967 = vadd.f32 %v2697, %v2966
    %v2968 = vpop.f32.mrf.mxu0
    %2969 = vmatprep.mubr.f32.mxu0 0.0
    %2970 = vmatmul.mubr.f32.gmra.mxu0 %v2870
    %v2971 = vpop.f32.mrf.mxu0
    %v2972 = vadd.f32 %v2697, %v2971
    %v2973 = vpop.f32.mrf.mxu0
    %2974 = vmatprep.mubr.f32.mxu0 0.0
    %2975 = vmatmul.mubr.f32.gmra.mxu0 %v2873
    %v2976 = vpop.f32.mrf.mxu0
    %v2977 = vadd.f32 %v2697, %v2976
    %v2978 = vpop.f32.mrf.mxu0
    %2979 = vdwg.mxu0
    %v2980 = vmax.f32 %v2942, 0.0
    %v2981 = vmax.f32 %v2947, 0.0
    %v2982 = vmax.f32 %v2952, 0.0
    %v2983 = vmax.f32 %v2957, 0.0
    %v2984 = vmax.f32 %v2962, 0.0
    %v2985 = vmax.f32 %v2967, 0.0
    %v2986 = vmax.f32 %v2972, 0.0
    %v2987 = vmax.f32 %v2977, 0.0
    %v2988 = vld [vmem:[%s5] sm:$0xff]
    %v2989 = vld [vmem:[%s5 + $0x8] sm:$0xff]
    %v2990 = vld [vmem:[%s5 + $0x10] sm:$0xff]
    %v2991 = vld [vmem:[%s5 + $0x18] sm:$0xff]
    %v2993 = vsel %vm487, %v2980, 0
    %v2996 = vsel %vm487, %v2981, 0
    %v2999 = vsel %vm487, %v2982, 0
    %v3002 = vsel %vm487, %v2983, 0
    %v3005 = vsel %vm487, %v2984, 0
    %v3008 = vsel %vm487, %v2985, 0
    %v3011 = vsel %vm487, %v2986, 0
    %v3014 = vsel %vm487, %v2987, 0
    %3016 = vmatprep.subr.mxu0 0.0
    %3017 = vmatpush1.msra.mxu0 0.0
    %3018 = vmatprep.subr.mxu0 0.0
    %3019 = vmatpush1.msra.mxu0 0.0
    %3020 = vmatprep.subr.mxu0 0.0
    %3021 = vmatpush1.msra.mxu0 0.0
    %3022 = vmatprep.subr.mxu0 0.0
    %3023 = vmatpush1.msra.mxu0 0.0
    %3024 = vmatprep.subr.mxu0 0.0
    %3025 = vmatpush1.msra.mxu0 0.0
    %3026 = vmatprep.subr.mxu0 0.0
    %3027 = vmatpush1.msra.mxu0 0.0
    %3028 = vmatprep.subr.mxu0 0.0
    %3029 = vmatpush1.msra.mxu0 0.0
    %3030 = vmatprep.subr.mxu0 0.0
    %3031 = vmatpush1.msra.mxu0 0.0
    %3032 = vmatprep.subr.mxu0 0.0
    %3033 = vmatpush1.msra.mxu0 0.0
    %3034 = vmatprep.subr.mxu0 0.0
    %3035 = vmatpush1.msra.mxu0 0.0
    %3036 = vmatprep.subr.mxu0 0.0
    %3037 = vmatpush1.msra.mxu0 0.0
    %3038 = vmatprep.subr.mxu0 0.0
    %3039 = vmatpush1.msra.mxu0 0.0
    %3040 = vmatprep.subr.mxu0 0.0
    %3041 = vmatpush1.msra.mxu0 %v2991
    %3042 = vmatprep.subr.mxu0 0.0
    %3043 = vmatpush1.msra.mxu0 %v2990
    %3044 = vmatprep.subr.mxu0 0.0
    %3045 = vmatpush1.msra.mxu0 %v2989
    %3046 = vmatprep.subr.mxu0 0.0
    %3047 = vmatpush1.msra.mxu0 %v2988
    %3048 = vmatprep.subr.mxu0 0.0
    %3049 = vmatpush2.msra.mxu0 0.0
    %3050 = vmatprep.subr.mxu0 0.0
    %3051 = vmatpush2.msra.mxu0 0.0
    %3052 = vmatprep.subr.mxu0 0.0
    %3053 = vmatpush2.msra.mxu0 0.0
    %3054 = vmatprep.subr.mxu0 0.0
    %3055 = vmatpush2.msra.mxu0 0.0
    %3056 = vmatprep.subr.mxu0 0.0
    %3057 = vmatpush2.msra.mxu0 0.0
    %3058 = vmatprep.subr.mxu0 0.0
    %3059 = vmatpush2.msra.mxu0 0.0
    %3060 = vmatprep.subr.mxu0 0.0
    %3061 = vmatpush2.msra.mxu0 0.0
    %3062 = vmatprep.subr.mxu0 0.0
    %3063 = vmatpush2.msra.mxu0 0.0
    %3064 = vmatprep.subr.mxu0 0.0
    %3065 = vmatpush2.msra.mxu0 0.0
    %3066 = vmatprep.subr.mxu0 0.0
    %3067 = vmatpush2.msra.mxu0 0.0
    %3068 = vmatprep.subr.mxu0 0.0
    %3069 = vmatpush2.msra.mxu0 0.0
    %3070 = vmatprep.subr.mxu0 0.0
    %3071 = vmatpush2.msra.mxu0 0.0
    %3072 = vmatprep.subr.mxu0 0.0
    %3073 = vmatpush2.msra.mxu0 0.0
    %3074 = vmatprep.subr.mxu0 0.0
    %3075 = vmatpush2.msra.mxu0 0.0
    %3076 = vmatprep.subr.mxu0 0.0
    %3077 = vmatpush2.msra.mxu0 0.0
    %3078 = vmatprep.subr.mxu0 0.0
    %3079 = vmatpush2.msra.mxu0 0.0
    %3080 = vmatprep.mubr.f32.mxu0 0.0
    %3081 = vmatmul.mubr.f32.gmra.mxu0 %v2993
    %v3082 = vpop.f32.mrf.mxu0
    %v3083 = vadd.f32 %v2704, %v3082
    %v3084 = vpop.f32.mrf.mxu0
    %3085 = vmatprep.mubr.f32.mxu0 0.0
    %3086 = vmatmul.mubr.f32.gmra.mxu0 %v2996
    %v3087 = vpop.f32.mrf.mxu0
    %v3088 = vadd.f32 %v2704, %v3087
    %v3089 = vpop.f32.mrf.mxu0
    %3090 = vmatprep.mubr.f32.mxu0 0.0
    %3091 = vmatmul.mubr.f32.gmra.mxu0 %v2999
    %v3092 = vpop.f32.mrf.mxu0
    %v3093 = vadd.f32 %v2704, %v3092
    %v3094 = vpop.f32.mrf.mxu0
    %3095 = vmatprep.mubr.f32.mxu0 0.0
    %3096 = vmatmul.mubr.f32.gmra.mxu0 %v3002
    %v3097 = vpop.f32.mrf.mxu0
    %v3098 = vadd.f32 %v2704, %v3097
    %v3099 = vpop.f32.mrf.mxu0
    %3100 = vmatprep.mubr.f32.mxu0 0.0
    %3101 = vmatmul.mubr.f32.gmra.mxu0 %v3005
    %v3102 = vpop.f32.mrf.mxu0
    %v3103 = vadd.f32 %v2704, %v3102
    %v3104 = vpop.f32.mrf.mxu0
    %3105 = vmatprep.mubr.f32.mxu0 0.0
    %3106 = vmatmul.mubr.f32.gmra.mxu0 %v3008
    %v3107 = vpop.f32.mrf.mxu0
    %v3108 = vadd.f32 %v2704, %v3107
    %v3109 = vpop.f32.mrf.mxu0
    %3110 = vmatprep.mubr.f32.mxu0 0.0
    %3111 = vmatmul.mubr.f32.gmra.mxu0 %v3011
    %v3112 = vpop.f32.mrf.mxu0
    %v3113 = vadd.f32 %v2704, %v3112
    %v3114 = vpop.f32.mrf.mxu0
    %3115 = vmatprep.mubr.f32.mxu0 0.0
    %3116 = vmatmul.mubr.f32.gmra.mxu0 %v3014
    %v3117 = vpop.f32.mrf.mxu0
    %v3118 = vadd.f32 %v2704, %v3117
    %v3119 = vpop.f32.mrf.mxu0
    %3120 = vdwg.mxu0
    %vm3121 = vcmp.gt.f32.partialorder %v3083, 20.0
    %vm3122 = vcmp.gt.f32.partialorder %v3088, 20.0
    %vm3123 = vcmp.gt.f32.partialorder %v3093, 20.0
    %vm3124 = vcmp.gt.f32.partialorder %v3098, 20.0
    %vm3125 = vcmp.gt.f32.partialorder %v3103, 20.0
    %vm3126 = vcmp.gt.f32.partialorder %v3108, 20.0
    %vm3127 = vcmp.gt.f32.partialorder %v3113, 20.0
    %vm3128 = vcmp.gt.f32.partialorder %v3118, 20.0
    %v3129 = vmin.f32 %v3083, 20.0
    %v3130 = vmin.f32 %v3088, 20.0
    %v3131 = vmin.f32 %v3093, 20.0
    %v3132 = vmin.f32 %v3098, 20.0
    %v3133 = vmin.f32 %v3103, 20.0
    %v3134 = vmin.f32 %v3108, 20.0
    %v3135 = vmin.f32 %v3113, 20.0
    %v3136 = vmin.f32 %v3118, 20.0
    %v3137 = vmul.f32 %v3129, 1.442695
    %v3138 = vpow.pop %v3137
    %v3139 = vmul.f32 %v3130, 1.442695
    %v3140 = vpow.pop %v3139
    %v3141 = vmul.f32 %v3131, 1.442695
    %v3142 = vpow.pop %v3141
    %v3143 = vmul.f32 %v3132, 1.442695
    %v3144 = vpow.pop %v3143
    %v3145 = vmul.f32 %v3133, 1.442695
    %v3146 = vpow.pop %v3145
    %v3147 = vmul.f32 %v3134, 1.442695
    %v3148 = vpow.pop %v3147
    %v3149 = vmul.f32 %v3135, 1.442695
    %v3150 = vpow.pop %v3149
    %v3151 = vmul.f32 %v3136, 1.442695
    %v3152 = vpow.pop %v3151
    %v3153 = vadd.f32 %v3138, 1.0
    %v3154 = vlog2.pop %v3153
    %v3155 = vmul.f32 %v3154, 0.6931472
    %v3156 = vmul.f32 -0.5, %v3138
    %v3157 = vadd.f32 %v3156, 1.0
    %v3158 = vmul.f32 %v3157, %v3138
    %v3159 = vand.u32 2147483647, %v3138
    %vm3160 = vcmp.lt.f32.partialorder %v3159, 0.0004427343
    %v3161 = vsel %vm3160, %v3158, %v3155
    %v3162 = vadd.f32 %v3140, 1.0
    %v3163 = vlog2.pop %v3162
    %v3164 = vmul.f32 %v3163, 0.6931472
    %v3165 = vmul.f32 -0.5, %v3140
    %v3166 = vadd.f32 %v3165, 1.0
    %v3167 = vmul.f32 %v3166, %v3140
    %v3168 = vand.u32 2147483647, %v3140
    %vm3169 = vcmp.lt.f32.partialorder %v3168, 0.0004427343
    %v3170 = vsel %vm3169, %v3167, %v3164
    %v3171 = vadd.f32 %v3142, 1.0
    %v3172 = vlog2.pop %v3171
    %v3173 = vmul.f32 %v3172, 0.6931472
    %v3174 = vmul.f32 -0.5, %v3142
    %v3175 = vadd.f32 %v3174, 1.0
    %v3176 = vmul.f32 %v3175, %v3142
    %v3177 = vand.u32 2147483647, %v3142
    %vm3178 = vcmp.lt.f32.partialorder %v3177, 0.0004427343
    %v3179 = vsel %vm3178, %v3176, %v3173
    %v3180 = vadd.f32 %v3144, 1.0
    %v3181 = vlog2.pop %v3180
    %v3182 = vmul.f32 %v3181, 0.6931472
    %v3183 = vmul.f32 -0.5, %v3144
    %v3184 = vadd.f32 %v3183, 1.0
    %v3185 = vmul.f32 %v3184, %v3144
    %v3186 = vand.u32 2147483647, %v3144
    %vm3187 = vcmp.lt.f32.partialorder %v3186, 0.0004427343
    %v3188 = vsel %vm3187, %v3185, %v3182
    %v3189 = vadd.f32 %v3146, 1.0
    %v3190 = vlog2.pop %v3189
    %v3191 = vmul.f32 %v3190, 0.6931472
    %v3192 = vmul.f32 -0.5, %v3146
    %v3193 = vadd.f32 %v3192, 1.0
    %v3194 = vmul.f32 %v3193, %v3146
    %v3195 = vand.u32 2147483647, %v3146
    %vm3196 = vcmp.lt.f32.partialorder %v3195, 0.0004427343
    %v3197 = vsel %vm3196, %v3194, %v3191
    %v3198 = vadd.f32 %v3148, 1.0
    %v3199 = vlog2.pop %v3198
    %v3200 = vmul.f32 %v3199, 0.6931472
    %v3201 = vmul.f32 -0.5, %v3148
    %v3202 = vadd.f32 %v3201, 1.0
    %v3203 = vmul.f32 %v3202, %v3148
    %v3204 = vand.u32 2147483647, %v3148
    %vm3205 = vcmp.lt.f32.partialorder %v3204, 0.0004427343
    %v3206 = vsel %vm3205, %v3203, %v3200
    %v3207 = vadd.f32 %v3150, 1.0
    %v3208 = vlog2.pop %v3207
    %v3209 = vmul.f32 %v3208, 0.6931472
    %v3210 = vmul.f32 -0.5, %v3150
    %v3211 = vadd.f32 %v3210, 1.0
    %v3212 = vmul.f32 %v3211, %v3150
    %v3213 = vand.u32 2147483647, %v3150
    %vm3214 = vcmp.lt.f32.partialorder %v3213, 0.0004427343
    %v3215 = vsel %vm3214, %v3212, %v3209
    %v3216 = vadd.f32 %v3152, 1.0
    %v3217 = vlog2.pop %v3216
    %v3218 = vmul.f32 %v3217, 0.6931472
    %v3219 = vmul.f32 -0.5, %v3152
    %v3220 = vadd.f32 %v3219, 1.0
    %v3221 = vmul.f32 %v3220, %v3152
    %v3222 = vand.u32 2147483647, %v3152
    %vm3223 = vcmp.lt.f32.partialorder %v3222, 0.0004427343
    %v3224 = vsel %vm3223, %v3221, %v3218
    %v3225 = vsel %vm3121, %v3083, %v3161
    %v3226 = vsel %vm3122, %v3088, %v3170
    %v3227 = vsel %vm3123, %v3093, %v3179
    %v3228 = vsel %vm3124, %v3098, %v3188
    %v3229 = vsel %vm3125, %v3103, %v3197
    %v3230 = vsel %vm3126, %v3108, %v3206
    %v3231 = vsel %vm3127, %v3113, %v3215
    %v3232 = vsel %vm3128, %v3118, %v3224
    %v3233 = vsub.f32 %v186, %v3083
    %v3234 = vsub.f32 %v187, %v3088
    %v3235 = vsub.f32 %v188, %v3093
    %v3236 = vsub.f32 %v189, %v3098
    %v3237 = vsub.f32 %v190, %v3103
    %v3238 = vsub.f32 %v191, %v3108
    %v3239 = vsub.f32 %v192, %v3113
    %v3240 = vsub.f32 %v193, %v3118
    %v3241 = vmul.f32 %v3233, %v3233
    %v3242 = vmul.f32 %v3234, %v3234
    %v3243 = vmul.f32 %v3235, %v3235
    %v3244 = vmul.f32 %v3236, %v3236
    %v3245 = vmul.f32 %v3237, %v3237
    %v3246 = vmul.f32 %v3238, %v3238
    %v3247 = vmul.f32 %v3239, %v3239
    %v3248 = vmul.f32 %v3240, %v3240
    %v3249 = vmul.f32 %v3225, %v3225
    %v3250 = vmul.f32 %v3226, %v3226
    %v3251 = vmul.f32 %v3227, %v3227
    %v3252 = vmul.f32 %v3228, %v3228
    %v3253 = vmul.f32 %v3229, %v3229
    %v3254 = vmul.f32 %v3230, %v3230
    %v3255 = vmul.f32 %v3231, %v3231
    %v3256 = vmul.f32 %v3232, %v3232
    %3265 = vrot.lane.b32.xlu0 %v3249, 124
    %v3266 = vpop.permute.xlu0 %3265
    %3267 = vrot.lane.b32.xlu0 %v3250, 124
    %v3268 = vpop.permute.xlu0 %3267
    %3269 = vrot.lane.b32.xlu0 %v3251, 124
    %v3270 = vpop.permute.xlu0 %3269
    %3271 = vrot.lane.b32.xlu0 %v3252, 124
    %v3272 = vpop.permute.xlu0 %3271
    %3273 = vrot.lane.b32.xlu0 %v3253, 124
    %v3274 = vpop.permute.xlu0 %3273
    %3275 = vrot.lane.b32.xlu0 %v3254, 124
    %v3276 = vpop.permute.xlu0 %3275
    %3277 = vrot.lane.b32.xlu0 %v3255, 124
    %v3278 = vpop.permute.xlu0 %3277
    %3279 = vrot.lane.b32.xlu0 %v3256, 124
    %v3280 = vpop.permute.xlu0 %3279
    %v3289 = vrcp.pop %v3266
    %v3290 = vmul.f32 %v3241, %v3289
    %v3291 = vrcp.pop %v3268
    %v3292 = vmul.f32 %v3242, %v3291
    %v3293 = vrcp.pop %v3270
    %v3294 = vmul.f32 %v3243, %v3293
    %v3295 = vrcp.pop %v3272
    %v3296 = vmul.f32 %v3244, %v3295
    %v3297 = vrcp.pop %v3274
    %v3298 = vmul.f32 %v3245, %v3297
    %v3299 = vrcp.pop %v3276
    %v3300 = vmul.f32 %v3246, %v3299
    %v3301 = vrcp.pop %v3278
    %v3302 = vmul.f32 %v3247, %v3301
    %v3303 = vrcp.pop %v3280
    %v3304 = vmul.f32 %v3248, %v3303
    %v3305 = vlog2.pop %v3225
    %v3306 = vmul.f32 %v3305, 0.6931472
    %v3307 = vlog2.pop %v3226
    %v3308 = vmul.f32 %v3307, 0.6931472
    %v3309 = vlog2.pop %v3227
    %v3310 = vmul.f32 %v3309, 0.6931472
    %v3311 = vlog2.pop %v3228
    %v3312 = vmul.f32 %v3311, 0.6931472
    %v3313 = vlog2.pop %v3229
    %v3314 = vmul.f32 %v3313, 0.6931472
    %v3315 = vlog2.pop %v3230
    %v3316 = vmul.f32 %v3315, 0.6931472
    %v3317 = vlog2.pop %v3231
    %v3318 = vmul.f32 %v3317, 0.6931472
    %v3319 = vlog2.pop %v3232
    %v3320 = vmul.f32 %v3319, 0.6931472
    %v3321 = vmul.f32 %v3306, 2.0
    %v3322 = vmul.f32 %v3308, 2.0
    %v3323 = vmul.f32 %v3310, 2.0
    %v3324 = vmul.f32 %v3312, 2.0
    %v3325 = vmul.f32 %v3314, 2.0
    %v3326 = vmul.f32 %v3316, 2.0
    %v3327 = vmul.f32 %v3318, 2.0
    %v3328 = vmul.f32 %v3320, 2.0
    %3337 = vrot.lane.b32.xlu0 %v3321, 124
    %v3338 = vpop.permute.xlu0 %3337
    %3339 = vrot.lane.b32.xlu0 %v3322, 124
    %v3340 = vpop.permute.xlu0 %3339
    %3341 = vrot.lane.b32.xlu0 %v3323, 124
    %v3342 = vpop.permute.xlu0 %3341
    %3343 = vrot.lane.b32.xlu0 %v3324, 124
    %v3344 = vpop.permute.xlu0 %3343
    %3345 = vrot.lane.b32.xlu0 %v3325, 124
    %v3346 = vpop.permute.xlu0 %3345
    %3347 = vrot.lane.b32.xlu0 %v3326, 124
    %v3348 = vpop.permute.xlu0 %3347
    %3349 = vrot.lane.b32.xlu0 %v3327, 124
    %v3350 = vpop.permute.xlu0 %3349
    %3351 = vrot.lane.b32.xlu0 %v3328, 124
    %v3352 = vpop.permute.xlu0 %3351
    %v3361 = vadd.f32 %v3290, %v3338
    %v3362 = vadd.f32 %v3292, %v3340
    %v3363 = vadd.f32 %v3294, %v3342
    %v3364 = vadd.f32 %v3296, %v3344
    %v3365 = vadd.f32 %v3298, %v3346
    %v3366 = vadd.f32 %v3300, %v3348
    %v3367 = vadd.f32 %v3302, %v3350
    %v3368 = vadd.f32 %v3304, %v3352
    %v3369 = vadd.f32 %v3361, 1.837877
    %v3370 = vadd.f32 %v3362, 1.837877
    %v3371 = vadd.f32 %v3363, 1.837877
    %v3372 = vadd.f32 %v3364, 1.837877
    %v3373 = vadd.f32 %v3365, 1.837877
    %v3374 = vadd.f32 %v3366, 1.837877
    %v3375 = vadd.f32 %v3367, 1.837877
    %v3376 = vadd.f32 %v3368, 1.837877
    %v3377 = vsel %vm213, %v3369, 0.0
    %v3378 = vsel %vm213, %v3370, 0.0
    %v3379 = vadd.f32 %v3377, %v3378
    %v3380 = vsel %vm213, %v3371, 0.0
    %v3381 = vadd.f32 %v3379, %v3380
    %v3382 = vsel %vm213, %v3372, 0.0
    %v3383 = vadd.f32 %v3381, %v3382
    %v3384 = vsel %vm213, %v3373, 0.0
    %v3385 = vadd.f32 %v3383, %v3384
    %v3386 = vsel %vm213, %v3374, 0.0
    %v3387 = vadd.f32 %v3385, %v3386
    %v3388 = vsel %vm213, %v3375, 0.0
    %v3389 = vadd.f32 %v3387, %v3388
    %v3390 = vsel %vm213, %v3376, 0.0
    %v3391 = vadd.f32 %v3389, %v3390
    %3392 = vadd.xlane.f32.xlu0 %v3391
    %v3393 = vpop.xlane.xlu0 %3392
    %v3394 = vrot.slane %v3393, 4
    %v3395 = vadd.f32 %v3393, %v3394
    %v3396 = vrot.slane %v3395, 2
    %v3397 = vadd.f32 %v3395, %v3396
    %v3398 = vrot.slane %v3397, 1
    %v3399 = vadd.f32 %v3397, %v3398
    %s3400 = vtos %v3399
    %v3401 = vstv %s3400
    %v3402 = vmul.f32 %v3401, 0.5
    %vm3403 = vcmask 0
    %3404 = vst.msk [vmem:[#allocation15] sm:$0x1] %vm3403, %v3402
    // Predicated region
    $region86: #{tpu_custom_call.1} parent=1 // pred_check
      _
    $region87: #{tpu_custom_call.1} parent=1 // pred_check_branch
      %3406 = sbr.rel (0) target = $region89
    $region88: #{tpu_custom_call.1} parent=1 // pred_region
      %s3408 = ssub.s32 16, 16
      %3409 = vsyncadd [#allocation6], %s3408
      %s3411 = sshll.u32 [#allocation15], 4
      %s3412 = int_to_ptr.vmem [resolvable:$true] %s3411
      %3414 = dma.vmem_to_hbm [thread:$0]  %s3412, 16, %s15, [#allocation6]
    $region89: #{tpu_custom_call.1} parent=1 // pred_fallthru
      _
    // Predicated region
    $region90: #{tpu_custom_call.1} parent=1 // pred_check
      _
    $region91: #{tpu_custom_call.1} parent=1 // pred_check_branch
      %3416 = sbr.rel (0) target = $region93
    $region92: #{tpu_custom_call.1} parent=1 // pred_region
      %3417 = dma.done [#allocation6], 16
    $region93: #{tpu_custom_call.1} parent=1 // pred_fallthru
      _
    %3418 = vsyncpa [#allocation5], 1
    %3419 = vsyncpa [#allocation8], 1
    %3420 = vsyncpa [#allocation11], 1
    %3421 = vsyncpa [#allocation14], 1
    %3422 = vsyncpa [#allocation6], 1

</llo_original>
